<compile_context>
chip_gen: v7x
topology: tpu7x:2x2x1
jax: 0.10.0
libtpu: 0.0.40
codegen_flags: <defaults>
</compile_context>

<pallas_src>
import functools
import math

import jax
import jax.numpy as jnp
from jax.experimental import pallas as pl
from jax.experimental.pallas import tpu as pltpu


def _round_up(x, m):
    return (x + m - 1) // m * m


def _attn_pool_kernel(tokens_ref, a_ref, wv_t_ref, wo_t_ref, bo_ref, out_ref, *,
                      tb, n_pad, n_valid, d, num_heads, head_dim):
    tok_bf = tokens_ref[...].astype(jnp.bfloat16)               # (TB, Npad, D)

    # --- fused query/K path: scores[b, n, h] = tok[b, n, :] @ A[:, h] ------------
    tok2 = tok_bf.reshape(tb * n_pad, d)                        # free: n_pad % 8 == 0
    scores = jnp.dot(tok2, a_ref[...],
                     preferred_element_type=jnp.float32)        # (TB*Npad, H)
    scores = scores.reshape(tb, n_pad, num_heads)               # (TB, Npad, H)

    # --- lane-dense softmax over tokens: put N on the 128-lane axis --------------
    scores_t = jnp.transpose(scores, (0, 2, 1))                 # (TB, H, Npad)
    if n_valid < n_pad:   # static condition: mask zero-padded token columns
        pos = jax.lax.broadcasted_iota(jnp.int32, (tb, num_heads, n_pad), 2)
        scores_t = jnp.where(pos < n_valid, scores_t, -1e30)
    m = jnp.max(scores_t, axis=-1, keepdims=True)               # (TB, H, 1)
    e = jnp.exp(scores_t - m)                                   # (TB, H, Npad)
    s = jnp.sum(e, axis=-1, keepdims=True)                      # (TB, H, 1)

    # --- pool tokens per head BEFORE the V projection ----------------------------
    pooled = jnp.einsum('bhn,bnd->bhd', e.astype(jnp.bfloat16), tok_bf,
                        preferred_element_type=jnp.float32)     # (TB, H, D)
    pooled = pooled * pl.reciprocal(s, approx=True)             # normalize after pooling
    pooled_bf = pooled.astype(jnp.bfloat16)

    # --- per-head V projection + output projection on the pooled tensor ----------
    # ctx[:, h*Dh:(h+1)*Dh] = pooled[:, h, :] @ Wv^T[:, h*Dh:(h+1)*Dh]
    # out = ctx @ Wo^T + bo'   (accumulated per head to avoid a concatenate)
    wv_t = wv_t_ref[...]                                        # (D, D) bf16
    wo_t = wo_t_ref[...]                                        # (D, D) bf16
    acc = jnp.zeros((tb, d), jnp.float32)
    for h in range(num_heads):
        lo = h * head_dim
        hi = lo + head_dim
        v_h = jnp.dot(pooled_bf[:, h, :], wv_t[:, lo:hi],
                      preferred_element_type=jnp.float32)       # (TB, Dh)
        acc = acc + jnp.dot(v_h.astype(jnp.bfloat16), wo_t[lo:hi, :],
                            preferred_element_type=jnp.float32) # (TB, D)
    out = acc + bo_ref[...]                                     # bo' = bo + bv @ Wo^T
    out_ref[...] = out.astype(out_ref.dtype)


def _choose_batch_tile(B, n_pad, D, H, tok_itemsize, vmem_limit_bytes):
    # Fixed cost: single-buffered bf16 weights (A, Wv^T, Wo^T) + f32 bias.
    fixed = 2 * D * H + 2 * 2 * D * D + 4 * D
    # Per batch-row cost: double-buffered token tile, its bf16 copy, f32 softmax
    # intermediates (scores / transposed scores / exp), pooled heads, output rows.
    per_row = (2 * n_pad * D * tok_itemsize     # pipelined token tile (2 buffers)
               + 2 * n_pad * D                  # in-kernel bf16 copy of the tile
               + 16 * n_pad * H                 # scores + transpose + exp intermediates
               + 6 * H * D                      # pooled (f32 + bf16)
               + 24 * D)                        # ctx/out rows + pipelined output tile
    budget = int(vmem_limit_bytes * 0.75) - fixed
    tb = max(8, (budget // per_row) // 8 * 8)
    # Keep at least two grid steps when B allows it so the "parallel" batch axis can
    # be split across v7x's two TensorCores and the DMA pipeline stays fed.
    tb = min(tb, max(8, _round_up(-(-B // 2), 8)), 512)
    return int(tb)


def attention_pool(tokens, params, num_heads, *, batch_tile=None,
                   vmem_limit_bytes=48 * 1024 * 1024):
    B, N, D = tokens.shape
    H = num_heads
    Dh = D // H
    assert Dh * H == D, "embed dim must be divisible by num_heads"

    f32 = jnp.float32
    query = params["query"].reshape(1, D).astype(f32)
    in_w = params["in_proj_weight"].astype(f32)     # (3D, D) rows = [Wq; Wk; Wv]
    in_b = params["in_proj_bias"].astype(f32)       # (3D,)
    wq, wk, wv = in_w[:D], in_w[D:2 * D], in_w[2 * D:]
    bq, bk, bv = in_b[:D], in_b[D:2 * D], in_b[2 * D:]
    wo = params["out_proj_weight"].astype(f32)      # (D, D)
    bo = params["out_proj_bias"].astype(f32)        # (D,)

    scale = 1.0 / math.sqrt(Dh)
    # head indicator: head_mask[d, h] = 1 iff feature d belongs to head h
    head_mask = (jnp.arange(D)[:, None] // Dh ==
                 jnp.arange(H)[None, :]).astype(f32)              # (D, H)

    # Fold the batch-invariant query/K path into A: scores = tok @ A.
    # (bk adds a per-head constant to every token and cancels in the softmax.)
    q_vec = (query @ wq.T + bq) * scale                           # (1, D)
    a_mat = ((wk.T * q_vec) @ head_mask).astype(jnp.bfloat16)     # (D, H)

    # Fold bv into the output bias (softmax weights sum to 1 per head).
    bo_fold = (bo + bv @ wo.T).reshape(1, D)                      # (1, D) f32
    wv_t = wv.T.astype(jnp.bfloat16)                              # (D, D)
    wo_t = wo.T.astype(jnp.bfloat16)                              # (D, D)

    # Pad N to a sublane multiple so the in-kernel flatten is a free relayout;
    # padded token columns are masked to -inf inside the kernel.
    n_pad = _round_up(N, 8)
    tok_in = tokens
    if n_pad != N:
        tok_in = jnp.pad(tok_in, ((0, 0), (0, n_pad - N), (0, 0)))

    # Batch tile from an explicit VMEM budget; pad B up to a TB multiple.
    if batch_tile is None:
        batch_tile = _choose_batch_tile(B, n_pad, D, H,
                                        jnp.dtype(tokens.dtype).itemsize,
                                        vmem_limit_bytes)
    TB = batch_tile
    b_pad = _round_up(B, TB)
    if b_pad != B:
        tok_in = jnp.pad(tok_in, ((0, b_pad - B), (0, 0), (0, 0)))

    kernel = functools.partial(_attn_pool_kernel, tb=TB, n_pad=n_pad, n_valid=N,
                               d=D, num_heads=H, head_dim=Dh)

    def run(single_buffered):
        def rep(shape):
            zeros = (0,) * len(shape)
            if single_buffered:
                # grid-invariant weights: single VMEM buffer, no double buffering
                return pl.BlockSpec(shape, lambda b, _z=zeros: _z,
                                    pipeline_mode=pl.Buffered(1))
            return pl.BlockSpec(shape, lambda b, _z=zeros: _z)

        return pl.pallas_call(
            kernel,
            out_shape=jax.ShapeDtypeStruct((b_pad, D), tokens.dtype),
            grid=(b_pad // TB,),
            in_specs=[
                pl.BlockSpec((TB, n_pad, D), lambda b: (b, 0, 0)),  # tokens
                rep((D, H)),      # A   (fused query/K path, scaled)
                rep((D, D)),      # Wv^T
                rep((D, D)),      # Wo^T
                rep((1, D)),      # bo' = bo + bv @ Wo^T (f32)
            ],
            out_specs=pl.BlockSpec((TB, D), lambda b: (b, 0)),
            compiler_params=pltpu.CompilerParams(
                dimension_semantics=("parallel",),
                vmem_limit_bytes=vmem_limit_bytes),
        )(tok_in, a_mat, wv_t, wo_t, bo_fold)

    try:
        out = run(single_buffered=True)
    except Exception:
        # Fallback for Pallas versions that reject pipeline_mode=pl.Buffered(1).
        out = run(single_buffered=False)
    return out[:B]


def attention_pool_reference(tokens, params, num_heads):
    """Pure-JAX reference matching torch.nn.MultiheadAttention semantics."""
    B, N, D = tokens.shape
    H = num_heads
    Dh = D // H
    q = jnp.broadcast_to(params["query"], (B, 1, D))
    in_w = params["in_proj_weight"]
    in_b = params["in_proj_bias"]
    wq, wk, wv = in_w[:D], in_w[D:2 * D], in_w[2 * D:]
    bq, bk, bv = in_b[:D], in_b[D:2 * D], in_b[2 * D:]
    wo = params["out_proj_weight"]
    bo = params["out_proj_bias"]

    Q = q @ wq.T + bq                                # (B, 1, D)
    K = tokens @ wk.T + bk                           # (B, N, D)
    V = tokens @ wv.T + bv                           # (B, N, D)
    Qh = Q.reshape(B, 1, H, Dh).transpose(0, 2, 1, 3)
    Kh = K.reshape(B, N, H, Dh).transpose(0, 2, 1, 3)
    Vh = V.reshape(B, N, H, Dh).transpose(0, 2, 1, 3)
    scores = jnp.einsum('bhqd,bhkd->bhqk', Qh, Kh) / math.sqrt(Dh)
    w = jax.nn.softmax(scores, axis=-1)
    ctx = jnp.einsum('bhqk,bhkd->bhqd', w, Vh)
    ctx = ctx.transpose(0, 2, 1, 3).reshape(B, 1, D)
    out = ctx @ wo.T + bo
    return out[:, 0, :]


if __name__ == "__main__":
    B, N, D, H = 2, 8, 32, 8

    key = jax.random.PRNGKey(0)
    k_tok, k_q, k_inw, k_inb, k_ow, k_ob = jax.random.split(key, 6)

    tokens = jax.random.normal(k_tok, (B, N, D), dtype=jnp.float32)
    params = {
        # nn.Parameter(torch.randn(1, 1, dim))
        "query": jax.random.normal(k_q, (1, 1, D), dtype=jnp.float32),
        # nn.MultiheadAttention packed in_proj / out_proj parameters
        "in_proj_weight": jax.random.normal(k_inw, (3 * D, D), dtype=jnp.float32) * 0.1,
        "in_proj_bias": jax.random.normal(k_inb, (3 * D,), dtype=jnp.float32) * 0.1,
        "out_proj_weight": jax.random.normal(k_ow, (D, D), dtype=jnp.float32) * 0.1,
        "out_proj_bias": jax.random.normal(k_ob, (D,), dtype=jnp.float32) * 0.1,
    }

    out = attention_pool(tokens, params, num_heads=H)
    out = jax.block_until_ready(out)

    ref = attention_pool_reference(tokens, params, num_heads=H)
    assert out.shape == (B, D)
    max_diff = float(jnp.max(jnp.abs(out - ref)))
    assert jnp.allclose(out, ref, rtol=2e-2, atol=2e-2), (
        f"max abs diff = {max_diff}")

    print("KERNEL_OK")
</pallas_src>

<mosaic_0001>
module attributes {stable_mosaic.version = 11 : i64} {
  func.func @_attn_pool_kernel(%arg0: i32, %arg1: memref<8x8x32xf32, #tpu.memory_space<vmem>>, %arg2: memref<32x8xbf16, #tpu.memory_space<vmem>>, %arg3: memref<32x32xbf16, #tpu.memory_space<vmem>>, %arg4: memref<32x32xbf16, #tpu.memory_space<vmem>>, %arg5: memref<1x32xf32, #tpu.memory_space<vmem>>, %arg6: memref<8x32xf32, #tpu.memory_space<vmem>>) attributes {dimension_semantics = [#tpu.dimension_semantics<parallel>], iteration_bounds = array<i64: 1>, scalar_prefetch = 0 : i64, scratch_operands = 0 : i64, tpu.core_type = #tpu.core_type<tc>, window_params = [{transform_indices = @transform_0, window_bounds = array<i64: 8, 8, 32>}, {pipeline_mode = #tpu.pipeline_mode<synchronous>, transform_indices = @transform_1, window_bounds = array<i64: 32, 8>}, {pipeline_mode = #tpu.pipeline_mode<synchronous>, transform_indices = @transform_2, window_bounds = array<i64: 32, 32>}, {pipeline_mode = #tpu.pipeline_mode<synchronous>, transform_indices = @transform_3, window_bounds = array<i64: 32, 32>}, {pipeline_mode = #tpu.pipeline_mode<synchronous>, transform_indices = @transform_4, window_bounds = array<i64: 1, 32>}, {transform_indices = @transform_5, window_bounds = array<i64: 8, 32>}]} {
    %c0 = arith.constant 0 : index
    %c0_0 = arith.constant 0 : index
    %c0_1 = arith.constant 0 : index
    %0 = vector.load %arg1[%c0, %c0_0, %c0_1] : memref<8x8x32xf32, #tpu.memory_space<vmem>>, vector<8x8x32xf32>
    %1 = arith.truncf %0 : vector<8x8x32xf32> to vector<8x8x32xbf16>
    %2 = vector.shape_cast %1 : vector<8x8x32xbf16> to vector<64x32xbf16>
    %c0_2 = arith.constant 0 : index
    %c0_3 = arith.constant 0 : index
    %3 = vector.load %arg2[%c0_2, %c0_3] : memref<32x8xbf16, #tpu.memory_space<vmem>>, vector<32x8xbf16>
    %cst = arith.constant dense<0.000000e+00> : vector<64x8xf32>
    %4 = tpu.matmul %2, %3, %cst {dimension_numbers = #tpu.dot_dimension_numbers<[1], [0], [0], [1], [0, 0, 1, 1], [], []>} : vector<64x32xbf16>, vector<32x8xbf16>, vector<64x8xf32> -> vector<64x8xf32>
    %5 = vector.shape_cast %4 : vector<64x8xf32> to vector<8x8x8xf32>
    %6 = tpu.transpose %5, [0, 2, 1] : vector<8x8x8xf32> -> vector<8x8x8xf32>
    %cst_4 = arith.constant dense<0xFF800000> : vector<8x8xf32>
    %7 = vector.multi_reduction <maximumf>, %6, %cst_4 [2] : vector<8x8x8xf32> to vector<8x8xf32>
    %8 = vector.shape_cast %7 : vector<8x8xf32> to vector<8x8x1xf32>
    %9 = vector.broadcast %8 : vector<8x8x1xf32> to vector<8x8x8xf32>
    %10 = arith.subf %6, %9 : vector<8x8x8xf32>
    %11 = math.exp %10 : vector<8x8x8xf32>
    %cst_5 = arith.constant dense<0.000000e+00> : vector<8x8xf32>
    %12 = vector.multi_reduction <add>, %11, %cst_5 [2] : vector<8x8x8xf32> to vector<8x8xf32>
    %13 = vector.shape_cast %12 : vector<8x8xf32> to vector<8x8x1xf32>
    %14 = arith.truncf %11 : vector<8x8x8xf32> to vector<8x8x8xbf16>
    "tpu.trace_start"() <{level = 10 : i32, message = "bhn,bnd->bhd"}> : () -> ()
    %cst_6 = arith.constant dense<0.000000e+00> : vector<8x8x32xf32>
    %15 = tpu.matmul %14, %1, %cst_6 {dimension_numbers = #tpu.dot_dimension_numbers<[2], [1], [1], [2], [0, 0, 0, 1, 1, 2], [0], [0]>} : vector<8x8x8xbf16>, vector<8x8x32xbf16>, vector<8x8x32xf32> -> vector<8x8x32xf32>
    "tpu.trace_stop"() : () -> ()
    %16 = tpu.reciprocal %13 {approx = true} : vector<8x8x1xf32> -> vector<8x8x1xf32>
    %17 = vector.broadcast %16 : vector<8x8x1xf32> to vector<8x8x32xf32>
    %18 = arith.mulf %15, %17 : vector<8x8x32xf32>
    %19 = arith.truncf %18 : vector<8x8x32xf32> to vector<8x8x32xbf16>
    %c0_7 = arith.constant 0 : index
    %c0_8 = arith.constant 0 : index
    %20 = vector.load %arg3[%c0_7, %c0_8] : memref<32x32xbf16, #tpu.memory_space<vmem>>, vector<32x32xbf16>
    %c0_9 = arith.constant 0 : index
    %c0_10 = arith.constant 0 : index
    %21 = vector.load %arg4[%c0_9, %c0_10] : memref<32x32xbf16, #tpu.memory_space<vmem>>, vector<32x32xbf16>
    %cst_11 = arith.constant 0.000000e+00 : f32
    %22 = vector.broadcast %cst_11 : f32 to vector<8x32xf32>
    %23 = vector.extract_strided_slice %19 {offsets = [0, 0, 0], sizes = [8, 1, 32], strides = [1, 1, 1]} : vector<8x8x32xbf16> to vector<8x1x32xbf16>
    %24 = vector.shape_cast %23 : vector<8x1x32xbf16> to vector<8x32xbf16>
    %25 = vector.extract_strided_slice %20 {offsets = [0, 0], sizes = [32, 4], strides = [1, 1]} : vector<32x32xbf16> to vector<32x4xbf16>
    %cst_12 = arith.constant dense<0.000000e+00> : vector<8x4xf32>
    %26 = tpu.matmul %24, %25, %cst_12 {dimension_numbers = #tpu.dot_dimension_numbers<[1], [0], [0], [1], [0, 0, 1, 1], [], []>} : vector<8x32xbf16>, vector<32x4xbf16>, vector<8x4xf32> -> vector<8x4xf32>
    %27 = arith.truncf %26 : vector<8x4xf32> to vector<8x4xbf16>
    %28 = vector.extract_strided_slice %21 {offsets = [0, 0], sizes = [4, 32], strides = [1, 1]} : vector<32x32xbf16> to vector<4x32xbf16>
    %cst_13 = arith.constant dense<0.000000e+00> : vector<8x32xf32>
    %29 = tpu.matmul %27, %28, %cst_13 {dimension_numbers = #tpu.dot_dimension_numbers<[1], [0], [0], [1], [0, 0, 1, 1], [], []>} : vector<8x4xbf16>, vector<4x32xbf16>, vector<8x32xf32> -> vector<8x32xf32>
    %30 = arith.addf %22, %29 : vector<8x32xf32>
    %31 = vector.extract_strided_slice %19 {offsets = [0, 1, 0], sizes = [8, 1, 32], strides = [1, 1, 1]} : vector<8x8x32xbf16> to vector<8x1x32xbf16>
    %32 = vector.shape_cast %31 : vector<8x1x32xbf16> to vector<8x32xbf16>
    %33 = vector.extract_strided_slice %20 {offsets = [0, 4], sizes = [32, 4], strides = [1, 1]} : vector<32x32xbf16> to vector<32x4xbf16>
    %cst_14 = arith.constant dense<0.000000e+00> : vector<8x4xf32>
    %34 = tpu.matmul %32, %33, %cst_14 {dimension_numbers = #tpu.dot_dimension_numbers<[1], [0], [0], [1], [0, 0, 1, 1], [], []>} : vector<8x32xbf16>, vector<32x4xbf16>, vector<8x4xf32> -> vector<8x4xf32>
    %35 = arith.truncf %34 : vector<8x4xf32> to vector<8x4xbf16>
    %36 = vector.extract_strided_slice %21 {offsets = [4, 0], sizes = [4, 32], strides = [1, 1]} : vector<32x32xbf16> to vector<4x32xbf16>
    %cst_15 = arith.constant dense<0.000000e+00> : vector<8x32xf32>
    %37 = tpu.matmul %35, %36, %cst_15 {dimension_numbers = #tpu.dot_dimension_numbers<[1], [0], [0], [1], [0, 0, 1, 1], [], []>} : vector<8x4xbf16>, vector<4x32xbf16>, vector<8x32xf32> -> vector<8x32xf32>
    %38 = arith.addf %30, %37 : vector<8x32xf32>
    %39 = vector.extract_strided_slice %19 {offsets = [0, 2, 0], sizes = [8, 1, 32], strides = [1, 1, 1]} : vector<8x8x32xbf16> to vector<8x1x32xbf16>
    %40 = vector.shape_cast %39 : vector<8x1x32xbf16> to vector<8x32xbf16>
    %41 = vector.extract_strided_slice %20 {offsets = [0, 8], sizes = [32, 4], strides = [1, 1]} : vector<32x32xbf16> to vector<32x4xbf16>
    %cst_16 = arith.constant dense<0.000000e+00> : vector<8x4xf32>
    %42 = tpu.matmul %40, %41, %cst_16 {dimension_numbers = #tpu.dot_dimension_numbers<[1], [0], [0], [1], [0, 0, 1, 1], [], []>} : vector<8x32xbf16>, vector<32x4xbf16>, vector<8x4xf32> -> vector<8x4xf32>
    %43 = arith.truncf %42 : vector<8x4xf32> to vector<8x4xbf16>
    %44 = vector.extract_strided_slice %21 {offsets = [8, 0], sizes = [4, 32], strides = [1, 1]} : vector<32x32xbf16> to vector<4x32xbf16>
    %cst_17 = arith.constant dense<0.000000e+00> : vector<8x32xf32>
    %45 = tpu.matmul %43, %44, %cst_17 {dimension_numbers = #tpu.dot_dimension_numbers<[1], [0], [0], [1], [0, 0, 1, 1], [], []>} : vector<8x4xbf16>, vector<4x32xbf16>, vector<8x32xf32> -> vector<8x32xf32>
    %46 = arith.addf %38, %45 : vector<8x32xf32>
    %47 = vector.extract_strided_slice %19 {offsets = [0, 3, 0], sizes = [8, 1, 32], strides = [1, 1, 1]} : vector<8x8x32xbf16> to vector<8x1x32xbf16>
    %48 = vector.shape_cast %47 : vector<8x1x32xbf16> to vector<8x32xbf16>
    %49 = vector.extract_strided_slice %20 {offsets = [0, 12], sizes = [32, 4], strides = [1, 1]} : vector<32x32xbf16> to vector<32x4xbf16>
    %cst_18 = arith.constant dense<0.000000e+00> : vector<8x4xf32>
    %50 = tpu.matmul %48, %49, %cst_18 {dimension_numbers = #tpu.dot_dimension_numbers<[1], [0], [0], [1], [0, 0, 1, 1], [], []>} : vector<8x32xbf16>, vector<32x4xbf16>, vector<8x4xf32> -> vector<8x4xf32>
    %51 = arith.truncf %50 : vector<8x4xf32> to vector<8x4xbf16>
    %52 = vector.extract_strided_slice %21 {offsets = [12, 0], sizes = [4, 32], strides = [1, 1]} : vector<32x32xbf16> to vector<4x32xbf16>
    %cst_19 = arith.constant dense<0.000000e+00> : vector<8x32xf32>
    %53 = tpu.matmul %51, %52, %cst_19 {dimension_numbers = #tpu.dot_dimension_numbers<[1], [0], [0], [1], [0, 0, 1, 1], [], []>} : vector<8x4xbf16>, vector<4x32xbf16>, vector<8x32xf32> -> vector<8x32xf32>
    %54 = arith.addf %46, %53 : vector<8x32xf32>
    %55 = vector.extract_strided_slice %19 {offsets = [0, 4, 0], sizes = [8, 1, 32], strides = [1, 1, 1]} : vector<8x8x32xbf16> to vector<8x1x32xbf16>
    %56 = vector.shape_cast %55 : vector<8x1x32xbf16> to vector<8x32xbf16>
    %57 = vector.extract_strided_slice %20 {offsets = [0, 16], sizes = [32, 4], strides = [1, 1]} : vector<32x32xbf16> to vector<32x4xbf16>
    %cst_20 = arith.constant dense<0.000000e+00> : vector<8x4xf32>
    %58 = tpu.matmul %56, %57, %cst_20 {dimension_numbers = #tpu.dot_dimension_numbers<[1], [0], [0], [1], [0, 0, 1, 1], [], []>} : vector<8x32xbf16>, vector<32x4xbf16>, vector<8x4xf32> -> vector<8x4xf32>
    %59 = arith.truncf %58 : vector<8x4xf32> to vector<8x4xbf16>
    %60 = vector.extract_strided_slice %21 {offsets = [16, 0], sizes = [4, 32], strides = [1, 1]} : vector<32x32xbf16> to vector<4x32xbf16>
    %cst_21 = arith.constant dense<0.000000e+00> : vector<8x32xf32>
    %61 = tpu.matmul %59, %60, %cst_21 {dimension_numbers = #tpu.dot_dimension_numbers<[1], [0], [0], [1], [0, 0, 1, 1], [], []>} : vector<8x4xbf16>, vector<4x32xbf16>, vector<8x32xf32> -> vector<8x32xf32>
    %62 = arith.addf %54, %61 : vector<8x32xf32>
    %63 = vector.extract_strided_slice %19 {offsets = [0, 5, 0], sizes = [8, 1, 32], strides = [1, 1, 1]} : vector<8x8x32xbf16> to vector<8x1x32xbf16>
    %64 = vector.shape_cast %63 : vector<8x1x32xbf16> to vector<8x32xbf16>
    %65 = vector.extract_strided_slice %20 {offsets = [0, 20], sizes = [32, 4], strides = [1, 1]} : vector<32x32xbf16> to vector<32x4xbf16>
    %cst_22 = arith.constant dense<0.000000e+00> : vector<8x4xf32>
    %66 = tpu.matmul %64, %65, %cst_22 {dimension_numbers = #tpu.dot_dimension_numbers<[1], [0], [0], [1], [0, 0, 1, 1], [], []>} : vector<8x32xbf16>, vector<32x4xbf16>, vector<8x4xf32> -> vector<8x4xf32>
    %67 = arith.truncf %66 : vector<8x4xf32> to vector<8x4xbf16>
    %68 = vector.extract_strided_slice %21 {offsets = [20, 0], sizes = [4, 32], strides = [1, 1]} : vector<32x32xbf16> to vector<4x32xbf16>
    %cst_23 = arith.constant dense<0.000000e+00> : vector<8x32xf32>
    %69 = tpu.matmul %67, %68, %cst_23 {dimension_numbers = #tpu.dot_dimension_numbers<[1], [0], [0], [1], [0, 0, 1, 1], [], []>} : vector<8x4xbf16>, vector<4x32xbf16>, vector<8x32xf32> -> vector<8x32xf32>
    %70 = arith.addf %62, %69 : vector<8x32xf32>
    %71 = vector.extract_strided_slice %19 {offsets = [0, 6, 0], sizes = [8, 1, 32], strides = [1, 1, 1]} : vector<8x8x32xbf16> to vector<8x1x32xbf16>
    %72 = vector.shape_cast %71 : vector<8x1x32xbf16> to vector<8x32xbf16>
    %73 = vector.extract_strided_slice %20 {offsets = [0, 24], sizes = [32, 4], strides = [1, 1]} : vector<32x32xbf16> to vector<32x4xbf16>
    %cst_24 = arith.constant dense<0.000000e+00> : vector<8x4xf32>
    %74 = tpu.matmul %72, %73, %cst_24 {dimension_numbers = #tpu.dot_dimension_numbers<[1], [0], [0], [1], [0, 0, 1, 1], [], []>} : vector<8x32xbf16>, vector<32x4xbf16>, vector<8x4xf32> -> vector<8x4xf32>
    %75 = arith.truncf %74 : vector<8x4xf32> to vector<8x4xbf16>
    %76 = vector.extract_strided_slice %21 {offsets = [24, 0], sizes = [4, 32], strides = [1, 1]} : vector<32x32xbf16> to vector<4x32xbf16>
    %cst_25 = arith.constant dense<0.000000e+00> : vector<8x32xf32>
    %77 = tpu.matmul %75, %76, %cst_25 {dimension_numbers = #tpu.dot_dimension_numbers<[1], [0], [0], [1], [0, 0, 1, 1], [], []>} : vector<8x4xbf16>, vector<4x32xbf16>, vector<8x32xf32> -> vector<8x32xf32>
    %78 = arith.addf %70, %77 : vector<8x32xf32>
    %79 = vector.extract_strided_slice %19 {offsets = [0, 7, 0], sizes = [8, 1, 32], strides = [1, 1, 1]} : vector<8x8x32xbf16> to vector<8x1x32xbf16>
    %80 = vector.shape_cast %79 : vector<8x1x32xbf16> to vector<8x32xbf16>
    %81 = vector.extract_strided_slice %20 {offsets = [0, 28], sizes = [32, 4], strides = [1, 1]} : vector<32x32xbf16> to vector<32x4xbf16>
    %cst_26 = arith.constant dense<0.000000e+00> : vector<8x4xf32>
    %82 = tpu.matmul %80, %81, %cst_26 {dimension_numbers = #tpu.dot_dimension_numbers<[1], [0], [0], [1], [0, 0, 1, 1], [], []>} : vector<8x32xbf16>, vector<32x4xbf16>, vector<8x4xf32> -> vector<8x4xf32>
    %83 = arith.truncf %82 : vector<8x4xf32> to vector<8x4xbf16>
    %84 = vector.extract_strided_slice %21 {offsets = [28, 0], sizes = [4, 32], strides = [1, 1]} : vector<32x32xbf16> to vector<4x32xbf16>
    %cst_27 = arith.constant dense<0.000000e+00> : vector<8x32xf32>
    %85 = tpu.matmul %83, %84, %cst_27 {dimension_numbers = #tpu.dot_dimension_numbers<[1], [0], [0], [1], [0, 0, 1, 1], [], []>} : vector<8x4xbf16>, vector<4x32xbf16>, vector<8x32xf32> -> vector<8x32xf32>
    %86 = arith.addf %78, %85 : vector<8x32xf32>
    %c0_28 = arith.constant 0 : index
    %c0_29 = arith.constant 0 : index
    %87 = vector.load %arg5[%c0_28, %c0_29] : memref<1x32xf32, #tpu.memory_space<vmem>>, vector<1x32xf32>
    %88 = vector.broadcast %87 : vector<1x32xf32> to vector<8x32xf32>
    %89 = arith.addf %86, %88 : vector<8x32xf32>
    %c0_30 = arith.constant 0 : index
    %c0_31 = arith.constant 0 : index
    %90 = vector.load %arg6[%c0_30, %c0_31] : memref<8x32xf32, #tpu.memory_space<vmem>>, vector<8x32xf32>
    tpu.vector_store %arg6[%c0_30, %c0_31], %89 {strides = array<i32>} : memref<8x32xf32, #tpu.memory_space<vmem>>, vector<8x32xf32>,
    return
  }
  func.func @transform_0(%arg0: i32) -> (i32, i32, i32) {
    %c0_i32 = arith.constant 0 : i32
    %c0_i32_0 = arith.constant 0 : i32
    %c0_i32_1 = arith.constant 0 : i32
    return %arg0, %c0_i32, %c0_i32_0 : i32, i32, i32
  }
  func.func @transform_1(%arg0: i32) -> (i32, i32) {
    %c0_i32 = arith.constant 0 : i32
    %c0_i32_0 = arith.constant 0 : i32
    %c0_i32_1 = arith.constant 0 : i32
    return %c0_i32, %c0_i32_0 : i32, i32
  }
  func.func @transform_2(%arg0: i32) -> (i32, i32) {
    %c0_i32 = arith.constant 0 : i32
    %c0_i32_0 = arith.constant 0 : i32
    %c0_i32_1 = arith.constant 0 : i32
    return %c0_i32, %c0_i32_0 : i32, i32
  }
  func.func @transform_3(%arg0: i32) -> (i32, i32) {
    %c0_i32 = arith.constant 0 : i32
    %c0_i32_0 = arith.constant 0 : i32
    %c0_i32_1 = arith.constant 0 : i32
    return %c0_i32, %c0_i32_0 : i32, i32
  }
  func.func @transform_4(%arg0: i32) -> (i32, i32) {
    %c0_i32 = arith.constant 0 : i32
    %c0_i32_0 = arith.constant 0 : i32
    %c0_i32_1 = arith.constant 0 : i32
    return %c0_i32, %c0_i32_0 : i32, i32
  }
  func.func @transform_5(%arg0: i32) -> (i32, i32) {
    %c0_i32 = arith.constant 0 : i32
    %c0_i32_0 = arith.constant 0 : i32
    return %arg0, %c0_i32 : i32, i32
  }
}

module attributes {stable_mosaic.version = 11 : i64} {
  func.func @_attn_pool_kernel(%arg0: i32, %arg1: memref<8x8x32xf32, #tpu.memory_space<vmem>>, %arg2: memref<32x8xbf16, #tpu.memory_space<vmem>>, %arg3: memref<32x32xbf16, #tpu.memory_space<vmem>>, %arg4: memref<32x32xbf16, #tpu.memory_space<vmem>>, %arg5: memref<1x32xf32, #tpu.memory_space<vmem>>, %arg6: memref<8x32xf32, #tpu.memory_space<vmem>>) attributes {dimension_semantics = [#tpu.dimension_semantics<parallel>], iteration_bounds = array<i64: 1>, scalar_prefetch = 0 : i64, scratch_operands = 0 : i64, tpu.core_type = #tpu.core_type<tc>, window_params = [{transform_indices = @transform_0, window_bounds = array<i64: 8, 8, 32>}, {pipeline_mode = #tpu.pipeline_mode<synchronous>, transform_indices = @transform_1, window_bounds = array<i64: 32, 8>}, {pipeline_mode = #tpu.pipeline_mode<synchronous>, transform_indices = @transform_2, window_bounds = array<i64: 32, 32>}, {pipeline_mode = #tpu.pipeline_mode<synchronous>, transform_indices = @transform_3, window_bounds = array<i64: 32, 32>}, {pipeline_mode = #tpu.pipeline_mode<synchronous>, transform_indices = @transform_4, window_bounds = array<i64: 1, 32>}, {transform_indices = @transform_5, window_bounds = array<i64: 8, 32>}]} {
    %c0 = arith.constant 0 : index
    %c0_0 = arith.constant 0 : index
    %c0_1 = arith.constant 0 : index
    %0 = vector.load %arg1[%c0, %c0_0, %c0_1] : memref<8x8x32xf32, #tpu.memory_space<vmem>>, vector<8x8x32xf32>
    %1 = arith.truncf %0 : vector<8x8x32xf32> to vector<8x8x32xbf16>
    %2 = vector.shape_cast %1 : vector<8x8x32xbf16> to vector<64x32xbf16>
    %c0_2 = arith.constant 0 : index
    %c0_3 = arith.constant 0 : index
    %3 = vector.load %arg2[%c0_2, %c0_3] : memref<32x8xbf16, #tpu.memory_space<vmem>>, vector<32x8xbf16>
    %cst = arith.constant dense<0.000000e+00> : vector<64x8xf32>
    %4 = tpu.matmul %2, %3, %cst {dimension_numbers = #tpu.dot_dimension_numbers<[1], [0], [0], [1], [0, 0, 1, 1], [], []>} : vector<64x32xbf16>, vector<32x8xbf16>, vector<64x8xf32> -> vector<64x8xf32>
    %5 = vector.shape_cast %4 : vector<64x8xf32> to vector<8x8x8xf32>
    %6 = tpu.transpose %5, [0, 2, 1] : vector<8x8x8xf32> -> vector<8x8x8xf32>
    %cst_4 = arith.constant dense<0xFF800000> : vector<8x8xf32>
    %7 = vector.multi_reduction <maximumf>, %6, %cst_4 [2] : vector<8x8x8xf32> to vector<8x8xf32>
    %8 = vector.shape_cast %7 : vector<8x8xf32> to vector<8x8x1xf32>
    %9 = vector.broadcast %8 : vector<8x8x1xf32> to vector<8x8x8xf32>
    %10 = arith.subf %6, %9 : vector<8x8x8xf32>
    %11 = math.exp %10 : vector<8x8x8xf32>
    %cst_5 = arith.constant dense<0.000000e+00> : vector<8x8xf32>
    %12 = vector.multi_reduction <add>, %11, %cst_5 [2] : vector<8x8x8xf32> to vector<8x8xf32>
    %13 = vector.shape_cast %12 : vector<8x8xf32> to vector<8x8x1xf32>
    %14 = arith.truncf %11 : vector<8x8x8xf32> to vector<8x8x8xbf16>
    "tpu.trace_start"() <{level = 10 : i32, message = "bhn,bnd->bhd"}> : () -> ()
    %cst_6 = arith.constant dense<0.000000e+00> : vector<8x8x32xf32>
    %15 = tpu.matmul %14, %1, %cst_6 {dimension_numbers = #tpu.dot_dimension_numbers<[2], [1], [1], [2], [0, 0, 0, 1, 1, 2], [0], [0]>} : vector<8x8x8xbf16>, vector<8x8x32xbf16>, vector<8x8x32xf32> -> vector<8x8x32xf32>
    "tpu.trace_stop"() : () -> ()
    %16 = tpu.reciprocal %13 {approx = true} : vector<8x8x1xf32> -> vector<8x8x1xf32>
    %17 = vector.broadcast %16 : vector<8x8x1xf32> to vector<8x8x32xf32>
    %18 = arith.mulf %15, %17 : vector<8x8x32xf32>
    %19 = arith.truncf %18 : vector<8x8x32xf32> to vector<8x8x32xbf16>
    %c0_7 = arith.constant 0 : index
    %c0_8 = arith.constant 0 : index
    %20 = vector.load %arg3[%c0_7, %c0_8] : memref<32x32xbf16, #tpu.memory_space<vmem>>, vector<32x32xbf16>
    %c0_9 = arith.constant 0 : index
    %c0_10 = arith.constant 0 : index
    %21 = vector.load %arg4[%c0_9, %c0_10] : memref<32x32xbf16, #tpu.memory_space<vmem>>, vector<32x32xbf16>
    %cst_11 = arith.constant 0.000000e+00 : f32
    %22 = vector.broadcast %cst_11 : f32 to vector<8x32xf32>
    %23 = vector.extract_strided_slice %19 {offsets = [0, 0, 0], sizes = [8, 1, 32], strides = [1, 1, 1]} : vector<8x8x32xbf16> to vector<8x1x32xbf16>
    %24 = vector.shape_cast %23 : vector<8x1x32xbf16> to vector<8x32xbf16>
    %25 = vector.extract_strided_slice %20 {offsets = [0, 0], sizes = [32, 4], strides = [1, 1]} : vector<32x32xbf16> to vector<32x4xbf16>
    %cst_12 = arith.constant dense<0.000000e+00> : vector<8x4xf32>
    %26 = tpu.matmul %24, %25, %cst_12 {dimension_numbers = #tpu.dot_dimension_numbers<[1], [0], [0], [1], [0, 0, 1, 1], [], []>} : vector<8x32xbf16>, vector<32x4xbf16>, vector<8x4xf32> -> vector<8x4xf32>
    %27 = arith.truncf %26 : vector<8x4xf32> to vector<8x4xbf16>
    %28 = vector.extract_strided_slice %21 {offsets = [0, 0], sizes = [4, 32], strides = [1, 1]} : vector<32x32xbf16> to vector<4x32xbf16>
    %cst_13 = arith.constant dense<0.000000e+00> : vector<8x32xf32>
    %29 = tpu.matmul %27, %28, %cst_13 {dimension_numbers = #tpu.dot_dimension_numbers<[1], [0], [0], [1], [0, 0, 1, 1], [], []>} : vector<8x4xbf16>, vector<4x32xbf16>, vector<8x32xf32> -> vector<8x32xf32>
    %30 = arith.addf %22, %29 : vector<8x32xf32>
    %31 = vector.extract_strided_slice %19 {offsets = [0, 1, 0], sizes = [8, 1, 32], strides = [1, 1, 1]} : vector<8x8x32xbf16> to vector<8x1x32xbf16>
    %32 = vector.shape_cast %31 : vector<8x1x32xbf16> to vector<8x32xbf16>
    %33 = vector.extract_strided_slice %20 {offsets = [0, 4], sizes = [32, 4], strides = [1, 1]} : vector<32x32xbf16> to vector<32x4xbf16>
    %cst_14 = arith.constant dense<0.000000e+00> : vector<8x4xf32>
    %34 = tpu.matmul %32, %33, %cst_14 {dimension_numbers = #tpu.dot_dimension_numbers<[1], [0], [0], [1], [0, 0, 1, 1], [], []>} : vector<8x32xbf16>, vector<32x4xbf16>, vector<8x4xf32> -> vector<8x4xf32>
    %35 = arith.truncf %34 : vector<8x4xf32> to vector<8x4xbf16>
    %36 = vector.extract_strided_slice %21 {offsets = [4, 0], sizes = [4, 32], strides = [1, 1]} : vector<32x32xbf16> to vector<4x32xbf16>
    %cst_15 = arith.constant dense<0.000000e+00> : vector<8x32xf32>
    %37 = tpu.matmul %35, %36, %cst_15 {dimension_numbers = #tpu.dot_dimension_numbers<[1], [0], [0], [1], [0, 0, 1, 1], [], []>} : vector<8x4xbf16>, vector<4x32xbf16>, vector<8x32xf32> -> vector<8x32xf32>
    %38 = arith.addf %30, %37 : vector<8x32xf32>
    %39 = vector.extract_strided_slice %19 {offsets = [0, 2, 0], sizes = [8, 1, 32], strides = [1, 1, 1]} : vector<8x8x32xbf16> to vector<8x1x32xbf16>
    %40 = vector.shape_cast %39 : vector<8x1x32xbf16> to vector<8x32xbf16>
    %41 = vector.extract_strided_slice %20 {offsets = [0, 8], sizes = [32, 4], strides = [1, 1]} : vector<32x32xbf16> to vector<32x4xbf16>
    %cst_16 = arith.constant dense<0.000000e+00> : vector<8x4xf32>
    %42 = tpu.matmul %40, %41, %cst_16 {dimension_numbers = #tpu.dot_dimension_numbers<[1], [0], [0], [1], [0, 0, 1, 1], [], []>} : vector<8x32xbf16>, vector<32x4xbf16>, vector<8x4xf32> -> vector<8x4xf32>
    %43 = arith.truncf %42 : vector<8x4xf32> to vector<8x4xbf16>
    %44 = vector.extract_strided_slice %21 {offsets = [8, 0], sizes = [4, 32], strides = [1, 1]} : vector<32x32xbf16> to vector<4x32xbf16>
    %cst_17 = arith.constant dense<0.000000e+00> : vector<8x32xf32>
    %45 = tpu.matmul %43, %44, %cst_17 {dimension_numbers = #tpu.dot_dimension_numbers<[1], [0], [0], [1], [0, 0, 1, 1], [], []>} : vector<8x4xbf16>, vector<4x32xbf16>, vector<8x32xf32> -> vector<8x32xf32>
    %46 = arith.addf %38, %45 : vector<8x32xf32>
    %47 = vector.extract_strided_slice %19 {offsets = [0, 3, 0], sizes = [8, 1, 32], strides = [1, 1, 1]} : vector<8x8x32xbf16> to vector<8x1x32xbf16>
    %48 = vector.shape_cast %47 : vector<8x1x32xbf16> to vector<8x32xbf16>
    %49 = vector.extract_strided_slice %20 {offsets = [0, 12], sizes = [32, 4], strides = [1, 1]} : vector<32x32xbf16> to vector<32x4xbf16>
    %cst_18 = arith.constant dense<0.000000e+00> : vector<8x4xf32>
    %50 = tpu.matmul %48, %49, %cst_18 {dimension_numbers = #tpu.dot_dimension_numbers<[1], [0], [0], [1], [0, 0, 1, 1], [], []>} : vector<8x32xbf16>, vector<32x4xbf16>, vector<8x4xf32> -> vector<8x4xf32>
    %51 = arith.truncf %50 : vector<8x4xf32> to vector<8x4xbf16>
    %52 = vector.extract_strided_slice %21 {offsets = [12, 0], sizes = [4, 32], strides = [1, 1]} : vector<32x32xbf16> to vector<4x32xbf16>
    %cst_19 = arith.constant dense<0.000000e+00> : vector<8x32xf32>
    %53 = tpu.matmul %51, %52, %cst_19 {dimension_numbers = #tpu.dot_dimension_numbers<[1], [0], [0], [1], [0, 0, 1, 1], [], []>} : vector<8x4xbf16>, vector<4x32xbf16>, vector<8x32xf32> -> vector<8x32xf32>
    %54 = arith.addf %46, %53 : vector<8x32xf32>
    %55 = vector.extract_strided_slice %19 {offsets = [0, 4, 0], sizes = [8, 1, 32], strides = [1, 1, 1]} : vector<8x8x32xbf16> to vector<8x1x32xbf16>
    %56 = vector.shape_cast %55 : vector<8x1x32xbf16> to vector<8x32xbf16>
    %57 = vector.extract_strided_slice %20 {offsets = [0, 16], sizes = [32, 4], strides = [1, 1]} : vector<32x32xbf16> to vector<32x4xbf16>
    %cst_20 = arith.constant dense<0.000000e+00> : vector<8x4xf32>
    %58 = tpu.matmul %56, %57, %cst_20 {dimension_numbers = #tpu.dot_dimension_numbers<[1], [0], [0], [1], [0, 0, 1, 1], [], []>} : vector<8x32xbf16>, vector<32x4xbf16>, vector<8x4xf32> -> vector<8x4xf32>
    %59 = arith.truncf %58 : vector<8x4xf32> to vector<8x4xbf16>
    %60 = vector.extract_strided_slice %21 {offsets = [16, 0], sizes = [4, 32], strides = [1, 1]} : vector<32x32xbf16> to vector<4x32xbf16>
    %cst_21 = arith.constant dense<0.000000e+00> : vector<8x32xf32>
    %61 = tpu.matmul %59, %60, %cst_21 {dimension_numbers = #tpu.dot_dimension_numbers<[1], [0], [0], [1], [0, 0, 1, 1], [], []>} : vector<8x4xbf16>, vector<4x32xbf16>, vector<8x32xf32> -> vector<8x32xf32>
    %62 = arith.addf %54, %61 : vector<8x32xf32>
    %63 = vector.extract_strided_slice %19 {offsets = [0, 5, 0], sizes = [8, 1, 32], strides = [1, 1, 1]} : vector<8x8x32xbf16> to vector<8x1x32xbf16>
    %64 = vector.shape_cast %63 : vector<8x1x32xbf16> to vector<8x32xbf16>
    %65 = vector.extract_strided_slice %20 {offsets = [0, 20], sizes = [32, 4], strides = [1, 1]} : vector<32x32xbf16> to vector<32x4xbf16>
    %cst_22 = arith.constant dense<0.000000e+00> : vector<8x4xf32>
    %66 = tpu.matmul %64, %65, %cst_22 {dimension_numbers = #tpu.dot_dimension_numbers<[1], [0], [0], [1], [0, 0, 1, 1], [], []>} : vector<8x32xbf16>, vector<32x4xbf16>, vector<8x4xf32> -> vector<8x4xf32>
    %67 = arith.truncf %66 : vector<8x4xf32> to vector<8x4xbf16>
    %68 = vector.extract_strided_slice %21 {offsets = [20, 0], sizes = [4, 32], strides = [1, 1]} : vector<32x32xbf16> to vector<4x32xbf16>
    %cst_23 = arith.constant dense<0.000000e+00> : vector<8x32xf32>
    %69 = tpu.matmul %67, %68, %cst_23 {dimension_numbers = #tpu.dot_dimension_numbers<[1], [0], [0], [1], [0, 0, 1, 1], [], []>} : vector<8x4xbf16>, vector<4x32xbf16>, vector<8x32xf32> -> vector<8x32xf32>
    %70 = arith.addf %62, %69 : vector<8x32xf32>
    %71 = vector.extract_strided_slice %19 {offsets = [0, 6, 0], sizes = [8, 1, 32], strides = [1, 1, 1]} : vector<8x8x32xbf16> to vector<8x1x32xbf16>
    %72 = vector.shape_cast %71 : vector<8x1x32xbf16> to vector<8x32xbf16>
    %73 = vector.extract_strided_slice %20 {offsets = [0, 24], sizes = [32, 4], strides = [1, 1]} : vector<32x32xbf16> to vector<32x4xbf16>
    %cst_24 = arith.constant dense<0.000000e+00> : vector<8x4xf32>
    %74 = tpu.matmul %72, %73, %cst_24 {dimension_numbers = #tpu.dot_dimension_numbers<[1], [0], [0], [1], [0, 0, 1, 1], [], []>} : vector<8x32xbf16>, vector<32x4xbf16>, vector<8x4xf32> -> vector<8x4xf32>
    %75 = arith.truncf %74 : vector<8x4xf32> to vector<8x4xbf16>
    %76 = vector.extract_strided_slice %21 {offsets = [24, 0], sizes = [4, 32], strides = [1, 1]} : vector<32x32xbf16> to vector<4x32xbf16>
    %cst_25 = arith.constant dense<0.000000e+00> : vector<8x32xf32>
    %77 = tpu.matmul %75, %76, %cst_25 {dimension_numbers = #tpu.dot_dimension_numbers<[1], [0], [0], [1], [0, 0, 1, 1], [], []>} : vector<8x4xbf16>, vector<4x32xbf16>, vector<8x32xf32> -> vector<8x32xf32>
    %78 = arith.addf %70, %77 : vector<8x32xf32>
    %79 = vector.extract_strided_slice %19 {offsets = [0, 7, 0], sizes = [8, 1, 32], strides = [1, 1, 1]} : vector<8x8x32xbf16> to vector<8x1x32xbf16>
    %80 = vector.shape_cast %79 : vector<8x1x32xbf16> to vector<8x32xbf16>
    %81 = vector.extract_strided_slice %20 {offsets = [0, 28], sizes = [32, 4], strides = [1, 1]} : vector<32x32xbf16> to vector<32x4xbf16>
    %cst_26 = arith.constant dense<0.000000e+00> : vector<8x4xf32>
    %82 = tpu.matmul %80, %81, %cst_26 {dimension_numbers = #tpu.dot_dimension_numbers<[1], [0], [0], [1], [0, 0, 1, 1], [], []>} : vector<8x32xbf16>, vector<32x4xbf16>, vector<8x4xf32> -> vector<8x4xf32>
    %83 = arith.truncf %82 : vector<8x4xf32> to vector<8x4xbf16>
    %84 = vector.extract_strided_slice %21 {offsets = [28, 0], sizes = [4, 32], strides = [1, 1]} : vector<32x32xbf16> to vector<4x32xbf16>
    %cst_27 = arith.constant dense<0.000000e+00> : vector<8x32xf32>
    %85 = tpu.matmul %83, %84, %cst_27 {dimension_numbers = #tpu.dot_dimension_numbers<[1], [0], [0], [1], [0, 0, 1, 1], [], []>} : vector<8x4xbf16>, vector<4x32xbf16>, vector<8x32xf32> -> vector<8x32xf32>
    %86 = arith.addf %78, %85 : vector<8x32xf32>
    %c0_28 = arith.constant 0 : index
    %c0_29 = arith.constant 0 : index
    %87 = vector.load %arg5[%c0_28, %c0_29] : memref<1x32xf32, #tpu.memory_space<vmem>>, vector<1x32xf32>
    %88 = vector.broadcast %87 : vector<1x32xf32> to vector<8x32xf32>
    %89 = arith.addf %86, %88 : vector<8x32xf32>
    %c0_30 = arith.constant 0 : index
    %c0_31 = arith.constant 0 : index
    %90 = vector.load %arg6[%c0_30, %c0_31] : memref<8x32xf32, #tpu.memory_space<vmem>>, vector<8x32xf32>
    tpu.vector_store %arg6[%c0_30, %c0_31], %89 {strides = array<i32>} : memref<8x32xf32, #tpu.memory_space<vmem>>, vector<8x32xf32>,
    return
  }
  func.func @transform_0(%arg0: i32) -> (i32, i32, i32) {
    %c0_i32 = arith.constant 0 : i32
    %c0_i32_0 = arith.constant 0 : i32
    %c0_i32_1 = arith.constant 0 : i32
    return %arg0, %c0_i32, %c0_i32_0 : i32, i32, i32
  }
  func.func @transform_1(%arg0: i32) -> (i32, i32) {
    %c0_i32 = arith.constant 0 : i32
    %c0_i32_0 = arith.constant 0 : i32
    %c0_i32_1 = arith.constant 0 : i32
    return %c0_i32, %c0_i32_0 : i32, i32
  }
  func.func @transform_2(%arg0: i32) -> (i32, i32) {
    %c0_i32 = arith.constant 0 : i32
    %c0_i32_0 = arith.constant 0 : i32
    %c0_i32_1 = arith.constant 0 : i32
    return %c0_i32, %c0_i32_0 : i32, i32
  }
  func.func @transform_3(%arg0: i32) -> (i32, i32) {
    %c0_i32 = arith.constant 0 : i32
    %c0_i32_0 = arith.constant 0 : i32
    %c0_i32_1 = arith.constant 0 : i32
    return %c0_i32, %c0_i32_0 : i32, i32
  }
  func.func @transform_4(%arg0: i32) -> (i32, i32) {
    %c0_i32 = arith.constant 0 : i32
    %c0_i32_0 = arith.constant 0 : i32
    %c0_i32_1 = arith.constant 0 : i32
    return %c0_i32, %c0_i32_0 : i32, i32
  }
  func.func @transform_5(%arg0: i32) -> (i32, i32) {
    %c0_i32 = arith.constant 0 : i32
    %c0_i32_0 = arith.constant 0 : i32
    return %arg0, %c0_i32 : i32, i32
  }
}

</mosaic_0001>

<llo_original>
// kernel: tpu_custom_call.1
$region0: #{tpu_custom_call.1}
  #allocation0 [shape = 'u32[]', space=smem, size = 0x4, offset = 0x4, fixed_abs, tag = 'smem constant byte address 0x4 - core index']
  #allocation1 [shape = 'u32[144,128]{1,0:T(1,128)}', space=vmem, size = 0x12000, scoped, tag = 'internal scratch']
  %s0 = inlined_call_operand.hbm [shape: f32[8,8,32], index: 0, kind: input, shape index: {}]
  %s1 = inlined_call_operand.vmem [shape: bf16[32,8], index: 1, kind: input, shape index: {}]
  %s2 = inlined_call_operand.vmem [shape: bf16[32,32], index: 2, kind: input, shape index: {}]
  %s3 = inlined_call_operand.hbm [shape: bf16[32,32], index: 3, kind: input, shape index: {}]
  %s4 = inlined_call_operand.vmem [shape: f32[1,32], index: 4, kind: input, shape index: {}]
  %s5 = inlined_call_operand.hbm [shape: f32[8,32], index: 5, kind: output, shape index: {}]
  %s6 = sld [smem:[#allocation0]]
  $region38: #{tpu_custom_call.1} parent=0
    _
  %s8 = ssub.s32 1, %s6
  %s9 = scalar_select 0, %s8, %s6
  $region1: #{tpu_custom_call.1} parent=0
    #allocation2 [shape = 'u8[32768]{0}', space=vmem, size = 0x8000, scoped, tag = 'input window, operand 0, single buffered']
    #allocation3 [shape = 's32[1]{0}', space=sflag, size = 0x4, scoped, tag = 'scoped memory for tpu_custom_call.1']
    #allocation4 [shape = 's32[1]{0}', space=sflag, size = 0x4, scoped, tag = 'scoped memory for tpu_custom_call.1']
    #allocation5 [shape = 'u8[8192]{0}', space=vmem, size = 0x2000, scoped, tag = 'input window, operand 3, single buffered']
    #allocation6 [shape = 's32[1]{0}', space=sflag, size = 0x4, scoped, tag = 'scoped memory for tpu_custom_call.1']
    #allocation7 [shape = 'u8[4096]{0}', space=vmem, size = 0x1000, scoped, tag = 'output window, operand 0, single buffered']
    %10 = vsyncpa [#allocation3], 0
    %11 = vsyncpa [#allocation6], 0
    %12 = vsyncpa [#allocation4], 0
    // Predicated region
    $region2: #{tpu_custom_call.1} parent=1 // pred_check
      _
    $region3: #{tpu_custom_call.1} parent=1 // pred_check_branch
      %14 = sbr.rel (0) target = $region5
    $region4: #{tpu_custom_call.1} parent=1 // pred_region
      %s16 = ssub.s32 1024, 1024
      %17 = vsyncadd [#allocation3], %s16
      %s18 = sshll.u32 [#allocation2], 4
      %s19 = int_to_ptr.vmem [resolvable:$true] %s18
      %24 = dma.hbm_to_vmem [thread:$0]  %s0, 1024, %s19, [#allocation3], 128, 128, 8
    $region5: #{tpu_custom_call.1} parent=1 // pred_fallthru
      _
    // Predicated region
    $region6: #{tpu_custom_call.1} parent=1 // pred_check
      _
    $region7: #{tpu_custom_call.1} parent=1 // pred_check_branch
      %26 = sbr.rel (0) target = $region9
    $region8: #{tpu_custom_call.1} parent=1 // pred_region
      _
    $region9: #{tpu_custom_call.1} parent=1 // pred_fallthru
      _
    // Predicated region
    $region10: #{tpu_custom_call.1} parent=1 // pred_check
      _
    $region11: #{tpu_custom_call.1} parent=1 // pred_check_branch
      %28 = sbr.rel (0) target = $region13
    $region12: #{tpu_custom_call.1} parent=1 // pred_region
      _
    $region13: #{tpu_custom_call.1} parent=1 // pred_fallthru
      _
    // Predicated region
    $region14: #{tpu_custom_call.1} parent=1 // pred_check
      _
    $region15: #{tpu_custom_call.1} parent=1 // pred_check_branch
      %30 = sbr.rel (0) target = $region17
    $region16: #{tpu_custom_call.1} parent=1 // pred_region
      %s32 = ssub.s32 256, 256
      %33 = vsyncadd [#allocation6], %s32
      %s34 = sshll.u32 [#allocation5], 4
      %s35 = int_to_ptr.vmem [resolvable:$true] %s34
      %40 = dma.hbm_to_vmem [thread:$0]  %s3, 256, %s35, [#allocation6], 64, 64, 4
    $region17: #{tpu_custom_call.1} parent=1 // pred_fallthru
      _
    // Predicated region
    $region18: #{tpu_custom_call.1} parent=1 // pred_check
      _
    $region19: #{tpu_custom_call.1} parent=1 // pred_check_branch
      %42 = sbr.rel (0) target = $region21
    $region20: #{tpu_custom_call.1} parent=1 // pred_region
      _
    $region21: #{tpu_custom_call.1} parent=1 // pred_fallthru
      _
    // Predicated region
    $region22: #{tpu_custom_call.1} parent=1 // pred_check
      _
    $region23: #{tpu_custom_call.1} parent=1 // pred_check_branch
      %44 = sbr.rel (0) target = $region25
    $region24: #{tpu_custom_call.1} parent=1 // pred_region
      %45 = dma.done [#allocation3], 1024
    $region25: #{tpu_custom_call.1} parent=1 // pred_fallthru
      _
    // Predicated region
    $region26: #{tpu_custom_call.1} parent=1 // pred_check
      _
    $region27: #{tpu_custom_call.1} parent=1 // pred_check_branch
      %47 = sbr.rel (0) target = $region29
    $region28: #{tpu_custom_call.1} parent=1 // pred_region
      %48 = dma.done [#allocation6], 256
    $region29: #{tpu_custom_call.1} parent=1 // pred_fallthru
      _
    %v50 = vld [vmem:[#allocation2] sm:$0xff]
    %v51 = vld [vmem:[#allocation2 + $0x8] sm:$0xff]
    %v52 = vld [vmem:[#allocation2 + $0x10] sm:$0xff]
    %v53 = vld [vmem:[#allocation2 + $0x18] sm:$0xff]
    %v54 = vld [vmem:[#allocation2 + $0x20] sm:$0xff]
    %v55 = vld [vmem:[#allocation2 + $0x28] sm:$0xff]
    %v56 = vld [vmem:[#allocation2 + $0x30] sm:$0xff]
    %v57 = vld [vmem:[#allocation2 + $0x38] sm:$0xff]
    %v58 = vpack.c.bf16 %v50, %v50
    %v59 = vpack.c.bf16 %v51, %v51
    %v60 = vpack.c.bf16 %v52, %v52
    %v61 = vpack.c.bf16 %v53, %v53
    %v62 = vpack.c.bf16 %v54, %v54
    %v63 = vpack.c.bf16 %v55, %v55
    %v64 = vpack.c.bf16 %v56, %v56
    %v65 = vpack.c.bf16 %v57, %v57
    %v66 = vld [vmem:[%s1] sm:$0xf]
    %v67 = vld [vmem:[%s1 + $0x4] sm:$0xf]
    %v68 = vld [vmem:[%s1 + $0x8] sm:$0xf]
    %v69 = vld [vmem:[%s1 + $0xc] sm:$0xf]
    %v78 = vunpack.c.l.b16 %v58
    %v79 = vunpack.c.l.b16 %v59
    %v80 = vunpack.c.l.b16 %v60
    %v81 = vunpack.c.l.b16 %v61
    %v82 = vunpack.c.l.b16 %v62
    %v83 = vunpack.c.l.b16 %v63
    %v84 = vunpack.c.l.b16 %v64
    %v85 = vunpack.c.l.b16 %v65
    %v86 = vpack.c.b16 %v79, %v78
    %v87 = vpack.c.b16 %v81, %v80
    %v88 = vpack.c.b16 %v83, %v82
    %v89 = vpack.c.b16 %v85, %v84
    %v94 = vunpack.c.l.b16 %v66
    %v95 = vunpack.c.l.b16 %v67
    %v96 = vunpack.c.l.b16 %v68
    %v97 = vunpack.c.l.b16 %v69
    %v98 = vpack.c.b16 %v95, %v94
    %v99 = vpack.c.b16 %v97, %v96
    %vm102 = vcmask 261120
    %v104 = vsel %vm102, %v86, 0
    %v107 = vsel %vm102, %v87, 0
    %v110 = vsel %vm102, %v88, 0
    %v113 = vsel %vm102, %v89, 0
    %115 = vmatprep.subr.bf16.mxu0 0
    %116 = vmatpush1.bf16.msra.mxu0 %v98
    %117 = vmatprep.subr.bf16.mxu0 0
    %118 = vmatpush1.bf16.msra.mxu0 %v99
    %119 = vmatprep.subr.bf16.mxu0 0
    %120 = vmatpush1.bf16.msra.mxu0 0
    %121 = vmatprep.subr.bf16.mxu0 0
    %122 = vmatpush1.bf16.msra.mxu0 0
    %123 = vmatprep.subr.bf16.mxu0 0
    %124 = vmatpush1.bf16.msra.mxu0 0
    %125 = vmatprep.subr.bf16.mxu0 0
    %126 = vmatpush1.bf16.msra.mxu0 0
    %127 = vmatprep.subr.bf16.mxu0 0
    %128 = vmatpush1.bf16.msra.mxu0 0
    %129 = vmatprep.subr.bf16.mxu0 0
    %130 = vmatpush1.bf16.msra.mxu0 0
    %131 = vmatprep.subr.bf16.mxu0 0
    %132 = vmatpush1.bf16.msra.mxu0 0
    %133 = vmatprep.subr.bf16.mxu0 0
    %134 = vmatpush1.bf16.msra.mxu0 0
    %135 = vmatprep.subr.bf16.mxu0 0
    %136 = vmatpush1.bf16.msra.mxu0 0
    %137 = vmatprep.subr.bf16.mxu0 0
    %138 = vmatpush1.bf16.msra.mxu0 0
    %139 = vmatprep.subr.bf16.mxu0 0
    %140 = vmatpush1.bf16.msra.mxu0 0
    %141 = vmatprep.subr.bf16.mxu0 0
    %142 = vmatpush1.bf16.msra.mxu0 0
    %143 = vmatprep.subr.bf16.mxu0 0
    %144 = vmatpush1.bf16.msra.mxu0 0
    %145 = vmatprep.subr.bf16.mxu0 0
    %146 = vmatpush1.bf16.msra.mxu0 0
    %147 = vmatprep.mubr.bf16.mxu0 0
    %148 = vmatmul.mubr.bf16.gmra.mrb[0].mxu0 %v104
    %v149 = vpop.f32.mrb[0].mxu0
    %v150 = vadd.f32 0.0, %v149
    %v151 = vpop.f32.mrb[0].mxu0
    %v152 = vpop.f32.mrb[0].mxu0
    %v153 = vadd.f32 0.0, %v152
    %v154 = vpop.f32.mrb[0].mxu0
    %155 = vmatprep.mubr.bf16.mxu0 0
    %156 = vmatmul.mubr.bf16.gmra.mrb[0].mxu0 %v107
    %v157 = vpop.f32.mrb[0].mxu0
    %v158 = vadd.f32 0.0, %v157
    %v159 = vpop.f32.mrb[0].mxu0
    %v160 = vpop.f32.mrb[0].mxu0
    %v161 = vadd.f32 0.0, %v160
    %v162 = vpop.f32.mrb[0].mxu0
    %163 = vmatprep.mubr.bf16.mxu0 0
    %164 = vmatmul.mubr.bf16.gmra.mrb[0].mxu0 %v110
    %v165 = vpop.f32.mrb[0].mxu0
    %v166 = vadd.f32 0.0, %v165
    %v167 = vpop.f32.mrb[0].mxu0
    %v168 = vpop.f32.mrb[0].mxu0
    %v169 = vadd.f32 0.0, %v168
    %v170 = vpop.f32.mrb[0].mxu0
    %171 = vmatprep.mubr.bf16.mxu0 0
    %172 = vmatmul.mubr.bf16.gmra.mrb[0].mxu0 %v113
    %v173 = vpop.f32.mrb[0].mxu0
    %v174 = vadd.f32 0.0, %v173
    %v175 = vpop.f32.mrb[0].mxu0
    %v176 = vpop.f32.mrb[0].mxu0
    %v177 = vadd.f32 0.0, %v176
    %v178 = vpop.f32.mrb[0].mxu0
    %179 = vdwg.mxu0
    %180 = vxpose.xlu0.b32.start [1/16] %v150, 128
    %181 = vxpose.xlu0.b32.cont [2/16] 0.0, 128
    %182 = vxpose.xlu0.b32.cont [3/16] 0.0, 128
    %183 = vxpose.xlu0.b32.cont [4/16] 0.0, 128
    %184 = vxpose.xlu0.b32.cont [5/16] 0.0, 128
    %185 = vxpose.xlu0.b32.cont [6/16] 0.0, 128
    %186 = vxpose.xlu0.b32.cont [7/16] 0.0, 128
    %187 = vxpose.xlu0.b32.cont [8/16] 0.0, 128
    %188 = vxpose.xlu0.b32.cont [9/16] 0.0, 128
    %189 = vxpose.xlu0.b32.cont [10/16] 0.0, 128
    %190 = vxpose.xlu0.b32.cont [11/16] 0.0, 128
    %191 = vxpose.xlu0.b32.cont [12/16] 0.0, 128
    %192 = vxpose.xlu0.b32.cont [13/16] 0.0, 128
    %193 = vxpose.xlu0.b32.cont [14/16] 0.0, 128
    %194 = vxpose.xlu0.b32.cont [15/16] 0.0, 128
    %195 = vxpose.xlu0.b32.end [16/16] 0.0, 128
    %v196 = vpop.trf.xlu0
    %v197 = vpop.trf.xlu0
    %v198 = vpop.trf.xlu0
    %v199 = vpop.trf.xlu0
    %v200 = vpop.trf.xlu0
    %v201 = vpop.trf.xlu0
    %v202 = vpop.trf.xlu0
    %v203 = vpop.trf.xlu0
    %v204 = vpop.trf.xlu0
    %v205 = vpop.trf.xlu0
    %v206 = vpop.trf.xlu0
    %v207 = vpop.trf.xlu0
    %v208 = vpop.trf.xlu0
    %v209 = vpop.trf.xlu0
    %v210 = vpop.trf.xlu0
    %v211 = vpop.trf.xlu0
    %212 = vxpose.xlu0.b32.start [1/16] %v153, 128
    %213 = vxpose.xlu0.b32.cont [2/16] 0.0, 128
    %214 = vxpose.xlu0.b32.cont [3/16] 0.0, 128
    %215 = vxpose.xlu0.b32.cont [4/16] 0.0, 128
    %216 = vxpose.xlu0.b32.cont [5/16] 0.0, 128
    %217 = vxpose.xlu0.b32.cont [6/16] 0.0, 128
    %218 = vxpose.xlu0.b32.cont [7/16] 0.0, 128
    %219 = vxpose.xlu0.b32.cont [8/16] 0.0, 128
    %220 = vxpose.xlu0.b32.cont [9/16] 0.0, 128
    %221 = vxpose.xlu0.b32.cont [10/16] 0.0, 128
    %222 = vxpose.xlu0.b32.cont [11/16] 0.0, 128
    %223 = vxpose.xlu0.b32.cont [12/16] 0.0, 128
    %224 = vxpose.xlu0.b32.cont [13/16] 0.0, 128
    %225 = vxpose.xlu0.b32.cont [14/16] 0.0, 128
    %226 = vxpose.xlu0.b32.cont [15/16] 0.0, 128
    %227 = vxpose.xlu0.b32.end [16/16] 0.0, 128
    %v228 = vpop.trf.xlu0
    %v229 = vpop.trf.xlu0
    %v230 = vpop.trf.xlu0
    %v231 = vpop.trf.xlu0
    %v232 = vpop.trf.xlu0
    %v233 = vpop.trf.xlu0
    %v234 = vpop.trf.xlu0
    %v235 = vpop.trf.xlu0
    %v236 = vpop.trf.xlu0
    %v237 = vpop.trf.xlu0
    %v238 = vpop.trf.xlu0
    %v239 = vpop.trf.xlu0
    %v240 = vpop.trf.xlu0
    %v241 = vpop.trf.xlu0
    %v242 = vpop.trf.xlu0
    %v243 = vpop.trf.xlu0
    %244 = vxpose.xlu0.b32.start [1/16] %v158, 128
    %245 = vxpose.xlu0.b32.cont [2/16] 0.0, 128
    %246 = vxpose.xlu0.b32.cont [3/16] 0.0, 128
    %247 = vxpose.xlu0.b32.cont [4/16] 0.0, 128
    %248 = vxpose.xlu0.b32.cont [5/16] 0.0, 128
    %249 = vxpose.xlu0.b32.cont [6/16] 0.0, 128
    %250 = vxpose.xlu0.b32.cont [7/16] 0.0, 128
    %251 = vxpose.xlu0.b32.cont [8/16] 0.0, 128
    %252 = vxpose.xlu0.b32.cont [9/16] 0.0, 128
    %253 = vxpose.xlu0.b32.cont [10/16] 0.0, 128
    %254 = vxpose.xlu0.b32.cont [11/16] 0.0, 128
    %255 = vxpose.xlu0.b32.cont [12/16] 0.0, 128
    %256 = vxpose.xlu0.b32.cont [13/16] 0.0, 128
    %257 = vxpose.xlu0.b32.cont [14/16] 0.0, 128
    %258 = vxpose.xlu0.b32.cont [15/16] 0.0, 128
    %259 = vxpose.xlu0.b32.end [16/16] 0.0, 128
    %v260 = vpop.trf.xlu0
    %v261 = vpop.trf.xlu0
    %v262 = vpop.trf.xlu0
    %v263 = vpop.trf.xlu0
    %v264 = vpop.trf.xlu0
    %v265 = vpop.trf.xlu0
    %v266 = vpop.trf.xlu0
    %v267 = vpop.trf.xlu0
    %v268 = vpop.trf.xlu0
    %v269 = vpop.trf.xlu0
    %v270 = vpop.trf.xlu0
    %v271 = vpop.trf.xlu0
    %v272 = vpop.trf.xlu0
    %v273 = vpop.trf.xlu0
    %v274 = vpop.trf.xlu0
    %v275 = vpop.trf.xlu0
    %276 = vxpose.xlu0.b32.start [1/16] %v161, 128
    %277 = vxpose.xlu0.b32.cont [2/16] 0.0, 128
    %278 = vxpose.xlu0.b32.cont [3/16] 0.0, 128
    %279 = vxpose.xlu0.b32.cont [4/16] 0.0, 128
    %280 = vxpose.xlu0.b32.cont [5/16] 0.0, 128
    %281 = vxpose.xlu0.b32.cont [6/16] 0.0, 128
    %282 = vxpose.xlu0.b32.cont [7/16] 0.0, 128
    %283 = vxpose.xlu0.b32.cont [8/16] 0.0, 128
    %284 = vxpose.xlu0.b32.cont [9/16] 0.0, 128
    %285 = vxpose.xlu0.b32.cont [10/16] 0.0, 128
    %286 = vxpose.xlu0.b32.cont [11/16] 0.0, 128
    %287 = vxpose.xlu0.b32.cont [12/16] 0.0, 128
    %288 = vxpose.xlu0.b32.cont [13/16] 0.0, 128
    %289 = vxpose.xlu0.b32.cont [14/16] 0.0, 128
    %290 = vxpose.xlu0.b32.cont [15/16] 0.0, 128
    %291 = vxpose.xlu0.b32.end [16/16] 0.0, 128
    %v292 = vpop.trf.xlu0
    %v293 = vpop.trf.xlu0
    %v294 = vpop.trf.xlu0
    %v295 = vpop.trf.xlu0
    %v296 = vpop.trf.xlu0
    %v297 = vpop.trf.xlu0
    %v298 = vpop.trf.xlu0
    %v299 = vpop.trf.xlu0
    %v300 = vpop.trf.xlu0
    %v301 = vpop.trf.xlu0
    %v302 = vpop.trf.xlu0
    %v303 = vpop.trf.xlu0
    %v304 = vpop.trf.xlu0
    %v305 = vpop.trf.xlu0
    %v306 = vpop.trf.xlu0
    %v307 = vpop.trf.xlu0
    %308 = vxpose.xlu0.b32.start [1/16] %v166, 128
    %309 = vxpose.xlu0.b32.cont [2/16] 0.0, 128
    %310 = vxpose.xlu0.b32.cont [3/16] 0.0, 128
    %311 = vxpose.xlu0.b32.cont [4/16] 0.0, 128
    %312 = vxpose.xlu0.b32.cont [5/16] 0.0, 128
    %313 = vxpose.xlu0.b32.cont [6/16] 0.0, 128
    %314 = vxpose.xlu0.b32.cont [7/16] 0.0, 128
    %315 = vxpose.xlu0.b32.cont [8/16] 0.0, 128
    %316 = vxpose.xlu0.b32.cont [9/16] 0.0, 128
    %317 = vxpose.xlu0.b32.cont [10/16] 0.0, 128
    %318 = vxpose.xlu0.b32.cont [11/16] 0.0, 128
    %319 = vxpose.xlu0.b32.cont [12/16] 0.0, 128
    %320 = vxpose.xlu0.b32.cont [13/16] 0.0, 128
    %321 = vxpose.xlu0.b32.cont [14/16] 0.0, 128
    %322 = vxpose.xlu0.b32.cont [15/16] 0.0, 128
    %323 = vxpose.xlu0.b32.end [16/16] 0.0, 128
    %v324 = vpop.trf.xlu0
    %v325 = vpop.trf.xlu0
    %v326 = vpop.trf.xlu0
    %v327 = vpop.trf.xlu0
    %v328 = vpop.trf.xlu0
    %v329 = vpop.trf.xlu0
    %v330 = vpop.trf.xlu0
    %v331 = vpop.trf.xlu0
    %v332 = vpop.trf.xlu0
    %v333 = vpop.trf.xlu0
    %v334 = vpop.trf.xlu0
    %v335 = vpop.trf.xlu0
    %v336 = vpop.trf.xlu0
    %v337 = vpop.trf.xlu0
    %v338 = vpop.trf.xlu0
    %v339 = vpop.trf.xlu0
    %340 = vxpose.xlu0.b32.start [1/16] %v169, 128
    %341 = vxpose.xlu0.b32.cont [2/16] 0.0, 128
    %342 = vxpose.xlu0.b32.cont [3/16] 0.0, 128
    %343 = vxpose.xlu0.b32.cont [4/16] 0.0, 128
    %344 = vxpose.xlu0.b32.cont [5/16] 0.0, 128
    %345 = vxpose.xlu0.b32.cont [6/16] 0.0, 128
    %346 = vxpose.xlu0.b32.cont [7/16] 0.0, 128
    %347 = vxpose.xlu0.b32.cont [8/16] 0.0, 128
    %348 = vxpose.xlu0.b32.cont [9/16] 0.0, 128
    %349 = vxpose.xlu0.b32.cont [10/16] 0.0, 128
    %350 = vxpose.xlu0.b32.cont [11/16] 0.0, 128
    %351 = vxpose.xlu0.b32.cont [12/16] 0.0, 128
    %352 = vxpose.xlu0.b32.cont [13/16] 0.0, 128
    %353 = vxpose.xlu0.b32.cont [14/16] 0.0, 128
    %354 = vxpose.xlu0.b32.cont [15/16] 0.0, 128
    %355 = vxpose.xlu0.b32.end [16/16] 0.0, 128
    %v356 = vpop.trf.xlu0
    %v357 = vpop.trf.xlu0
    %v358 = vpop.trf.xlu0
    %v359 = vpop.trf.xlu0
    %v360 = vpop.trf.xlu0
    %v361 = vpop.trf.xlu0
    %v362 = vpop.trf.xlu0
    %v363 = vpop.trf.xlu0
    %v364 = vpop.trf.xlu0
    %v365 = vpop.trf.xlu0
    %v366 = vpop.trf.xlu0
    %v367 = vpop.trf.xlu0
    %v368 = vpop.trf.xlu0
    %v369 = vpop.trf.xlu0
    %v370 = vpop.trf.xlu0
    %v371 = vpop.trf.xlu0
    %372 = vxpose.xlu0.b32.start [1/16] %v174, 128
    %373 = vxpose.xlu0.b32.cont [2/16] 0.0, 128
    %374 = vxpose.xlu0.b32.cont [3/16] 0.0, 128
    %375 = vxpose.xlu0.b32.cont [4/16] 0.0, 128
    %376 = vxpose.xlu0.b32.cont [5/16] 0.0, 128
    %377 = vxpose.xlu0.b32.cont [6/16] 0.0, 128
    %378 = vxpose.xlu0.b32.cont [7/16] 0.0, 128
    %379 = vxpose.xlu0.b32.cont [8/16] 0.0, 128
    %380 = vxpose.xlu0.b32.cont [9/16] 0.0, 128
    %381 = vxpose.xlu0.b32.cont [10/16] 0.0, 128
    %382 = vxpose.xlu0.b32.cont [11/16] 0.0, 128
    %383 = vxpose.xlu0.b32.cont [12/16] 0.0, 128
    %384 = vxpose.xlu0.b32.cont [13/16] 0.0, 128
    %385 = vxpose.xlu0.b32.cont [14/16] 0.0, 128
    %386 = vxpose.xlu0.b32.cont [15/16] 0.0, 128
    %387 = vxpose.xlu0.b32.end [16/16] 0.0, 128
    %v388 = vpop.trf.xlu0
    %v389 = vpop.trf.xlu0
    %v390 = vpop.trf.xlu0
    %v391 = vpop.trf.xlu0
    %v392 = vpop.trf.xlu0
    %v393 = vpop.trf.xlu0
    %v394 = vpop.trf.xlu0
    %v395 = vpop.trf.xlu0
    %v396 = vpop.trf.xlu0
    %v397 = vpop.trf.xlu0
    %v398 = vpop.trf.xlu0
    %v399 = vpop.trf.xlu0
    %v400 = vpop.trf.xlu0
    %v401 = vpop.trf.xlu0
    %v402 = vpop.trf.xlu0
    %v403 = vpop.trf.xlu0
    %404 = vxpose.xlu0.b32.start [1/16] %v177, 128
    %405 = vxpose.xlu0.b32.cont [2/16] 0.0, 128
    %406 = vxpose.xlu0.b32.cont [3/16] 0.0, 128
    %407 = vxpose.xlu0.b32.cont [4/16] 0.0, 128
    %408 = vxpose.xlu0.b32.cont [5/16] 0.0, 128
    %409 = vxpose.xlu0.b32.cont [6/16] 0.0, 128
    %410 = vxpose.xlu0.b32.cont [7/16] 0.0, 128
    %411 = vxpose.xlu0.b32.cont [8/16] 0.0, 128
    %412 = vxpose.xlu0.b32.cont [9/16] 0.0, 128
    %413 = vxpose.xlu0.b32.cont [10/16] 0.0, 128
    %414 = vxpose.xlu0.b32.cont [11/16] 0.0, 128
    %415 = vxpose.xlu0.b32.cont [12/16] 0.0, 128
    %416 = vxpose.xlu0.b32.cont [13/16] 0.0, 128
    %417 = vxpose.xlu0.b32.cont [14/16] 0.0, 128
    %418 = vxpose.xlu0.b32.cont [15/16] 0.0, 128
    %419 = vxpose.xlu0.b32.end [16/16] 0.0, 128
    %v420 = vpop.trf.xlu0
    %v421 = vpop.trf.xlu0
    %v422 = vpop.trf.xlu0
    %v423 = vpop.trf.xlu0
    %v424 = vpop.trf.xlu0
    %v425 = vpop.trf.xlu0
    %v426 = vpop.trf.xlu0
    %v427 = vpop.trf.xlu0
    %v428 = vpop.trf.xlu0
    %v429 = vpop.trf.xlu0
    %v430 = vpop.trf.xlu0
    %v431 = vpop.trf.xlu0
    %v432 = vpop.trf.xlu0
    %v433 = vpop.trf.xlu0
    %v434 = vpop.trf.xlu0
    %v435 = vpop.trf.xlu0
    %vm436 = vcmask 64512
    %v437 = vsel %vm436, %v196, -inf
    %438 = vmax.xlane.f32.xlu0 %v437
    %v439 = vpop.xlane.xlu0 %438
    %v440 = vsel %vm436, %v228, -inf
    %441 = vmax.xlane.f32.xlu0 %v440
    %v442 = vpop.xlane.xlu0 %441
    %v443 = vsel %vm436, %v260, -inf
    %444 = vmax.xlane.f32.xlu0 %v443
    %v445 = vpop.xlane.xlu0 %444
    %v446 = vsel %vm436, %v292, -inf
    %447 = vmax.xlane.f32.xlu0 %v446
    %v448 = vpop.xlane.xlu0 %447
    %v449 = vsel %vm436, %v324, -inf
    %450 = vmax.xlane.f32.xlu0 %v449
    %v451 = vpop.xlane.xlu0 %450
    %v452 = vsel %vm436, %v356, -inf
    %453 = vmax.xlane.f32.xlu0 %v452
    %v454 = vpop.xlane.xlu0 %453
    %v455 = vsel %vm436, %v388, -inf
    %456 = vmax.xlane.f32.xlu0 %v455
    %v457 = vpop.xlane.xlu0 %456
    %v458 = vsel %vm436, %v420, -inf
    %459 = vmax.xlane.f32.xlu0 %v458
    %v460 = vpop.xlane.xlu0 %459
    %v461 = vsub.f32 %v196, %v439
    %v462 = vsub.f32 %v228, %v442
    %v463 = vsub.f32 %v260, %v445
    %v464 = vsub.f32 %v292, %v448
    %v465 = vsub.f32 %v324, %v451
    %v466 = vsub.f32 %v356, %v454
    %v467 = vsub.f32 %v388, %v457
    %v468 = vsub.f32 %v420, %v460
    %v469 = vmul.f32 %v461, 1.442695
    %v470 = vpow.pop %v469
    %v471 = vmul.f32 %v462, 1.442695
    %v472 = vpow.pop %v471
    %v473 = vmul.f32 %v463, 1.442695
    %v474 = vpow.pop %v473
    %v475 = vmul.f32 %v464, 1.442695
    %v476 = vpow.pop %v475
    %v477 = vmul.f32 %v465, 1.442695
    %v478 = vpow.pop %v477
    %v479 = vmul.f32 %v466, 1.442695
    %v480 = vpow.pop %v479
    %v481 = vmul.f32 %v467, 1.442695
    %v482 = vpow.pop %v481
    %v483 = vmul.f32 %v468, 1.442695
    %v484 = vpow.pop %v483
    %v485 = vsel %vm436, %v470, 0.0
    %486 = vadd.xlane.f32.xlu0 %v485
    %v487 = vpop.xlane.xlu0 %486
    %v488 = vsel %vm436, %v472, 0.0
    %489 = vadd.xlane.f32.xlu0 %v488
    %v490 = vpop.xlane.xlu0 %489
    %v491 = vsel %vm436, %v474, 0.0
    %492 = vadd.xlane.f32.xlu0 %v491
    %v493 = vpop.xlane.xlu0 %492
    %v494 = vsel %vm436, %v476, 0.0
    %495 = vadd.xlane.f32.xlu0 %v494
    %v496 = vpop.xlane.xlu0 %495
    %v497 = vsel %vm436, %v478, 0.0
    %498 = vadd.xlane.f32.xlu0 %v497
    %v499 = vpop.xlane.xlu0 %498
    %v500 = vsel %vm436, %v480, 0.0
    %501 = vadd.xlane.f32.xlu0 %v500
    %v502 = vpop.xlane.xlu0 %501
    %v503 = vsel %vm436, %v482, 0.0
    %504 = vadd.xlane.f32.xlu0 %v503
    %v505 = vpop.xlane.xlu0 %504
    %v506 = vsel %vm436, %v484, 0.0
    %507 = vadd.xlane.f32.xlu0 %v506
    %v508 = vpop.xlane.xlu0 %507
    %v509 = vpack.c.bf16 %v470, %v470
    %v510 = vpack.c.bf16 %v472, %v472
    %v511 = vpack.c.bf16 %v474, %v474
    %v512 = vpack.c.bf16 %v476, %v476
    %v513 = vpack.c.bf16 %v478, %v478
    %v514 = vpack.c.bf16 %v480, %v480
    %v515 = vpack.c.bf16 %v482, %v482
    %v516 = vpack.c.bf16 %v484, %v484
    %v518 = vsel %vm436, %v509, 0
    %vm520 = vcmask 1043456
    %v522 = vsel %vm520, %v58, 0
    %524 = vmatprep.subr.bf16.mxu0 0
    %525 = vmatpush1.bf16.msra.mxu0 %v522
    %526 = vmatprep.subr.bf16.mxu0 0
    %527 = vmatpush1.bf16.msra.mxu0 0
    %528 = vmatprep.subr.bf16.mxu0 0
    %529 = vmatpush1.bf16.msra.mxu0 0
    %530 = vmatprep.subr.bf16.mxu0 0
    %531 = vmatpush1.bf16.msra.mxu0 0
    %532 = vmatprep.subr.bf16.mxu0 0
    %533 = vmatpush1.bf16.msra.mxu0 0
    %534 = vmatprep.subr.bf16.mxu0 0
    %535 = vmatpush1.bf16.msra.mxu0 0
    %536 = vmatprep.subr.bf16.mxu0 0
    %537 = vmatpush1.bf16.msra.mxu0 0
    %538 = vmatprep.subr.bf16.mxu0 0
    %539 = vmatpush1.bf16.msra.mxu0 0
    %540 = vmatprep.subr.bf16.mxu0 0
    %541 = vmatpush1.bf16.msra.mxu0 0
    %542 = vmatprep.subr.bf16.mxu0 0
    %543 = vmatpush1.bf16.msra.mxu0 0
    %544 = vmatprep.subr.bf16.mxu0 0
    %545 = vmatpush1.bf16.msra.mxu0 0
    %546 = vmatprep.subr.bf16.mxu0 0
    %547 = vmatpush1.bf16.msra.mxu0 0
    %548 = vmatprep.subr.bf16.mxu0 0
    %549 = vmatpush1.bf16.msra.mxu0 0
    %550 = vmatprep.subr.bf16.mxu0 0
    %551 = vmatpush1.bf16.msra.mxu0 0
    %552 = vmatprep.subr.bf16.mxu0 0
    %553 = vmatpush1.bf16.msra.mxu0 0
    %554 = vmatprep.subr.bf16.mxu0 0
    %555 = vmatpush1.bf16.msra.mxu0 0
    %556 = vmatprep.mubr.bf16.mxu0 0
    %557 = vmatmul.mubr.bf16.gmra.mrb[0].mxu0 %v518
    %v558 = vpop.f32.mrb[0].mxu0
    %v559 = vadd.f32 0.0, %v558
    %v560 = vpop.f32.mrb[0].mxu0
    %v561 = vpop.f32.mrb[0].mxu0
    %v562 = vpop.f32.mrb[0].mxu0
    %563 = vdwg.mxu0
    %v565 = vsel %vm436, %v510, 0
    %v568 = vsel %vm520, %v59, 0
    %570 = vmatprep.subr.bf16.mxu0 0
    %571 = vmatpush1.bf16.msra.mxu0 %v568
    %572 = vmatprep.subr.bf16.mxu0 0
    %573 = vmatpush1.bf16.msra.mxu0 0
    %574 = vmatprep.subr.bf16.mxu0 0
    %575 = vmatpush1.bf16.msra.mxu0 0
    %576 = vmatprep.subr.bf16.mxu0 0
    %577 = vmatpush1.bf16.msra.mxu0 0
    %578 = vmatprep.subr.bf16.mxu0 0
    %579 = vmatpush1.bf16.msra.mxu0 0
    %580 = vmatprep.subr.bf16.mxu0 0
    %581 = vmatpush1.bf16.msra.mxu0 0
    %582 = vmatprep.subr.bf16.mxu0 0
    %583 = vmatpush1.bf16.msra.mxu0 0
    %584 = vmatprep.subr.bf16.mxu0 0
    %585 = vmatpush1.bf16.msra.mxu0 0
    %586 = vmatprep.subr.bf16.mxu0 0
    %587 = vmatpush1.bf16.msra.mxu0 0
    %588 = vmatprep.subr.bf16.mxu0 0
    %589 = vmatpush1.bf16.msra.mxu0 0
    %590 = vmatprep.subr.bf16.mxu0 0
    %591 = vmatpush1.bf16.msra.mxu0 0
    %592 = vmatprep.subr.bf16.mxu0 0
    %593 = vmatpush1.bf16.msra.mxu0 0
    %594 = vmatprep.subr.bf16.mxu0 0
    %595 = vmatpush1.bf16.msra.mxu0 0
    %596 = vmatprep.subr.bf16.mxu0 0
    %597 = vmatpush1.bf16.msra.mxu0 0
    %598 = vmatprep.subr.bf16.mxu0 0
    %599 = vmatpush1.bf16.msra.mxu0 0
    %600 = vmatprep.subr.bf16.mxu0 0
    %601 = vmatpush1.bf16.msra.mxu0 0
    %602 = vmatprep.mubr.bf16.mxu0 0
    %603 = vmatmul.mubr.bf16.gmra.mrb[0].mxu0 %v565
    %v604 = vpop.f32.mrb[0].mxu0
    %v605 = vadd.f32 0.0, %v604
    %v606 = vpop.f32.mrb[0].mxu0
    %v607 = vpop.f32.mrb[0].mxu0
    %v608 = vpop.f32.mrb[0].mxu0
    %609 = vdwg.mxu0
    %v611 = vsel %vm436, %v511, 0
    %v614 = vsel %vm520, %v60, 0
    %616 = vmatprep.subr.bf16.mxu0 0
    %617 = vmatpush1.bf16.msra.mxu0 %v614
    %618 = vmatprep.subr.bf16.mxu0 0
    %619 = vmatpush1.bf16.msra.mxu0 0
    %620 = vmatprep.subr.bf16.mxu0 0
    %621 = vmatpush1.bf16.msra.mxu0 0
    %622 = vmatprep.subr.bf16.mxu0 0
    %623 = vmatpush1.bf16.msra.mxu0 0
    %624 = vmatprep.subr.bf16.mxu0 0
    %625 = vmatpush1.bf16.msra.mxu0 0
    %626 = vmatprep.subr.bf16.mxu0 0
    %627 = vmatpush1.bf16.msra.mxu0 0
    %628 = vmatprep.subr.bf16.mxu0 0
    %629 = vmatpush1.bf16.msra.mxu0 0
    %630 = vmatprep.subr.bf16.mxu0 0
    %631 = vmatpush1.bf16.msra.mxu0 0
    %632 = vmatprep.subr.bf16.mxu0 0
    %633 = vmatpush1.bf16.msra.mxu0 0
    %634 = vmatprep.subr.bf16.mxu0 0
    %635 = vmatpush1.bf16.msra.mxu0 0
    %636 = vmatprep.subr.bf16.mxu0 0
    %637 = vmatpush1.bf16.msra.mxu0 0
    %638 = vmatprep.subr.bf16.mxu0 0
    %639 = vmatpush1.bf16.msra.mxu0 0
    %640 = vmatprep.subr.bf16.mxu0 0
    %641 = vmatpush1.bf16.msra.mxu0 0
    %642 = vmatprep.subr.bf16.mxu0 0
    %643 = vmatpush1.bf16.msra.mxu0 0
    %644 = vmatprep.subr.bf16.mxu0 0
    %645 = vmatpush1.bf16.msra.mxu0 0
    %646 = vmatprep.subr.bf16.mxu0 0
    %647 = vmatpush1.bf16.msra.mxu0 0
    %648 = vmatprep.mubr.bf16.mxu0 0
    %649 = vmatmul.mubr.bf16.gmra.mrb[0].mxu0 %v611
    %v650 = vpop.f32.mrb[0].mxu0
    %v651 = vadd.f32 0.0, %v650
    %v652 = vpop.f32.mrb[0].mxu0
    %v653 = vpop.f32.mrb[0].mxu0
    %v654 = vpop.f32.mrb[0].mxu0
    %655 = vdwg.mxu0
    %v657 = vsel %vm436, %v512, 0
    %v660 = vsel %vm520, %v61, 0
    %662 = vmatprep.subr.bf16.mxu0 0
    %663 = vmatpush1.bf16.msra.mxu0 %v660
    %664 = vmatprep.subr.bf16.mxu0 0
    %665 = vmatpush1.bf16.msra.mxu0 0
    %666 = vmatprep.subr.bf16.mxu0 0
    %667 = vmatpush1.bf16.msra.mxu0 0
    %668 = vmatprep.subr.bf16.mxu0 0
    %669 = vmatpush1.bf16.msra.mxu0 0
    %670 = vmatprep.subr.bf16.mxu0 0
    %671 = vmatpush1.bf16.msra.mxu0 0
    %672 = vmatprep.subr.bf16.mxu0 0
    %673 = vmatpush1.bf16.msra.mxu0 0
    %674 = vmatprep.subr.bf16.mxu0 0
    %675 = vmatpush1.bf16.msra.mxu0 0
    %676 = vmatprep.subr.bf16.mxu0 0
    %677 = vmatpush1.bf16.msra.mxu0 0
    %678 = vmatprep.subr.bf16.mxu0 0
    %679 = vmatpush1.bf16.msra.mxu0 0
    %680 = vmatprep.subr.bf16.mxu0 0
    %681 = vmatpush1.bf16.msra.mxu0 0
    %682 = vmatprep.subr.bf16.mxu0 0
    %683 = vmatpush1.bf16.msra.mxu0 0
    %684 = vmatprep.subr.bf16.mxu0 0
    %685 = vmatpush1.bf16.msra.mxu0 0
    %686 = vmatprep.subr.bf16.mxu0 0
    %687 = vmatpush1.bf16.msra.mxu0 0
    %688 = vmatprep.subr.bf16.mxu0 0
    %689 = vmatpush1.bf16.msra.mxu0 0
    %690 = vmatprep.subr.bf16.mxu0 0
    %691 = vmatpush1.bf16.msra.mxu0 0
    %692 = vmatprep.subr.bf16.mxu0 0
    %693 = vmatpush1.bf16.msra.mxu0 0
    %694 = vmatprep.mubr.bf16.mxu0 0
    %695 = vmatmul.mubr.bf16.gmra.mrb[0].mxu0 %v657
    %v696 = vpop.f32.mrb[0].mxu0
    %v697 = vadd.f32 0.0, %v696
    %v698 = vpop.f32.mrb[0].mxu0
    %v699 = vpop.f32.mrb[0].mxu0
    %v700 = vpop.f32.mrb[0].mxu0
    %701 = vdwg.mxu0
    %v703 = vsel %vm436, %v513, 0
    %v706 = vsel %vm520, %v62, 0
    %708 = vmatprep.subr.bf16.mxu0 0
    %709 = vmatpush1.bf16.msra.mxu0 %v706
    %710 = vmatprep.subr.bf16.mxu0 0
    %711 = vmatpush1.bf16.msra.mxu0 0
    %712 = vmatprep.subr.bf16.mxu0 0
    %713 = vmatpush1.bf16.msra.mxu0 0
    %714 = vmatprep.subr.bf16.mxu0 0
    %715 = vmatpush1.bf16.msra.mxu0 0
    %716 = vmatprep.subr.bf16.mxu0 0
    %717 = vmatpush1.bf16.msra.mxu0 0
    %718 = vmatprep.subr.bf16.mxu0 0
    %719 = vmatpush1.bf16.msra.mxu0 0
    %720 = vmatprep.subr.bf16.mxu0 0
    %721 = vmatpush1.bf16.msra.mxu0 0
    %722 = vmatprep.subr.bf16.mxu0 0
    %723 = vmatpush1.bf16.msra.mxu0 0
    %724 = vmatprep.subr.bf16.mxu0 0
    %725 = vmatpush1.bf16.msra.mxu0 0
    %726 = vmatprep.subr.bf16.mxu0 0
    %727 = vmatpush1.bf16.msra.mxu0 0
    %728 = vmatprep.subr.bf16.mxu0 0
    %729 = vmatpush1.bf16.msra.mxu0 0
    %730 = vmatprep.subr.bf16.mxu0 0
    %731 = vmatpush1.bf16.msra.mxu0 0
    %732 = vmatprep.subr.bf16.mxu0 0
    %733 = vmatpush1.bf16.msra.mxu0 0
    %734 = vmatprep.subr.bf16.mxu0 0
    %735 = vmatpush1.bf16.msra.mxu0 0
    %736 = vmatprep.subr.bf16.mxu0 0
    %737 = vmatpush1.bf16.msra.mxu0 0
    %738 = vmatprep.subr.bf16.mxu0 0
    %739 = vmatpush1.bf16.msra.mxu0 0
    %740 = vmatprep.mubr.bf16.mxu0 0
    %741 = vmatmul.mubr.bf16.gmra.mrb[0].mxu0 %v703
    %v742 = vpop.f32.mrb[0].mxu0
    %v743 = vadd.f32 0.0, %v742
    %v744 = vpop.f32.mrb[0].mxu0
    %v745 = vpop.f32.mrb[0].mxu0
    %v746 = vpop.f32.mrb[0].mxu0
    %747 = vdwg.mxu0
    %v749 = vsel %vm436, %v514, 0
    %v752 = vsel %vm520, %v63, 0
    %754 = vmatprep.subr.bf16.mxu0 0
    %755 = vmatpush1.bf16.msra.mxu0 %v752
    %756 = vmatprep.subr.bf16.mxu0 0
    %757 = vmatpush1.bf16.msra.mxu0 0
    %758 = vmatprep.subr.bf16.mxu0 0
    %759 = vmatpush1.bf16.msra.mxu0 0
    %760 = vmatprep.subr.bf16.mxu0 0
    %761 = vmatpush1.bf16.msra.mxu0 0
    %762 = vmatprep.subr.bf16.mxu0 0
    %763 = vmatpush1.bf16.msra.mxu0 0
    %764 = vmatprep.subr.bf16.mxu0 0
    %765 = vmatpush1.bf16.msra.mxu0 0
    %766 = vmatprep.subr.bf16.mxu0 0
    %767 = vmatpush1.bf16.msra.mxu0 0
    %768 = vmatprep.subr.bf16.mxu0 0
    %769 = vmatpush1.bf16.msra.mxu0 0
    %770 = vmatprep.subr.bf16.mxu0 0
    %771 = vmatpush1.bf16.msra.mxu0 0
    %772 = vmatprep.subr.bf16.mxu0 0
    %773 = vmatpush1.bf16.msra.mxu0 0
    %774 = vmatprep.subr.bf16.mxu0 0
    %775 = vmatpush1.bf16.msra.mxu0 0
    %776 = vmatprep.subr.bf16.mxu0 0
    %777 = vmatpush1.bf16.msra.mxu0 0
    %778 = vmatprep.subr.bf16.mxu0 0
    %779 = vmatpush1.bf16.msra.mxu0 0
    %780 = vmatprep.subr.bf16.mxu0 0
    %781 = vmatpush1.bf16.msra.mxu0 0
    %782 = vmatprep.subr.bf16.mxu0 0
    %783 = vmatpush1.bf16.msra.mxu0 0
    %784 = vmatprep.subr.bf16.mxu0 0
    %785 = vmatpush1.bf16.msra.mxu0 0
    %786 = vmatprep.mubr.bf16.mxu0 0
    %787 = vmatmul.mubr.bf16.gmra.mrb[0].mxu0 %v749
    %v788 = vpop.f32.mrb[0].mxu0
    %v789 = vadd.f32 0.0, %v788
    %v790 = vpop.f32.mrb[0].mxu0
    %v791 = vpop.f32.mrb[0].mxu0
    %v792 = vpop.f32.mrb[0].mxu0
    %793 = vdwg.mxu0
    %v795 = vsel %vm436, %v515, 0
    %v798 = vsel %vm520, %v64, 0
    %800 = vmatprep.subr.bf16.mxu0 0
    %801 = vmatpush1.bf16.msra.mxu0 %v798
    %802 = vmatprep.subr.bf16.mxu0 0
    %803 = vmatpush1.bf16.msra.mxu0 0
    %804 = vmatprep.subr.bf16.mxu0 0
    %805 = vmatpush1.bf16.msra.mxu0 0
    %806 = vmatprep.subr.bf16.mxu0 0
    %807 = vmatpush1.bf16.msra.mxu0 0
    %808 = vmatprep.subr.bf16.mxu0 0
    %809 = vmatpush1.bf16.msra.mxu0 0
    %810 = vmatprep.subr.bf16.mxu0 0
    %811 = vmatpush1.bf16.msra.mxu0 0
    %812 = vmatprep.subr.bf16.mxu0 0
    %813 = vmatpush1.bf16.msra.mxu0 0
    %814 = vmatprep.subr.bf16.mxu0 0
    %815 = vmatpush1.bf16.msra.mxu0 0
    %816 = vmatprep.subr.bf16.mxu0 0
    %817 = vmatpush1.bf16.msra.mxu0 0
    %818 = vmatprep.subr.bf16.mxu0 0
    %819 = vmatpush1.bf16.msra.mxu0 0
    %820 = vmatprep.subr.bf16.mxu0 0
    %821 = vmatpush1.bf16.msra.mxu0 0
    %822 = vmatprep.subr.bf16.mxu0 0
    %823 = vmatpush1.bf16.msra.mxu0 0
    %824 = vmatprep.subr.bf16.mxu0 0
    %825 = vmatpush1.bf16.msra.mxu0 0
    %826 = vmatprep.subr.bf16.mxu0 0
    %827 = vmatpush1.bf16.msra.mxu0 0
    %828 = vmatprep.subr.bf16.mxu0 0
    %829 = vmatpush1.bf16.msra.mxu0 0
    %830 = vmatprep.subr.bf16.mxu0 0
    %831 = vmatpush1.bf16.msra.mxu0 0
    %832 = vmatprep.mubr.bf16.mxu0 0
    %833 = vmatmul.mubr.bf16.gmra.mrb[0].mxu0 %v795
    %v834 = vpop.f32.mrb[0].mxu0
    %v835 = vadd.f32 0.0, %v834
    %v836 = vpop.f32.mrb[0].mxu0
    %v837 = vpop.f32.mrb[0].mxu0
    %v838 = vpop.f32.mrb[0].mxu0
    %839 = vdwg.mxu0
    %v841 = vsel %vm436, %v516, 0
    %v844 = vsel %vm520, %v65, 0
    %846 = vmatprep.subr.bf16.mxu0 0
    %847 = vmatpush1.bf16.msra.mxu0 %v844
    %848 = vmatprep.subr.bf16.mxu0 0
    %849 = vmatpush1.bf16.msra.mxu0 0
    %850 = vmatprep.subr.bf16.mxu0 0
    %851 = vmatpush1.bf16.msra.mxu0 0
    %852 = vmatprep.subr.bf16.mxu0 0
    %853 = vmatpush1.bf16.msra.mxu0 0
    %854 = vmatprep.subr.bf16.mxu0 0
    %855 = vmatpush1.bf16.msra.mxu0 0
    %856 = vmatprep.subr.bf16.mxu0 0
    %857 = vmatpush1.bf16.msra.mxu0 0
    %858 = vmatprep.subr.bf16.mxu0 0
    %859 = vmatpush1.bf16.msra.mxu0 0
    %860 = vmatprep.subr.bf16.mxu0 0
    %861 = vmatpush1.bf16.msra.mxu0 0
    %862 = vmatprep.subr.bf16.mxu0 0
    %863 = vmatpush1.bf16.msra.mxu0 0
    %864 = vmatprep.subr.bf16.mxu0 0
    %865 = vmatpush1.bf16.msra.mxu0 0
    %866 = vmatprep.subr.bf16.mxu0 0
    %867 = vmatpush1.bf16.msra.mxu0 0
    %868 = vmatprep.subr.bf16.mxu0 0
    %869 = vmatpush1.bf16.msra.mxu0 0
    %870 = vmatprep.subr.bf16.mxu0 0
    %871 = vmatpush1.bf16.msra.mxu0 0
    %872 = vmatprep.subr.bf16.mxu0 0
    %873 = vmatpush1.bf16.msra.mxu0 0
    %874 = vmatprep.subr.bf16.mxu0 0
    %875 = vmatpush1.bf16.msra.mxu0 0
    %876 = vmatprep.subr.bf16.mxu0 0
    %877 = vmatpush1.bf16.msra.mxu0 0
    %878 = vmatprep.mubr.bf16.mxu0 0
    %879 = vmatmul.mubr.bf16.gmra.mrb[0].mxu0 %v841
    %v880 = vpop.f32.mrb[0].mxu0
    %v881 = vadd.f32 0.0, %v880
    %v882 = vpop.f32.mrb[0].mxu0
    %v883 = vpop.f32.mrb[0].mxu0
    %v884 = vpop.f32.mrb[0].mxu0
    %885 = vdwg.mxu0
    %v886 = vrcp.pop %v487
    %v887 = vrcp.pop %v490
    %v888 = vrcp.pop %v493
    %v889 = vrcp.pop %v496
    %v890 = vrcp.pop %v499
    %v891 = vrcp.pop %v502
    %v892 = vrcp.pop %v505
    %v893 = vrcp.pop %v508
    %v894 = vmul.f32 %v559, %v886
    %v895 = vmul.f32 %v605, %v887
    %v896 = vmul.f32 %v651, %v888
    %v897 = vmul.f32 %v697, %v889
    %v898 = vmul.f32 %v743, %v890
    %v899 = vmul.f32 %v789, %v891
    %v900 = vmul.f32 %v835, %v892
    %v901 = vmul.f32 %v881, %v893
    %v902 = vpack.c.bf16 %v894, %v894
    %v903 = vpack.c.bf16 %v895, %v895
    %v904 = vpack.c.bf16 %v896, %v896
    %v905 = vpack.c.bf16 %v897, %v897
    %v906 = vpack.c.bf16 %v898, %v898
    %v907 = vpack.c.bf16 %v899, %v899
    %v908 = vpack.c.bf16 %v900, %v900
    %v909 = vpack.c.bf16 %v901, %v901
    %v910 = vld [vmem:[%s2] sm:$0xf]
    %v911 = vld [vmem:[%s2 + $0x4] sm:$0xf]
    %v912 = vld [vmem:[%s2 + $0x8] sm:$0xf]
    %v913 = vld [vmem:[%s2 + $0xc] sm:$0xf]
    %v914 = vld [vmem:[#allocation5] sm:$0xf]
    %v915 = vld [vmem:[#allocation5 + $0x4] sm:$0xf]
    %v916 = vld [vmem:[#allocation5 + $0x8] sm:$0xf]
    %v917 = vld [vmem:[#allocation5 + $0xc] sm:$0xf]
    %v926 = vunpack.c.l.b16 %v902
    %v927 = vunpack.c.l.b16 %v903
    %v928 = vunpack.c.l.b16 %v904
    %v929 = vunpack.c.l.b16 %v905
    %v930 = vunpack.c.l.b16 %v906
    %v931 = vunpack.c.l.b16 %v907
    %v932 = vunpack.c.l.b16 %v908
    %v933 = vunpack.c.l.b16 %v909
    %v934 = vrot.slane %v927, 7
    %vm935 = vcmask 1041409
    %v936 = vsel %vm935, %v934, %v926
    %v937 = vrot.slane %v928, 6
    %vm938 = vcmask 1042434
    %v939 = vsel %vm938, %v937, %v936
    %v940 = vrot.slane %v929, 5
    %vm941 = vcmask 1043459
    %v942 = vsel %vm941, %v940, %v939
    %v943 = vrot.slane %v930, 4
    %vm944 = vcmask 1044484
    %v945 = vsel %vm944, %v943, %v942
    %v946 = vrot.slane %v931, 3
    %vm947 = vcmask 1045509
    %v948 = vsel %vm947, %v946, %v945
    %v949 = vrot.slane %v932, 2
    %vm950 = vcmask 1046534
    %v951 = vsel %vm950, %v949, %v948
    %v952 = vrot.slane %v933, 1
    %vm953 = vcmask 1047559
    %v954 = vsel %vm953, %v952, %v951
    %v955 = vpack.c.b16 %v954, %v954
    %v960 = vunpack.c.l.b16 %v910
    %v961 = vunpack.c.l.b16 %v911
    %v962 = vunpack.c.l.b16 %v912
    %v963 = vunpack.c.l.b16 %v913
    %v964 = vpack.c.b16 %v961, %v960
    %v965 = vpack.c.b16 %v963, %v962
    %v969 = vsel %vm102, %v955, 0
    %971 = vmatprep.subr.bf16.mxu0 0
    %972 = vmatpush1.bf16.msra.mxu0 %v964
    %973 = vmatprep.subr.bf16.mxu0 0
    %974 = vmatpush1.bf16.msra.mxu0 %v965
    %975 = vmatprep.subr.bf16.mxu0 0
    %976 = vmatpush1.bf16.msra.mxu0 0
    %977 = vmatprep.subr.bf16.mxu0 0
    %978 = vmatpush1.bf16.msra.mxu0 0
    %979 = vmatprep.subr.bf16.mxu0 0
    %980 = vmatpush1.bf16.msra.mxu0 0
    %981 = vmatprep.subr.bf16.mxu0 0
    %982 = vmatpush1.bf16.msra.mxu0 0
    %983 = vmatprep.subr.bf16.mxu0 0
    %984 = vmatpush1.bf16.msra.mxu0 0
    %985 = vmatprep.subr.bf16.mxu0 0
    %986 = vmatpush1.bf16.msra.mxu0 0
    %987 = vmatprep.subr.bf16.mxu0 0
    %988 = vmatpush1.bf16.msra.mxu0 0
    %989 = vmatprep.subr.bf16.mxu0 0
    %990 = vmatpush1.bf16.msra.mxu0 0
    %991 = vmatprep.subr.bf16.mxu0 0
    %992 = vmatpush1.bf16.msra.mxu0 0
    %993 = vmatprep.subr.bf16.mxu0 0
    %994 = vmatpush1.bf16.msra.mxu0 0
    %995 = vmatprep.subr.bf16.mxu0 0
    %996 = vmatpush1.bf16.msra.mxu0 0
    %997 = vmatprep.subr.bf16.mxu0 0
    %998 = vmatpush1.bf16.msra.mxu0 0
    %999 = vmatprep.subr.bf16.mxu0 0
    %1000 = vmatpush1.bf16.msra.mxu0 0
    %1001 = vmatprep.subr.bf16.mxu0 0
    %1002 = vmatpush1.bf16.msra.mxu0 0
    %1003 = vmatprep.mubr.bf16.mxu0 0
    %1004 = vmatmul.mubr.bf16.gmra.mrb[0].mxu0 %v969
    %v1005 = vpop.f32.mrb[0].mxu0
    %v1006 = vadd.f32 0.0, %v1005
    %v1007 = vpop.f32.mrb[0].mxu0
    %v1008 = vpop.f32.mrb[0].mxu0
    %v1009 = vpop.f32.mrb[0].mxu0
    %1010 = vdwg.mxu0
    %v1011 = vpack.c.bf16 %v1006, %v1006
    %v1012 = vrot.slane %v926, 1
    %v1013 = vsel %vm935, %v927, %v1012
    %v1014 = vrot.slane %v928, 7
    %v1015 = vsel %vm938, %v1014, %v1013
    %v1016 = vrot.slane %v929, 6
    %v1017 = vsel %vm941, %v1016, %v1015
    %v1018 = vrot.slane %v930, 5
    %v1019 = vsel %vm944, %v1018, %v1017
    %v1020 = vrot.slane %v931, 4
    %v1021 = vsel %vm947, %v1020, %v1019
    %v1022 = vrot.slane %v932, 3
    %v1023 = vsel %vm950, %v1022, %v1021
    %v1024 = vrot.slane %v933, 2
    %v1025 = vsel %vm953, %v1024, %v1023
    %v1026 = vpack.c.b16 %v1025, %v1025
    %1027 = vrot.lane.b32.xlu0 %v964, 124
    %v1028 = vpop.permute.xlu0 %1027
    %1029 = vrot.lane.b32.xlu0 %v965, 124
    %v1030 = vpop.permute.xlu0 %1029
    %v1034 = vsel %vm102, %v1026, 0
    %1036 = vmatprep.subr.bf16.mxu0 0
    %1037 = vmatpush1.bf16.msra.mxu0 %v1028
    %1038 = vmatprep.subr.bf16.mxu0 0
    %1039 = vmatpush1.bf16.msra.mxu0 %v1030
    %1040 = vmatprep.subr.bf16.mxu0 0
    %1041 = vmatpush1.bf16.msra.mxu0 0
    %1042 = vmatprep.subr.bf16.mxu0 0
    %1043 = vmatpush1.bf16.msra.mxu0 0
    %1044 = vmatprep.subr.bf16.mxu0 0
    %1045 = vmatpush1.bf16.msra.mxu0 0
    %1046 = vmatprep.subr.bf16.mxu0 0
    %1047 = vmatpush1.bf16.msra.mxu0 0
    %1048 = vmatprep.subr.bf16.mxu0 0
    %1049 = vmatpush1.bf16.msra.mxu0 0
    %1050 = vmatprep.subr.bf16.mxu0 0
    %1051 = vmatpush1.bf16.msra.mxu0 0
    %1052 = vmatprep.subr.bf16.mxu0 0
    %1053 = vmatpush1.bf16.msra.mxu0 0
    %1054 = vmatprep.subr.bf16.mxu0 0
    %1055 = vmatpush1.bf16.msra.mxu0 0
    %1056 = vmatprep.subr.bf16.mxu0 0
    %1057 = vmatpush1.bf16.msra.mxu0 0
    %1058 = vmatprep.subr.bf16.mxu0 0
    %1059 = vmatpush1.bf16.msra.mxu0 0
    %1060 = vmatprep.subr.bf16.mxu0 0
    %1061 = vmatpush1.bf16.msra.mxu0 0
    %1062 = vmatprep.subr.bf16.mxu0 0
    %1063 = vmatpush1.bf16.msra.mxu0 0
    %1064 = vmatprep.subr.bf16.mxu0 0
    %1065 = vmatpush1.bf16.msra.mxu0 0
    %1066 = vmatprep.subr.bf16.mxu0 0
    %1067 = vmatpush1.bf16.msra.mxu0 0
    %1068 = vmatprep.mubr.bf16.mxu0 0
    %1069 = vmatmul.mubr.bf16.gmra.mrb[0].mxu0 %v1034
    %v1070 = vpop.f32.mrb[0].mxu0
    %v1071 = vadd.f32 0.0, %v1070
    %v1072 = vpop.f32.mrb[0].mxu0
    %v1073 = vpop.f32.mrb[0].mxu0
    %v1074 = vpop.f32.mrb[0].mxu0
    %1075 = vdwg.mxu0
    %v1076 = vpack.c.bf16 %v1071, %v1071
    %v1078 = vunpack.c.l.b16 %v914
    %v1079 = vpack.c.b16 %v1078, %v1078
    %v1080 = vrot.slane %v1079, 2
    %vm1081 = vcmask 31744
    %v1083 = vsel %vm1081, %v1076, 0
    %vm1085 = vcmask 1041408
    %v1087 = vsel %vm1085, %v1080, 0
    %1089 = vmatprep.subr.bf16.mxu0 0
    %1090 = vmatpush1.bf16.msra.mxu0 %v1087
    %1091 = vmatprep.subr.bf16.mxu0 0
    %1092 = vmatpush1.bf16.msra.mxu0 0
    %1093 = vmatprep.subr.bf16.mxu0 0
    %1094 = vmatpush1.bf16.msra.mxu0 0
    %1095 = vmatprep.subr.bf16.mxu0 0
    %1096 = vmatpush1.bf16.msra.mxu0 0
    %1097 = vmatprep.subr.bf16.mxu0 0
    %1098 = vmatpush1.bf16.msra.mxu0 0
    %1099 = vmatprep.subr.bf16.mxu0 0
    %1100 = vmatpush1.bf16.msra.mxu0 0
    %1101 = vmatprep.subr.bf16.mxu0 0
    %1102 = vmatpush1.bf16.msra.mxu0 0
    %1103 = vmatprep.subr.bf16.mxu0 0
    %1104 = vmatpush1.bf16.msra.mxu0 0
    %1105 = vmatprep.subr.bf16.mxu0 0
    %1106 = vmatpush1.bf16.msra.mxu0 0
    %1107 = vmatprep.subr.bf16.mxu0 0
    %1108 = vmatpush1.bf16.msra.mxu0 0
    %1109 = vmatprep.subr.bf16.mxu0 0
    %1110 = vmatpush1.bf16.msra.mxu0 0
    %1111 = vmatprep.subr.bf16.mxu0 0
    %1112 = vmatpush1.bf16.msra.mxu0 0
    %1113 = vmatprep.subr.bf16.mxu0 0
    %1114 = vmatpush1.bf16.msra.mxu0 0
    %1115 = vmatprep.subr.bf16.mxu0 0
    %1116 = vmatpush1.bf16.msra.mxu0 0
    %1117 = vmatprep.subr.bf16.mxu0 0
    %1118 = vmatpush1.bf16.msra.mxu0 0
    %1119 = vmatprep.subr.bf16.mxu0 0
    %1120 = vmatpush1.bf16.msra.mxu0 0
    %1121 = vmatprep.mubr.bf16.mxu0 0
    %1122 = vmatmul.mubr.bf16.gmra.mrb[0].mxu0 %v1083
    %v1123 = vpop.f32.mrb[0].mxu0
    %v1124 = vadd.f32 0.0, %v1123
    %v1125 = vpop.f32.mrb[0].mxu0
    %v1126 = vpop.f32.mrb[0].mxu0
    %v1127 = vpop.f32.mrb[0].mxu0
    %1128 = vdwg.mxu0
    %v1130 = vsel %vm1081, %v1011, 0
    %v1133 = vsel %vm1085, %v914, 0
    %1135 = vmatprep.subr.bf16.mxu0 0
    %1136 = vmatpush1.bf16.msra.mxu0 %v1133
    %1137 = vmatprep.subr.bf16.mxu0 0
    %1138 = vmatpush1.bf16.msra.mxu0 0
    %1139 = vmatprep.subr.bf16.mxu0 0
    %1140 = vmatpush1.bf16.msra.mxu0 0
    %1141 = vmatprep.subr.bf16.mxu0 0
    %1142 = vmatpush1.bf16.msra.mxu0 0
    %1143 = vmatprep.subr.bf16.mxu0 0
    %1144 = vmatpush1.bf16.msra.mxu0 0
    %1145 = vmatprep.subr.bf16.mxu0 0
    %1146 = vmatpush1.bf16.msra.mxu0 0
    %1147 = vmatprep.subr.bf16.mxu0 0
    %1148 = vmatpush1.bf16.msra.mxu0 0
    %1149 = vmatprep.subr.bf16.mxu0 0
    %1150 = vmatpush1.bf16.msra.mxu0 0
    %1151 = vmatprep.subr.bf16.mxu0 0
    %1152 = vmatpush1.bf16.msra.mxu0 0
    %1153 = vmatprep.subr.bf16.mxu0 0
    %1154 = vmatpush1.bf16.msra.mxu0 0
    %1155 = vmatprep.subr.bf16.mxu0 0
    %1156 = vmatpush1.bf16.msra.mxu0 0
    %1157 = vmatprep.subr.bf16.mxu0 0
    %1158 = vmatpush1.bf16.msra.mxu0 0
    %1159 = vmatprep.subr.bf16.mxu0 0
    %1160 = vmatpush1.bf16.msra.mxu0 0
    %1161 = vmatprep.subr.bf16.mxu0 0
    %1162 = vmatpush1.bf16.msra.mxu0 0
    %1163 = vmatprep.subr.bf16.mxu0 0
    %1164 = vmatpush1.bf16.msra.mxu0 0
    %1165 = vmatprep.subr.bf16.mxu0 0
    %1166 = vmatpush1.bf16.msra.mxu0 0
    %1167 = vmatprep.mubr.bf16.mxu0 0
    %1168 = vmatmul.mubr.bf16.gmra.mrb[0].mxu0 %v1130
    %v1169 = vpop.f32.mrb[0].mxu0
    %v1170 = vadd.f32 %v1124, %v1169
    %v1171 = vpop.f32.mrb[0].mxu0
    %v1172 = vpop.f32.mrb[0].mxu0
    %v1173 = vpop.f32.mrb[0].mxu0
    %1174 = vdwg.mxu0
    %v1175 = vrot.slane %v926, 2
    %v1176 = vrot.slane %v927, 1
    %v1177 = vsel %vm935, %v1176, %v1175
    %v1178 = vsel %vm938, %v928, %v1177
    %v1179 = vrot.slane %v929, 7
    %v1180 = vsel %vm941, %v1179, %v1178
    %v1181 = vrot.slane %v930, 6
    %v1182 = vsel %vm944, %v1181, %v1180
    %v1183 = vrot.slane %v931, 5
    %v1184 = vsel %vm947, %v1183, %v1182
    %v1185 = vrot.slane %v932, 4
    %v1186 = vsel %vm950, %v1185, %v1184
    %v1187 = vrot.slane %v933, 3
    %v1188 = vsel %vm953, %v1187, %v1186
    %v1189 = vpack.c.b16 %v1188, %v1188
    %1190 = vrot.lane.b32.xlu0 %v964, 120
    %v1191 = vpop.permute.xlu0 %1190
    %1192 = vrot.lane.b32.xlu0 %v965, 120
    %v1193 = vpop.permute.xlu0 %1192
    %v1197 = vsel %vm102, %v1189, 0
    %1199 = vmatprep.subr.bf16.mxu0 0
    %1200 = vmatpush1.bf16.msra.mxu0 %v1191
    %1201 = vmatprep.subr.bf16.mxu0 0
    %1202 = vmatpush1.bf16.msra.mxu0 %v1193
    %1203 = vmatprep.subr.bf16.mxu0 0
    %1204 = vmatpush1.bf16.msra.mxu0 0
    %1205 = vmatprep.subr.bf16.mxu0 0
    %1206 = vmatpush1.bf16.msra.mxu0 0
    %1207 = vmatprep.subr.bf16.mxu0 0
    %1208 = vmatpush1.bf16.msra.mxu0 0
    %1209 = vmatprep.subr.bf16.mxu0 0
    %1210 = vmatpush1.bf16.msra.mxu0 0
    %1211 = vmatprep.subr.bf16.mxu0 0
    %1212 = vmatpush1.bf16.msra.mxu0 0
    %1213 = vmatprep.subr.bf16.mxu0 0
    %1214 = vmatpush1.bf16.msra.mxu0 0
    %1215 = vmatprep.subr.bf16.mxu0 0
    %1216 = vmatpush1.bf16.msra.mxu0 0
    %1217 = vmatprep.subr.bf16.mxu0 0
    %1218 = vmatpush1.bf16.msra.mxu0 0
    %1219 = vmatprep.subr.bf16.mxu0 0
    %1220 = vmatpush1.bf16.msra.mxu0 0
    %1221 = vmatprep.subr.bf16.mxu0 0
    %1222 = vmatpush1.bf16.msra.mxu0 0
    %1223 = vmatprep.subr.bf16.mxu0 0
    %1224 = vmatpush1.bf16.msra.mxu0 0
    %1225 = vmatprep.subr.bf16.mxu0 0
    %1226 = vmatpush1.bf16.msra.mxu0 0
    %1227 = vmatprep.subr.bf16.mxu0 0
    %1228 = vmatpush1.bf16.msra.mxu0 0
    %1229 = vmatprep.subr.bf16.mxu0 0
    %1230 = vmatpush1.bf16.msra.mxu0 0
    %1231 = vmatprep.mubr.bf16.mxu0 0
    %1232 = vmatmul.mubr.bf16.gmra.mrb[0].mxu0 %v1197
    %v1233 = vpop.f32.mrb[0].mxu0
    %v1234 = vadd.f32 0.0, %v1233
    %v1235 = vpop.f32.mrb[0].mxu0
    %v1236 = vpop.f32.mrb[0].mxu0
    %v1237 = vpop.f32.mrb[0].mxu0
    %1238 = vdwg.mxu0
    %v1239 = vpack.c.bf16 %v1234, %v1234
    %v1241 = vsel %vm1081, %v1239, 0
    %v1244 = vsel %vm1085, %v915, 0
    %1246 = vmatprep.subr.bf16.mxu0 0
    %1247 = vmatpush1.bf16.msra.mxu0 %v1244
    %1248 = vmatprep.subr.bf16.mxu0 0
    %1249 = vmatpush1.bf16.msra.mxu0 0
    %1250 = vmatprep.subr.bf16.mxu0 0
    %1251 = vmatpush1.bf16.msra.mxu0 0
    %1252 = vmatprep.subr.bf16.mxu0 0
    %1253 = vmatpush1.bf16.msra.mxu0 0
    %1254 = vmatprep.subr.bf16.mxu0 0
    %1255 = vmatpush1.bf16.msra.mxu0 0
    %1256 = vmatprep.subr.bf16.mxu0 0
    %1257 = vmatpush1.bf16.msra.mxu0 0
    %1258 = vmatprep.subr.bf16.mxu0 0
    %1259 = vmatpush1.bf16.msra.mxu0 0
    %1260 = vmatprep.subr.bf16.mxu0 0
    %1261 = vmatpush1.bf16.msra.mxu0 0
    %1262 = vmatprep.subr.bf16.mxu0 0
    %1263 = vmatpush1.bf16.msra.mxu0 0
    %1264 = vmatprep.subr.bf16.mxu0 0
    %1265 = vmatpush1.bf16.msra.mxu0 0
    %1266 = vmatprep.subr.bf16.mxu0 0
    %1267 = vmatpush1.bf16.msra.mxu0 0
    %1268 = vmatprep.subr.bf16.mxu0 0
    %1269 = vmatpush1.bf16.msra.mxu0 0
    %1270 = vmatprep.subr.bf16.mxu0 0
    %1271 = vmatpush1.bf16.msra.mxu0 0
    %1272 = vmatprep.subr.bf16.mxu0 0
    %1273 = vmatpush1.bf16.msra.mxu0 0
    %1274 = vmatprep.subr.bf16.mxu0 0
    %1275 = vmatpush1.bf16.msra.mxu0 0
    %1276 = vmatprep.subr.bf16.mxu0 0
    %1277 = vmatpush1.bf16.msra.mxu0 0
    %1278 = vmatprep.mubr.bf16.mxu0 0
    %1279 = vmatmul.mubr.bf16.gmra.mrb[0].mxu0 %v1241
    %v1280 = vpop.f32.mrb[0].mxu0
    %v1281 = vadd.f32 0.0, %v1280
    %v1282 = vpop.f32.mrb[0].mxu0
    %v1283 = vpop.f32.mrb[0].mxu0
    %v1284 = vpop.f32.mrb[0].mxu0
    %1285 = vdwg.mxu0
    %v1286 = vadd.f32 %v1170, %v1281
    %v1287 = vrot.slane %v926, 3
    %v1288 = vrot.slane %v927, 2
    %v1289 = vsel %vm935, %v1288, %v1287
    %v1290 = vrot.slane %v928, 1
    %v1291 = vsel %vm938, %v1290, %v1289
    %v1292 = vsel %vm941, %v929, %v1291
    %v1293 = vrot.slane %v930, 7
    %v1294 = vsel %vm944, %v1293, %v1292
    %v1295 = vrot.slane %v931, 6
    %v1296 = vsel %vm947, %v1295, %v1294
    %v1297 = vrot.slane %v932, 5
    %v1298 = vsel %vm950, %v1297, %v1296
    %v1299 = vrot.slane %v933, 4
    %v1300 = vsel %vm953, %v1299, %v1298
    %v1301 = vpack.c.b16 %v1300, %v1300
    %1302 = vrot.lane.b32.xlu0 %v964, 116
    %v1303 = vpop.permute.xlu0 %1302
    %1304 = vrot.lane.b32.xlu0 %v965, 116
    %v1305 = vpop.permute.xlu0 %1304
    %v1309 = vsel %vm102, %v1301, 0
    %1311 = vmatprep.subr.bf16.mxu0 0
    %1312 = vmatpush1.bf16.msra.mxu0 %v1303
    %1313 = vmatprep.subr.bf16.mxu0 0
    %1314 = vmatpush1.bf16.msra.mxu0 %v1305
    %1315 = vmatprep.subr.bf16.mxu0 0
    %1316 = vmatpush1.bf16.msra.mxu0 0
    %1317 = vmatprep.subr.bf16.mxu0 0
    %1318 = vmatpush1.bf16.msra.mxu0 0
    %1319 = vmatprep.subr.bf16.mxu0 0
    %1320 = vmatpush1.bf16.msra.mxu0 0
    %1321 = vmatprep.subr.bf16.mxu0 0
    %1322 = vmatpush1.bf16.msra.mxu0 0
    %1323 = vmatprep.subr.bf16.mxu0 0
    %1324 = vmatpush1.bf16.msra.mxu0 0
    %1325 = vmatprep.subr.bf16.mxu0 0
    %1326 = vmatpush1.bf16.msra.mxu0 0
    %1327 = vmatprep.subr.bf16.mxu0 0
    %1328 = vmatpush1.bf16.msra.mxu0 0
    %1329 = vmatprep.subr.bf16.mxu0 0
    %1330 = vmatpush1.bf16.msra.mxu0 0
    %1331 = vmatprep.subr.bf16.mxu0 0
    %1332 = vmatpush1.bf16.msra.mxu0 0
    %1333 = vmatprep.subr.bf16.mxu0 0
    %1334 = vmatpush1.bf16.msra.mxu0 0
    %1335 = vmatprep.subr.bf16.mxu0 0
    %1336 = vmatpush1.bf16.msra.mxu0 0
    %1337 = vmatprep.subr.bf16.mxu0 0
    %1338 = vmatpush1.bf16.msra.mxu0 0
    %1339 = vmatprep.subr.bf16.mxu0 0
    %1340 = vmatpush1.bf16.msra.mxu0 0
    %1341 = vmatprep.subr.bf16.mxu0 0
    %1342 = vmatpush1.bf16.msra.mxu0 0
    %1343 = vmatprep.mubr.bf16.mxu0 0
    %1344 = vmatmul.mubr.bf16.gmra.mrb[0].mxu0 %v1309
    %v1345 = vpop.f32.mrb[0].mxu0
    %v1346 = vadd.f32 0.0, %v1345
    %v1347 = vpop.f32.mrb[0].mxu0
    %v1348 = vpop.f32.mrb[0].mxu0
    %v1349 = vpop.f32.mrb[0].mxu0
    %1350 = vdwg.mxu0
    %v1351 = vpack.c.bf16 %v1346, %v1346
    %v1353 = vunpack.c.l.b16 %v915
    %v1354 = vpack.c.b16 %v1353, %v1353
    %v1355 = vrot.slane %v1354, 2
    %v1357 = vsel %vm1081, %v1351, 0
    %v1360 = vsel %vm1085, %v1355, 0
    %1362 = vmatprep.subr.bf16.mxu0 0
    %1363 = vmatpush1.bf16.msra.mxu0 %v1360
    %1364 = vmatprep.subr.bf16.mxu0 0
    %1365 = vmatpush1.bf16.msra.mxu0 0
    %1366 = vmatprep.subr.bf16.mxu0 0
    %1367 = vmatpush1.bf16.msra.mxu0 0
    %1368 = vmatprep.subr.bf16.mxu0 0
    %1369 = vmatpush1.bf16.msra.mxu0 0
    %1370 = vmatprep.subr.bf16.mxu0 0
    %1371 = vmatpush1.bf16.msra.mxu0 0
    %1372 = vmatprep.subr.bf16.mxu0 0
    %1373 = vmatpush1.bf16.msra.mxu0 0
    %1374 = vmatprep.subr.bf16.mxu0 0
    %1375 = vmatpush1.bf16.msra.mxu0 0
    %1376 = vmatprep.subr.bf16.mxu0 0
    %1377 = vmatpush1.bf16.msra.mxu0 0
    %1378 = vmatprep.subr.bf16.mxu0 0
    %1379 = vmatpush1.bf16.msra.mxu0 0
    %1380 = vmatprep.subr.bf16.mxu0 0
    %1381 = vmatpush1.bf16.msra.mxu0 0
    %1382 = vmatprep.subr.bf16.mxu0 0
    %1383 = vmatpush1.bf16.msra.mxu0 0
    %1384 = vmatprep.subr.bf16.mxu0 0
    %1385 = vmatpush1.bf16.msra.mxu0 0
    %1386 = vmatprep.subr.bf16.mxu0 0
    %1387 = vmatpush1.bf16.msra.mxu0 0
    %1388 = vmatprep.subr.bf16.mxu0 0
    %1389 = vmatpush1.bf16.msra.mxu0 0
    %1390 = vmatprep.subr.bf16.mxu0 0
    %1391 = vmatpush1.bf16.msra.mxu0 0
    %1392 = vmatprep.subr.bf16.mxu0 0
    %1393 = vmatpush1.bf16.msra.mxu0 0
    %1394 = vmatprep.mubr.bf16.mxu0 0
    %1395 = vmatmul.mubr.bf16.gmra.mrb[0].mxu0 %v1357
    %v1396 = vpop.f32.mrb[0].mxu0
    %v1397 = vadd.f32 0.0, %v1396
    %v1398 = vpop.f32.mrb[0].mxu0
    %v1399 = vpop.f32.mrb[0].mxu0
    %v1400 = vpop.f32.mrb[0].mxu0
    %1401 = vdwg.mxu0
    %v1402 = vadd.f32 %v1286, %v1397
    %v1403 = vrot.slane %v926, 4
    %v1404 = vrot.slane %v927, 3
    %v1405 = vsel %vm935, %v1404, %v1403
    %v1406 = vrot.slane %v928, 2
    %v1407 = vsel %vm938, %v1406, %v1405
    %v1408 = vrot.slane %v929, 1
    %v1409 = vsel %vm941, %v1408, %v1407
    %v1410 = vsel %vm944, %v930, %v1409
    %v1411 = vrot.slane %v931, 7
    %v1412 = vsel %vm947, %v1411, %v1410
    %v1413 = vrot.slane %v932, 6
    %v1414 = vsel %vm950, %v1413, %v1412
    %v1415 = vrot.slane %v933, 5
    %v1416 = vsel %vm953, %v1415, %v1414
    %v1417 = vpack.c.b16 %v1416, %v1416
    %1418 = vrot.lane.b32.xlu0 %v964, 112
    %v1419 = vpop.permute.xlu0 %1418
    %1420 = vrot.lane.b32.xlu0 %v965, 112
    %v1421 = vpop.permute.xlu0 %1420
    %v1425 = vsel %vm102, %v1417, 0
    %1427 = vmatprep.subr.bf16.mxu0 0
    %1428 = vmatpush1.bf16.msra.mxu0 %v1419
    %1429 = vmatprep.subr.bf16.mxu0 0
    %1430 = vmatpush1.bf16.msra.mxu0 %v1421
    %1431 = vmatprep.subr.bf16.mxu0 0
    %1432 = vmatpush1.bf16.msra.mxu0 0
    %1433 = vmatprep.subr.bf16.mxu0 0
    %1434 = vmatpush1.bf16.msra.mxu0 0
    %1435 = vmatprep.subr.bf16.mxu0 0
    %1436 = vmatpush1.bf16.msra.mxu0 0
    %1437 = vmatprep.subr.bf16.mxu0 0
    %1438 = vmatpush1.bf16.msra.mxu0 0
    %1439 = vmatprep.subr.bf16.mxu0 0
    %1440 = vmatpush1.bf16.msra.mxu0 0
    %1441 = vmatprep.subr.bf16.mxu0 0
    %1442 = vmatpush1.bf16.msra.mxu0 0
    %1443 = vmatprep.subr.bf16.mxu0 0
    %1444 = vmatpush1.bf16.msra.mxu0 0
    %1445 = vmatprep.subr.bf16.mxu0 0
    %1446 = vmatpush1.bf16.msra.mxu0 0
    %1447 = vmatprep.subr.bf16.mxu0 0
    %1448 = vmatpush1.bf16.msra.mxu0 0
    %1449 = vmatprep.subr.bf16.mxu0 0
    %1450 = vmatpush1.bf16.msra.mxu0 0
    %1451 = vmatprep.subr.bf16.mxu0 0
    %1452 = vmatpush1.bf16.msra.mxu0 0
    %1453 = vmatprep.subr.bf16.mxu0 0
    %1454 = vmatpush1.bf16.msra.mxu0 0
    %1455 = vmatprep.subr.bf16.mxu0 0
    %1456 = vmatpush1.bf16.msra.mxu0 0
    %1457 = vmatprep.subr.bf16.mxu0 0
    %1458 = vmatpush1.bf16.msra.mxu0 0
    %1459 = vmatprep.mubr.bf16.mxu0 0
    %1460 = vmatmul.mubr.bf16.gmra.mrb[0].mxu0 %v1425
    %v1461 = vpop.f32.mrb[0].mxu0
    %v1462 = vadd.f32 0.0, %v1461
    %v1463 = vpop.f32.mrb[0].mxu0
    %v1464 = vpop.f32.mrb[0].mxu0
    %v1465 = vpop.f32.mrb[0].mxu0
    %1466 = vdwg.mxu0
    %v1467 = vpack.c.bf16 %v1462, %v1462
    %v1469 = vsel %vm1081, %v1467, 0
    %v1472 = vsel %vm1085, %v916, 0
    %1474 = vmatprep.subr.bf16.mxu0 0
    %1475 = vmatpush1.bf16.msra.mxu0 %v1472
    %1476 = vmatprep.subr.bf16.mxu0 0
    %1477 = vmatpush1.bf16.msra.mxu0 0
    %1478 = vmatprep.subr.bf16.mxu0 0
    %1479 = vmatpush1.bf16.msra.mxu0 0
    %1480 = vmatprep.subr.bf16.mxu0 0
    %1481 = vmatpush1.bf16.msra.mxu0 0
    %1482 = vmatprep.subr.bf16.mxu0 0
    %1483 = vmatpush1.bf16.msra.mxu0 0
    %1484 = vmatprep.subr.bf16.mxu0 0
    %1485 = vmatpush1.bf16.msra.mxu0 0
    %1486 = vmatprep.subr.bf16.mxu0 0
    %1487 = vmatpush1.bf16.msra.mxu0 0
    %1488 = vmatprep.subr.bf16.mxu0 0
    %1489 = vmatpush1.bf16.msra.mxu0 0
    %1490 = vmatprep.subr.bf16.mxu0 0
    %1491 = vmatpush1.bf16.msra.mxu0 0
    %1492 = vmatprep.subr.bf16.mxu0 0
    %1493 = vmatpush1.bf16.msra.mxu0 0
    %1494 = vmatprep.subr.bf16.mxu0 0
    %1495 = vmatpush1.bf16.msra.mxu0 0
    %1496 = vmatprep.subr.bf16.mxu0 0
    %1497 = vmatpush1.bf16.msra.mxu0 0
    %1498 = vmatprep.subr.bf16.mxu0 0
    %1499 = vmatpush1.bf16.msra.mxu0 0
    %1500 = vmatprep.subr.bf16.mxu0 0
    %1501 = vmatpush1.bf16.msra.mxu0 0
    %1502 = vmatprep.subr.bf16.mxu0 0
    %1503 = vmatpush1.bf16.msra.mxu0 0
    %1504 = vmatprep.subr.bf16.mxu0 0
    %1505 = vmatpush1.bf16.msra.mxu0 0
    %1506 = vmatprep.mubr.bf16.mxu0 0
    %1507 = vmatmul.mubr.bf16.gmra.mrb[0].mxu0 %v1469
    %v1508 = vpop.f32.mrb[0].mxu0
    %v1509 = vadd.f32 0.0, %v1508
    %v1510 = vpop.f32.mrb[0].mxu0
    %v1511 = vpop.f32.mrb[0].mxu0
    %v1512 = vpop.f32.mrb[0].mxu0
    %1513 = vdwg.mxu0
    %v1514 = vadd.f32 %v1402, %v1509
    %v1515 = vrot.slane %v926, 5
    %v1516 = vrot.slane %v927, 4
    %v1517 = vsel %vm935, %v1516, %v1515
    %v1518 = vrot.slane %v928, 3
    %v1519 = vsel %vm938, %v1518, %v1517
    %v1520 = vrot.slane %v929, 2
    %v1521 = vsel %vm941, %v1520, %v1519
    %v1522 = vrot.slane %v930, 1
    %v1523 = vsel %vm944, %v1522, %v1521
    %v1524 = vsel %vm947, %v931, %v1523
    %v1525 = vrot.slane %v932, 7
    %v1526 = vsel %vm950, %v1525, %v1524
    %v1527 = vrot.slane %v933, 6
    %v1528 = vsel %vm953, %v1527, %v1526
    %v1529 = vpack.c.b16 %v1528, %v1528
    %1530 = vrot.lane.b32.xlu0 %v964, 108
    %v1531 = vpop.permute.xlu0 %1530
    %1532 = vrot.lane.b32.xlu0 %v965, 108
    %v1533 = vpop.permute.xlu0 %1532
    %v1537 = vsel %vm102, %v1529, 0
    %1539 = vmatprep.subr.bf16.mxu0 0
    %1540 = vmatpush1.bf16.msra.mxu0 %v1531
    %1541 = vmatprep.subr.bf16.mxu0 0
    %1542 = vmatpush1.bf16.msra.mxu0 %v1533
    %1543 = vmatprep.subr.bf16.mxu0 0
    %1544 = vmatpush1.bf16.msra.mxu0 0
    %1545 = vmatprep.subr.bf16.mxu0 0
    %1546 = vmatpush1.bf16.msra.mxu0 0
    %1547 = vmatprep.subr.bf16.mxu0 0
    %1548 = vmatpush1.bf16.msra.mxu0 0
    %1549 = vmatprep.subr.bf16.mxu0 0
    %1550 = vmatpush1.bf16.msra.mxu0 0
    %1551 = vmatprep.subr.bf16.mxu0 0
    %1552 = vmatpush1.bf16.msra.mxu0 0
    %1553 = vmatprep.subr.bf16.mxu0 0
    %1554 = vmatpush1.bf16.msra.mxu0 0
    %1555 = vmatprep.subr.bf16.mxu0 0
    %1556 = vmatpush1.bf16.msra.mxu0 0
    %1557 = vmatprep.subr.bf16.mxu0 0
    %1558 = vmatpush1.bf16.msra.mxu0 0
    %1559 = vmatprep.subr.bf16.mxu0 0
    %1560 = vmatpush1.bf16.msra.mxu0 0
    %1561 = vmatprep.subr.bf16.mxu0 0
    %1562 = vmatpush1.bf16.msra.mxu0 0
    %1563 = vmatprep.subr.bf16.mxu0 0
    %1564 = vmatpush1.bf16.msra.mxu0 0
    %1565 = vmatprep.subr.bf16.mxu0 0
    %1566 = vmatpush1.bf16.msra.mxu0 0
    %1567 = vmatprep.subr.bf16.mxu0 0
    %1568 = vmatpush1.bf16.msra.mxu0 0
    %1569 = vmatprep.subr.bf16.mxu0 0
    %1570 = vmatpush1.bf16.msra.mxu0 0
    %1571 = vmatprep.mubr.bf16.mxu0 0
    %1572 = vmatmul.mubr.bf16.gmra.mrb[0].mxu0 %v1537
    %v1573 = vpop.f32.mrb[0].mxu0
    %v1574 = vadd.f32 0.0, %v1573
    %v1575 = vpop.f32.mrb[0].mxu0
    %v1576 = vpop.f32.mrb[0].mxu0
    %v1577 = vpop.f32.mrb[0].mxu0
    %1578 = vdwg.mxu0
    %v1579 = vpack.c.bf16 %v1574, %v1574
    %v1581 = vunpack.c.l.b16 %v916
    %v1582 = vpack.c.b16 %v1581, %v1581
    %v1583 = vrot.slane %v1582, 2
    %v1585 = vsel %vm1081, %v1579, 0
    %v1588 = vsel %vm1085, %v1583, 0
    %1590 = vmatprep.subr.bf16.mxu0 0
    %1591 = vmatpush1.bf16.msra.mxu0 %v1588
    %1592 = vmatprep.subr.bf16.mxu0 0
    %1593 = vmatpush1.bf16.msra.mxu0 0
    %1594 = vmatprep.subr.bf16.mxu0 0
    %1595 = vmatpush1.bf16.msra.mxu0 0
    %1596 = vmatprep.subr.bf16.mxu0 0
    %1597 = vmatpush1.bf16.msra.mxu0 0
    %1598 = vmatprep.subr.bf16.mxu0 0
    %1599 = vmatpush1.bf16.msra.mxu0 0
    %1600 = vmatprep.subr.bf16.mxu0 0
    %1601 = vmatpush1.bf16.msra.mxu0 0
    %1602 = vmatprep.subr.bf16.mxu0 0
    %1603 = vmatpush1.bf16.msra.mxu0 0
    %1604 = vmatprep.subr.bf16.mxu0 0
    %1605 = vmatpush1.bf16.msra.mxu0 0
    %1606 = vmatprep.subr.bf16.mxu0 0
    %1607 = vmatpush1.bf16.msra.mxu0 0
    %1608 = vmatprep.subr.bf16.mxu0 0
    %1609 = vmatpush1.bf16.msra.mxu0 0
    %1610 = vmatprep.subr.bf16.mxu0 0
    %1611 = vmatpush1.bf16.msra.mxu0 0
    %1612 = vmatprep.subr.bf16.mxu0 0
    %1613 = vmatpush1.bf16.msra.mxu0 0
    %1614 = vmatprep.subr.bf16.mxu0 0
    %1615 = vmatpush1.bf16.msra.mxu0 0
    %1616 = vmatprep.subr.bf16.mxu0 0
    %1617 = vmatpush1.bf16.msra.mxu0 0
    %1618 = vmatprep.subr.bf16.mxu0 0
    %1619 = vmatpush1.bf16.msra.mxu0 0
    %1620 = vmatprep.subr.bf16.mxu0 0
    %1621 = vmatpush1.bf16.msra.mxu0 0
    %1622 = vmatprep.mubr.bf16.mxu0 0
    %1623 = vmatmul.mubr.bf16.gmra.mrb[0].mxu0 %v1585
    %v1624 = vpop.f32.mrb[0].mxu0
    %v1625 = vadd.f32 0.0, %v1624
    %v1626 = vpop.f32.mrb[0].mxu0
    %v1627 = vpop.f32.mrb[0].mxu0
    %v1628 = vpop.f32.mrb[0].mxu0
    %1629 = vdwg.mxu0
    %v1630 = vadd.f32 %v1514, %v1625
    %v1631 = vrot.slane %v926, 6
    %v1632 = vrot.slane %v927, 5
    %v1633 = vsel %vm935, %v1632, %v1631
    %v1634 = vrot.slane %v928, 4
    %v1635 = vsel %vm938, %v1634, %v1633
    %v1636 = vrot.slane %v929, 3
    %v1637 = vsel %vm941, %v1636, %v1635
    %v1638 = vrot.slane %v930, 2
    %v1639 = vsel %vm944, %v1638, %v1637
    %v1640 = vrot.slane %v931, 1
    %v1641 = vsel %vm947, %v1640, %v1639
    %v1642 = vsel %vm950, %v932, %v1641
    %v1643 = vrot.slane %v933, 7
    %v1644 = vsel %vm953, %v1643, %v1642
    %v1645 = vpack.c.b16 %v1644, %v1644
    %1646 = vrot.lane.b32.xlu0 %v964, 104
    %v1647 = vpop.permute.xlu0 %1646
    %1648 = vrot.lane.b32.xlu0 %v965, 104
    %v1649 = vpop.permute.xlu0 %1648
    %v1653 = vsel %vm102, %v1645, 0
    %1655 = vmatprep.subr.bf16.mxu0 0
    %1656 = vmatpush1.bf16.msra.mxu0 %v1647
    %1657 = vmatprep.subr.bf16.mxu0 0
    %1658 = vmatpush1.bf16.msra.mxu0 %v1649
    %1659 = vmatprep.subr.bf16.mxu0 0
    %1660 = vmatpush1.bf16.msra.mxu0 0
    %1661 = vmatprep.subr.bf16.mxu0 0
    %1662 = vmatpush1.bf16.msra.mxu0 0
    %1663 = vmatprep.subr.bf16.mxu0 0
    %1664 = vmatpush1.bf16.msra.mxu0 0
    %1665 = vmatprep.subr.bf16.mxu0 0
    %1666 = vmatpush1.bf16.msra.mxu0 0
    %1667 = vmatprep.subr.bf16.mxu0 0
    %1668 = vmatpush1.bf16.msra.mxu0 0
    %1669 = vmatprep.subr.bf16.mxu0 0
    %1670 = vmatpush1.bf16.msra.mxu0 0
    %1671 = vmatprep.subr.bf16.mxu0 0
    %1672 = vmatpush1.bf16.msra.mxu0 0
    %1673 = vmatprep.subr.bf16.mxu0 0
    %1674 = vmatpush1.bf16.msra.mxu0 0
    %1675 = vmatprep.subr.bf16.mxu0 0
    %1676 = vmatpush1.bf16.msra.mxu0 0
    %1677 = vmatprep.subr.bf16.mxu0 0
    %1678 = vmatpush1.bf16.msra.mxu0 0
    %1679 = vmatprep.subr.bf16.mxu0 0
    %1680 = vmatpush1.bf16.msra.mxu0 0
    %1681 = vmatprep.subr.bf16.mxu0 0
    %1682 = vmatpush1.bf16.msra.mxu0 0
    %1683 = vmatprep.subr.bf16.mxu0 0
    %1684 = vmatpush1.bf16.msra.mxu0 0
    %1685 = vmatprep.subr.bf16.mxu0 0
    %1686 = vmatpush1.bf16.msra.mxu0 0
    %1687 = vmatprep.mubr.bf16.mxu0 0
    %1688 = vmatmul.mubr.bf16.gmra.mrb[0].mxu0 %v1653
    %v1689 = vpop.f32.mrb[0].mxu0
    %v1690 = vadd.f32 0.0, %v1689
    %v1691 = vpop.f32.mrb[0].mxu0
    %v1692 = vpop.f32.mrb[0].mxu0
    %v1693 = vpop.f32.mrb[0].mxu0
    %1694 = vdwg.mxu0
    %v1695 = vpack.c.bf16 %v1690, %v1690
    %v1697 = vsel %vm1081, %v1695, 0
    %v1700 = vsel %vm1085, %v917, 0
    %1702 = vmatprep.subr.bf16.mxu0 0
    %1703 = vmatpush1.bf16.msra.mxu0 %v1700
    %1704 = vmatprep.subr.bf16.mxu0 0
    %1705 = vmatpush1.bf16.msra.mxu0 0
    %1706 = vmatprep.subr.bf16.mxu0 0
    %1707 = vmatpush1.bf16.msra.mxu0 0
    %1708 = vmatprep.subr.bf16.mxu0 0
    %1709 = vmatpush1.bf16.msra.mxu0 0
    %1710 = vmatprep.subr.bf16.mxu0 0
    %1711 = vmatpush1.bf16.msra.mxu0 0
    %1712 = vmatprep.subr.bf16.mxu0 0
    %1713 = vmatpush1.bf16.msra.mxu0 0
    %1714 = vmatprep.subr.bf16.mxu0 0
    %1715 = vmatpush1.bf16.msra.mxu0 0
    %1716 = vmatprep.subr.bf16.mxu0 0
    %1717 = vmatpush1.bf16.msra.mxu0 0
    %1718 = vmatprep.subr.bf16.mxu0 0
    %1719 = vmatpush1.bf16.msra.mxu0 0
    %1720 = vmatprep.subr.bf16.mxu0 0
    %1721 = vmatpush1.bf16.msra.mxu0 0
    %1722 = vmatprep.subr.bf16.mxu0 0
    %1723 = vmatpush1.bf16.msra.mxu0 0
    %1724 = vmatprep.subr.bf16.mxu0 0
    %1725 = vmatpush1.bf16.msra.mxu0 0
    %1726 = vmatprep.subr.bf16.mxu0 0
    %1727 = vmatpush1.bf16.msra.mxu0 0
    %1728 = vmatprep.subr.bf16.mxu0 0
    %1729 = vmatpush1.bf16.msra.mxu0 0
    %1730 = vmatprep.subr.bf16.mxu0 0
    %1731 = vmatpush1.bf16.msra.mxu0 0
    %1732 = vmatprep.subr.bf16.mxu0 0
    %1733 = vmatpush1.bf16.msra.mxu0 0
    %1734 = vmatprep.mubr.bf16.mxu0 0
    %1735 = vmatmul.mubr.bf16.gmra.mrb[0].mxu0 %v1697
    %v1736 = vpop.f32.mrb[0].mxu0
    %v1737 = vadd.f32 0.0, %v1736
    %v1738 = vpop.f32.mrb[0].mxu0
    %v1739 = vpop.f32.mrb[0].mxu0
    %v1740 = vpop.f32.mrb[0].mxu0
    %1741 = vdwg.mxu0
    %v1742 = vadd.f32 %v1630, %v1737
    %v1743 = vrot.slane %v926, 7
    %v1744 = vrot.slane %v927, 6
    %v1745 = vsel %vm935, %v1744, %v1743
    %v1746 = vrot.slane %v928, 5
    %v1747 = vsel %vm938, %v1746, %v1745
    %v1748 = vrot.slane %v929, 4
    %v1749 = vsel %vm941, %v1748, %v1747
    %v1750 = vrot.slane %v930, 3
    %v1751 = vsel %vm944, %v1750, %v1749
    %v1752 = vrot.slane %v931, 2
    %v1753 = vsel %vm947, %v1752, %v1751
    %v1754 = vrot.slane %v932, 1
    %v1755 = vsel %vm950, %v1754, %v1753
    %v1756 = vsel %vm953, %v933, %v1755
    %v1757 = vpack.c.b16 %v1756, %v1756
    %1758 = vrot.lane.b32.xlu0 %v964, 100
    %v1759 = vpop.permute.xlu0 %1758
    %1760 = vrot.lane.b32.xlu0 %v965, 100
    %v1761 = vpop.permute.xlu0 %1760
    %v1765 = vsel %vm102, %v1757, 0
    %1767 = vmatprep.subr.bf16.mxu0 0
    %1768 = vmatpush1.bf16.msra.mxu0 %v1759
    %1769 = vmatprep.subr.bf16.mxu0 0
    %1770 = vmatpush1.bf16.msra.mxu0 %v1761
    %1771 = vmatprep.subr.bf16.mxu0 0
    %1772 = vmatpush1.bf16.msra.mxu0 0
    %1773 = vmatprep.subr.bf16.mxu0 0
    %1774 = vmatpush1.bf16.msra.mxu0 0
    %1775 = vmatprep.subr.bf16.mxu0 0
    %1776 = vmatpush1.bf16.msra.mxu0 0
    %1777 = vmatprep.subr.bf16.mxu0 0
    %1778 = vmatpush1.bf16.msra.mxu0 0
    %1779 = vmatprep.subr.bf16.mxu0 0
    %1780 = vmatpush1.bf16.msra.mxu0 0
    %1781 = vmatprep.subr.bf16.mxu0 0
    %1782 = vmatpush1.bf16.msra.mxu0 0
    %1783 = vmatprep.subr.bf16.mxu0 0
    %1784 = vmatpush1.bf16.msra.mxu0 0
    %1785 = vmatprep.subr.bf16.mxu0 0
    %1786 = vmatpush1.bf16.msra.mxu0 0
    %1787 = vmatprep.subr.bf16.mxu0 0
    %1788 = vmatpush1.bf16.msra.mxu0 0
    %1789 = vmatprep.subr.bf16.mxu0 0
    %1790 = vmatpush1.bf16.msra.mxu0 0
    %1791 = vmatprep.subr.bf16.mxu0 0
    %1792 = vmatpush1.bf16.msra.mxu0 0
    %1793 = vmatprep.subr.bf16.mxu0 0
    %1794 = vmatpush1.bf16.msra.mxu0 0
    %1795 = vmatprep.subr.bf16.mxu0 0
    %1796 = vmatpush1.bf16.msra.mxu0 0
    %1797 = vmatprep.subr.bf16.mxu0 0
    %1798 = vmatpush1.bf16.msra.mxu0 0
    %1799 = vmatprep.mubr.bf16.mxu0 0
    %1800 = vmatmul.mubr.bf16.gmra.mrb[0].mxu0 %v1765
    %v1801 = vpop.f32.mrb[0].mxu0
    %v1802 = vadd.f32 0.0, %v1801
    %v1803 = vpop.f32.mrb[0].mxu0
    %v1804 = vpop.f32.mrb[0].mxu0
    %v1805 = vpop.f32.mrb[0].mxu0
    %1806 = vdwg.mxu0
    %v1807 = vpack.c.bf16 %v1802, %v1802
    %v1809 = vunpack.c.l.b16 %v917
    %v1810 = vpack.c.b16 %v1809, %v1809
    %v1811 = vrot.slane %v1810, 2
    %v1813 = vsel %vm1081, %v1807, 0
    %v1816 = vsel %vm1085, %v1811, 0
    %1818 = vmatprep.subr.bf16.mxu0 0
    %1819 = vmatpush1.bf16.msra.mxu0 %v1816
    %1820 = vmatprep.subr.bf16.mxu0 0
    %1821 = vmatpush1.bf16.msra.mxu0 0
    %1822 = vmatprep.subr.bf16.mxu0 0
    %1823 = vmatpush1.bf16.msra.mxu0 0
    %1824 = vmatprep.subr.bf16.mxu0 0
    %1825 = vmatpush1.bf16.msra.mxu0 0
    %1826 = vmatprep.subr.bf16.mxu0 0
    %1827 = vmatpush1.bf16.msra.mxu0 0
    %1828 = vmatprep.subr.bf16.mxu0 0
    %1829 = vmatpush1.bf16.msra.mxu0 0
    %1830 = vmatprep.subr.bf16.mxu0 0
    %1831 = vmatpush1.bf16.msra.mxu0 0
    %1832 = vmatprep.subr.bf16.mxu0 0
    %1833 = vmatpush1.bf16.msra.mxu0 0
    %1834 = vmatprep.subr.bf16.mxu0 0
    %1835 = vmatpush1.bf16.msra.mxu0 0
    %1836 = vmatprep.subr.bf16.mxu0 0
    %1837 = vmatpush1.bf16.msra.mxu0 0
    %1838 = vmatprep.subr.bf16.mxu0 0
    %1839 = vmatpush1.bf16.msra.mxu0 0
    %1840 = vmatprep.subr.bf16.mxu0 0
    %1841 = vmatpush1.bf16.msra.mxu0 0
    %1842 = vmatprep.subr.bf16.mxu0 0
    %1843 = vmatpush1.bf16.msra.mxu0 0
    %1844 = vmatprep.subr.bf16.mxu0 0
    %1845 = vmatpush1.bf16.msra.mxu0 0
    %1846 = vmatprep.subr.bf16.mxu0 0
    %1847 = vmatpush1.bf16.msra.mxu0 0
    %1848 = vmatprep.subr.bf16.mxu0 0
    %1849 = vmatpush1.bf16.msra.mxu0 0
    %1850 = vmatprep.mubr.bf16.mxu0 0
    %1851 = vmatmul.mubr.bf16.gmra.mrb[0].mxu0 %v1813
    %v1852 = vpop.f32.mrb[0].mxu0
    %v1853 = vadd.f32 0.0, %v1852
    %v1854 = vpop.f32.mrb[0].mxu0
    %v1855 = vpop.f32.mrb[0].mxu0
    %v1856 = vpop.f32.mrb[0].mxu0
    %1857 = vdwg.mxu0
    %v1858 = vadd.f32 %v1742, %v1853
    %v1859 = vld [vmem:[%s4] sm:$0x1]
    %v1861 = vlaneseq
    %v1862 = vshrl.u32 %v1861, 7
    %v1863 = vsub.s32 0, %v1862
    %v1864 = vrot.slane %v1859, %v1863
    %v1866 = vadd.f32 %v1858, %v1864
    %1867 = vst.msk [vmem:[#allocation7] sm:$0xff] %vm102, %v1866
    // Predicated region
    $region30: #{tpu_custom_call.1} parent=1 // pred_check
      _
    $region31: #{tpu_custom_call.1} parent=1 // pred_check_branch
      %1869 = sbr.rel (0) target = $region33
    $region32: #{tpu_custom_call.1} parent=1 // pred_region
      %s1871 = ssub.s32 128, 128
      %1872 = vsyncadd [#allocation4], %s1871
      %s1874 = sshll.u32 [#allocation7], 4
      %s1875 = int_to_ptr.vmem [resolvable:$true] %s1874
      %1877 = dma.vmem_to_hbm [thread:$0]  %s1875, 128, %s5, [#allocation4]
    $region33: #{tpu_custom_call.1} parent=1 // pred_fallthru
      _
    // Predicated region
    $region34: #{tpu_custom_call.1} parent=1 // pred_check
      _
    $region35: #{tpu_custom_call.1} parent=1 // pred_check_branch
      %1879 = sbr.rel (0) target = $region37
    $region36: #{tpu_custom_call.1} parent=1 // pred_region
      %1880 = dma.done [#allocation4], 128
    $region37: #{tpu_custom_call.1} parent=1 // pred_fallthru
      _
    %1881 = vsyncpa [#allocation3], 1
    %1882 = vsyncpa [#allocation6], 1
    %1883 = vsyncpa [#allocation4], 1

// kernel: tpu_custom_call.1
$region0: #{tpu_custom_call.1}
  #allocation0 [shape = 'u32[]', space=smem, size = 0x4, offset = 0x4, fixed_abs, tag = 'smem constant byte address 0x4 - core index']
  #allocation1 [shape = 'u32[144,128]{1,0:T(1,128)}', space=vmem, size = 0x12000, scoped, tag = 'internal scratch']
  %s0 = inlined_call_operand.hbm [shape: f32[8,8,32], index: 0, kind: input, shape index: {}]
  %s1 = inlined_call_operand.vmem [shape: bf16[32,8], index: 1, kind: input, shape index: {}]
  %s2 = inlined_call_operand.vmem [shape: bf16[32,32], index: 2, kind: input, shape index: {}]
  %s3 = inlined_call_operand.hbm [shape: bf16[32,32], index: 3, kind: input, shape index: {}]
  %s4 = inlined_call_operand.vmem [shape: f32[1,32], index: 4, kind: input, shape index: {}]
  %s5 = inlined_call_operand.hbm [shape: f32[8,32], index: 5, kind: output, shape index: {}]
  %s6 = sld [smem:[#allocation0]]
  $region38: #{tpu_custom_call.1} parent=0
    _
  %s8 = ssub.s32 1, %s6
  %s9 = scalar_select 0, %s8, %s6
  $region1: #{tpu_custom_call.1} parent=0
    #allocation2 [shape = 'u8[32768]{0}', space=vmem, size = 0x8000, scoped, tag = 'input window, operand 0, single buffered']
    #allocation3 [shape = 's32[1]{0}', space=sflag, size = 0x4, scoped, tag = 'scoped memory for tpu_custom_call.1']
    #allocation4 [shape = 's32[1]{0}', space=sflag, size = 0x4, scoped, tag = 'scoped memory for tpu_custom_call.1']
    #allocation5 [shape = 'u8[8192]{0}', space=vmem, size = 0x2000, scoped, tag = 'input window, operand 3, single buffered']
    #allocation6 [shape = 's32[1]{0}', space=sflag, size = 0x4, scoped, tag = 'scoped memory for tpu_custom_call.1']
    #allocation7 [shape = 'u8[4096]{0}', space=vmem, size = 0x1000, scoped, tag = 'output window, operand 0, single buffered']
    %10 = vsyncpa [#allocation3], 0
    %11 = vsyncpa [#allocation6], 0
    %12 = vsyncpa [#allocation4], 0
    // Predicated region
    $region2: #{tpu_custom_call.1} parent=1 // pred_check
      _
    $region3: #{tpu_custom_call.1} parent=1 // pred_check_branch
      %14 = sbr.rel (0) target = $region5
    $region4: #{tpu_custom_call.1} parent=1 // pred_region
      %s16 = ssub.s32 1024, 1024
      %17 = vsyncadd [#allocation3], %s16
      %s18 = sshll.u32 [#allocation2], 4
      %s19 = int_to_ptr.vmem [resolvable:$true] %s18
      %24 = dma.hbm_to_vmem [thread:$0]  %s0, 1024, %s19, [#allocation3], 128, 128, 8
    $region5: #{tpu_custom_call.1} parent=1 // pred_fallthru
      _
    // Predicated region
    $region6: #{tpu_custom_call.1} parent=1 // pred_check
      _
    $region7: #{tpu_custom_call.1} parent=1 // pred_check_branch
      %26 = sbr.rel (0) target = $region9
    $region8: #{tpu_custom_call.1} parent=1 // pred_region
      _
    $region9: #{tpu_custom_call.1} parent=1 // pred_fallthru
      _
    // Predicated region
    $region10: #{tpu_custom_call.1} parent=1 // pred_check
      _
    $region11: #{tpu_custom_call.1} parent=1 // pred_check_branch
      %28 = sbr.rel (0) target = $region13
    $region12: #{tpu_custom_call.1} parent=1 // pred_region
      _
    $region13: #{tpu_custom_call.1} parent=1 // pred_fallthru
      _
    // Predicated region
    $region14: #{tpu_custom_call.1} parent=1 // pred_check
      _
    $region15: #{tpu_custom_call.1} parent=1 // pred_check_branch
      %30 = sbr.rel (0) target = $region17
    $region16: #{tpu_custom_call.1} parent=1 // pred_region
      %s32 = ssub.s32 256, 256
      %33 = vsyncadd [#allocation6], %s32
      %s34 = sshll.u32 [#allocation5], 4
      %s35 = int_to_ptr.vmem [resolvable:$true] %s34
      %40 = dma.hbm_to_vmem [thread:$0]  %s3, 256, %s35, [#allocation6], 64, 64, 4
    $region17: #{tpu_custom_call.1} parent=1 // pred_fallthru
      _
    // Predicated region
    $region18: #{tpu_custom_call.1} parent=1 // pred_check
      _
    $region19: #{tpu_custom_call.1} parent=1 // pred_check_branch
      %42 = sbr.rel (0) target = $region21
    $region20: #{tpu_custom_call.1} parent=1 // pred_region
      _
    $region21: #{tpu_custom_call.1} parent=1 // pred_fallthru
      _
    // Predicated region
    $region22: #{tpu_custom_call.1} parent=1 // pred_check
      _
    $region23: #{tpu_custom_call.1} parent=1 // pred_check_branch
      %44 = sbr.rel (0) target = $region25
    $region24: #{tpu_custom_call.1} parent=1 // pred_region
      %45 = dma.done [#allocation3], 1024
    $region25: #{tpu_custom_call.1} parent=1 // pred_fallthru
      _
    // Predicated region
    $region26: #{tpu_custom_call.1} parent=1 // pred_check
      _
    $region27: #{tpu_custom_call.1} parent=1 // pred_check_branch
      %47 = sbr.rel (0) target = $region29
    $region28: #{tpu_custom_call.1} parent=1 // pred_region
      %48 = dma.done [#allocation6], 256
    $region29: #{tpu_custom_call.1} parent=1 // pred_fallthru
      _
    %v50 = vld [vmem:[#allocation2] sm:$0xff]
    %v51 = vld [vmem:[#allocation2 + $0x8] sm:$0xff]
    %v52 = vld [vmem:[#allocation2 + $0x10] sm:$0xff]
    %v53 = vld [vmem:[#allocation2 + $0x18] sm:$0xff]
    %v54 = vld [vmem:[#allocation2 + $0x20] sm:$0xff]
    %v55 = vld [vmem:[#allocation2 + $0x28] sm:$0xff]
    %v56 = vld [vmem:[#allocation2 + $0x30] sm:$0xff]
    %v57 = vld [vmem:[#allocation2 + $0x38] sm:$0xff]
    %v58 = vpack.c.bf16 %v50, %v50
    %v59 = vpack.c.bf16 %v51, %v51
    %v60 = vpack.c.bf16 %v52, %v52
    %v61 = vpack.c.bf16 %v53, %v53
    %v62 = vpack.c.bf16 %v54, %v54
    %v63 = vpack.c.bf16 %v55, %v55
    %v64 = vpack.c.bf16 %v56, %v56
    %v65 = vpack.c.bf16 %v57, %v57
    %v66 = vld [vmem:[%s1] sm:$0xf]
    %v67 = vld [vmem:[%s1 + $0x4] sm:$0xf]
    %v68 = vld [vmem:[%s1 + $0x8] sm:$0xf]
    %v69 = vld [vmem:[%s1 + $0xc] sm:$0xf]
    %v78 = vunpack.c.l.b16 %v58
    %v79 = vunpack.c.l.b16 %v59
    %v80 = vunpack.c.l.b16 %v60
    %v81 = vunpack.c.l.b16 %v61
    %v82 = vunpack.c.l.b16 %v62
    %v83 = vunpack.c.l.b16 %v63
    %v84 = vunpack.c.l.b16 %v64
    %v85 = vunpack.c.l.b16 %v65
    %v86 = vpack.c.b16 %v79, %v78
    %v87 = vpack.c.b16 %v81, %v80
    %v88 = vpack.c.b16 %v83, %v82
    %v89 = vpack.c.b16 %v85, %v84
    %v94 = vunpack.c.l.b16 %v66
    %v95 = vunpack.c.l.b16 %v67
    %v96 = vunpack.c.l.b16 %v68
    %v97 = vunpack.c.l.b16 %v69
    %v98 = vpack.c.b16 %v95, %v94
    %v99 = vpack.c.b16 %v97, %v96
    %vm102 = vcmask 261120
    %v104 = vsel %vm102, %v86, 0
    %v107 = vsel %vm102, %v87, 0
    %v110 = vsel %vm102, %v88, 0
    %v113 = vsel %vm102, %v89, 0
    %115 = vmatprep.subr.bf16.mxu0 0
    %116 = vmatpush1.bf16.msra.mxu0 %v98
    %117 = vmatprep.subr.bf16.mxu0 0
    %118 = vmatpush1.bf16.msra.mxu0 %v99
    %119 = vmatprep.subr.bf16.mxu0 0
    %120 = vmatpush1.bf16.msra.mxu0 0
    %121 = vmatprep.subr.bf16.mxu0 0
    %122 = vmatpush1.bf16.msra.mxu0 0
    %123 = vmatprep.subr.bf16.mxu0 0
    %124 = vmatpush1.bf16.msra.mxu0 0
    %125 = vmatprep.subr.bf16.mxu0 0
    %126 = vmatpush1.bf16.msra.mxu0 0
    %127 = vmatprep.subr.bf16.mxu0 0
    %128 = vmatpush1.bf16.msra.mxu0 0
    %129 = vmatprep.subr.bf16.mxu0 0
    %130 = vmatpush1.bf16.msra.mxu0 0
    %131 = vmatprep.subr.bf16.mxu0 0
    %132 = vmatpush1.bf16.msra.mxu0 0
    %133 = vmatprep.subr.bf16.mxu0 0
    %134 = vmatpush1.bf16.msra.mxu0 0
    %135 = vmatprep.subr.bf16.mxu0 0
    %136 = vmatpush1.bf16.msra.mxu0 0
    %137 = vmatprep.subr.bf16.mxu0 0
    %138 = vmatpush1.bf16.msra.mxu0 0
    %139 = vmatprep.subr.bf16.mxu0 0
    %140 = vmatpush1.bf16.msra.mxu0 0
    %141 = vmatprep.subr.bf16.mxu0 0
    %142 = vmatpush1.bf16.msra.mxu0 0
    %143 = vmatprep.subr.bf16.mxu0 0
    %144 = vmatpush1.bf16.msra.mxu0 0
    %145 = vmatprep.subr.bf16.mxu0 0
    %146 = vmatpush1.bf16.msra.mxu0 0
    %147 = vmatprep.mubr.bf16.mxu0 0
    %148 = vmatmul.mubr.bf16.gmra.mrb[0].mxu0 %v104
    %v149 = vpop.f32.mrb[0].mxu0
    %v150 = vadd.f32 0.0, %v149
    %v151 = vpop.f32.mrb[0].mxu0
    %v152 = vpop.f32.mrb[0].mxu0
    %v153 = vadd.f32 0.0, %v152
    %v154 = vpop.f32.mrb[0].mxu0
    %155 = vmatprep.mubr.bf16.mxu0 0
    %156 = vmatmul.mubr.bf16.gmra.mrb[0].mxu0 %v107
    %v157 = vpop.f32.mrb[0].mxu0
    %v158 = vadd.f32 0.0, %v157
    %v159 = vpop.f32.mrb[0].mxu0
    %v160 = vpop.f32.mrb[0].mxu0
    %v161 = vadd.f32 0.0, %v160
    %v162 = vpop.f32.mrb[0].mxu0
    %163 = vmatprep.mubr.bf16.mxu0 0
    %164 = vmatmul.mubr.bf16.gmra.mrb[0].mxu0 %v110
    %v165 = vpop.f32.mrb[0].mxu0
    %v166 = vadd.f32 0.0, %v165
    %v167 = vpop.f32.mrb[0].mxu0
    %v168 = vpop.f32.mrb[0].mxu0
    %v169 = vadd.f32 0.0, %v168
    %v170 = vpop.f32.mrb[0].mxu0
    %171 = vmatprep.mubr.bf16.mxu0 0
    %172 = vmatmul.mubr.bf16.gmra.mrb[0].mxu0 %v113
    %v173 = vpop.f32.mrb[0].mxu0
    %v174 = vadd.f32 0.0, %v173
    %v175 = vpop.f32.mrb[0].mxu0
    %v176 = vpop.f32.mrb[0].mxu0
    %v177 = vadd.f32 0.0, %v176
    %v178 = vpop.f32.mrb[0].mxu0
    %179 = vdwg.mxu0
    %180 = vxpose.xlu0.b32.start [1/16] %v150, 128
    %181 = vxpose.xlu0.b32.cont [2/16] 0.0, 128
    %182 = vxpose.xlu0.b32.cont [3/16] 0.0, 128
    %183 = vxpose.xlu0.b32.cont [4/16] 0.0, 128
    %184 = vxpose.xlu0.b32.cont [5/16] 0.0, 128
    %185 = vxpose.xlu0.b32.cont [6/16] 0.0, 128
    %186 = vxpose.xlu0.b32.cont [7/16] 0.0, 128
    %187 = vxpose.xlu0.b32.cont [8/16] 0.0, 128
    %188 = vxpose.xlu0.b32.cont [9/16] 0.0, 128
    %189 = vxpose.xlu0.b32.cont [10/16] 0.0, 128
    %190 = vxpose.xlu0.b32.cont [11/16] 0.0, 128
    %191 = vxpose.xlu0.b32.cont [12/16] 0.0, 128
    %192 = vxpose.xlu0.b32.cont [13/16] 0.0, 128
    %193 = vxpose.xlu0.b32.cont [14/16] 0.0, 128
    %194 = vxpose.xlu0.b32.cont [15/16] 0.0, 128
    %195 = vxpose.xlu0.b32.end [16/16] 0.0, 128
    %v196 = vpop.trf.xlu0
    %v197 = vpop.trf.xlu0
    %v198 = vpop.trf.xlu0
    %v199 = vpop.trf.xlu0
    %v200 = vpop.trf.xlu0
    %v201 = vpop.trf.xlu0
    %v202 = vpop.trf.xlu0
    %v203 = vpop.trf.xlu0
    %v204 = vpop.trf.xlu0
    %v205 = vpop.trf.xlu0
    %v206 = vpop.trf.xlu0
    %v207 = vpop.trf.xlu0
    %v208 = vpop.trf.xlu0
    %v209 = vpop.trf.xlu0
    %v210 = vpop.trf.xlu0
    %v211 = vpop.trf.xlu0
    %212 = vxpose.xlu0.b32.start [1/16] %v153, 128
    %213 = vxpose.xlu0.b32.cont [2/16] 0.0, 128
    %214 = vxpose.xlu0.b32.cont [3/16] 0.0, 128
    %215 = vxpose.xlu0.b32.cont [4/16] 0.0, 128
    %216 = vxpose.xlu0.b32.cont [5/16] 0.0, 128
    %217 = vxpose.xlu0.b32.cont [6/16] 0.0, 128
    %218 = vxpose.xlu0.b32.cont [7/16] 0.0, 128
    %219 = vxpose.xlu0.b32.cont [8/16] 0.0, 128
    %220 = vxpose.xlu0.b32.cont [9/16] 0.0, 128
    %221 = vxpose.xlu0.b32.cont [10/16] 0.0, 128
    %222 = vxpose.xlu0.b32.cont [11/16] 0.0, 128
    %223 = vxpose.xlu0.b32.cont [12/16] 0.0, 128
    %224 = vxpose.xlu0.b32.cont [13/16] 0.0, 128
    %225 = vxpose.xlu0.b32.cont [14/16] 0.0, 128
    %226 = vxpose.xlu0.b32.cont [15/16] 0.0, 128
    %227 = vxpose.xlu0.b32.end [16/16] 0.0, 128
    %v228 = vpop.trf.xlu0
    %v229 = vpop.trf.xlu0
    %v230 = vpop.trf.xlu0
    %v231 = vpop.trf.xlu0
    %v232 = vpop.trf.xlu0
    %v233 = vpop.trf.xlu0
    %v234 = vpop.trf.xlu0
    %v235 = vpop.trf.xlu0
    %v236 = vpop.trf.xlu0
    %v237 = vpop.trf.xlu0
    %v238 = vpop.trf.xlu0
    %v239 = vpop.trf.xlu0
    %v240 = vpop.trf.xlu0
    %v241 = vpop.trf.xlu0
    %v242 = vpop.trf.xlu0
    %v243 = vpop.trf.xlu0
    %244 = vxpose.xlu0.b32.start [1/16] %v158, 128
    %245 = vxpose.xlu0.b32.cont [2/16] 0.0, 128
    %246 = vxpose.xlu0.b32.cont [3/16] 0.0, 128
    %247 = vxpose.xlu0.b32.cont [4/16] 0.0, 128
    %248 = vxpose.xlu0.b32.cont [5/16] 0.0, 128
    %249 = vxpose.xlu0.b32.cont [6/16] 0.0, 128
    %250 = vxpose.xlu0.b32.cont [7/16] 0.0, 128
    %251 = vxpose.xlu0.b32.cont [8/16] 0.0, 128
    %252 = vxpose.xlu0.b32.cont [9/16] 0.0, 128
    %253 = vxpose.xlu0.b32.cont [10/16] 0.0, 128
    %254 = vxpose.xlu0.b32.cont [11/16] 0.0, 128
    %255 = vxpose.xlu0.b32.cont [12/16] 0.0, 128
    %256 = vxpose.xlu0.b32.cont [13/16] 0.0, 128
    %257 = vxpose.xlu0.b32.cont [14/16] 0.0, 128
    %258 = vxpose.xlu0.b32.cont [15/16] 0.0, 128
    %259 = vxpose.xlu0.b32.end [16/16] 0.0, 128
    %v260 = vpop.trf.xlu0
    %v261 = vpop.trf.xlu0
    %v262 = vpop.trf.xlu0
    %v263 = vpop.trf.xlu0
    %v264 = vpop.trf.xlu0
    %v265 = vpop.trf.xlu0
    %v266 = vpop.trf.xlu0
    %v267 = vpop.trf.xlu0
    %v268 = vpop.trf.xlu0
    %v269 = vpop.trf.xlu0
    %v270 = vpop.trf.xlu0
    %v271 = vpop.trf.xlu0
    %v272 = vpop.trf.xlu0
    %v273 = vpop.trf.xlu0
    %v274 = vpop.trf.xlu0
    %v275 = vpop.trf.xlu0
    %276 = vxpose.xlu0.b32.start [1/16] %v161, 128
    %277 = vxpose.xlu0.b32.cont [2/16] 0.0, 128
    %278 = vxpose.xlu0.b32.cont [3/16] 0.0, 128
    %279 = vxpose.xlu0.b32.cont [4/16] 0.0, 128
    %280 = vxpose.xlu0.b32.cont [5/16] 0.0, 128
    %281 = vxpose.xlu0.b32.cont [6/16] 0.0, 128
    %282 = vxpose.xlu0.b32.cont [7/16] 0.0, 128
    %283 = vxpose.xlu0.b32.cont [8/16] 0.0, 128
    %284 = vxpose.xlu0.b32.cont [9/16] 0.0, 128
    %285 = vxpose.xlu0.b32.cont [10/16] 0.0, 128
    %286 = vxpose.xlu0.b32.cont [11/16] 0.0, 128
    %287 = vxpose.xlu0.b32.cont [12/16] 0.0, 128
    %288 = vxpose.xlu0.b32.cont [13/16] 0.0, 128
    %289 = vxpose.xlu0.b32.cont [14/16] 0.0, 128
    %290 = vxpose.xlu0.b32.cont [15/16] 0.0, 128
    %291 = vxpose.xlu0.b32.end [16/16] 0.0, 128
    %v292 = vpop.trf.xlu0
    %v293 = vpop.trf.xlu0
    %v294 = vpop.trf.xlu0
    %v295 = vpop.trf.xlu0
    %v296 = vpop.trf.xlu0
    %v297 = vpop.trf.xlu0
    %v298 = vpop.trf.xlu0
    %v299 = vpop.trf.xlu0
    %v300 = vpop.trf.xlu0
    %v301 = vpop.trf.xlu0
    %v302 = vpop.trf.xlu0
    %v303 = vpop.trf.xlu0
    %v304 = vpop.trf.xlu0
    %v305 = vpop.trf.xlu0
    %v306 = vpop.trf.xlu0
    %v307 = vpop.trf.xlu0
    %308 = vxpose.xlu0.b32.start [1/16] %v166, 128
    %309 = vxpose.xlu0.b32.cont [2/16] 0.0, 128
    %310 = vxpose.xlu0.b32.cont [3/16] 0.0, 128
    %311 = vxpose.xlu0.b32.cont [4/16] 0.0, 128
    %312 = vxpose.xlu0.b32.cont [5/16] 0.0, 128
    %313 = vxpose.xlu0.b32.cont [6/16] 0.0, 128
    %314 = vxpose.xlu0.b32.cont [7/16] 0.0, 128
    %315 = vxpose.xlu0.b32.cont [8/16] 0.0, 128
    %316 = vxpose.xlu0.b32.cont [9/16] 0.0, 128
    %317 = vxpose.xlu0.b32.cont [10/16] 0.0, 128
    %318 = vxpose.xlu0.b32.cont [11/16] 0.0, 128
    %319 = vxpose.xlu0.b32.cont [12/16] 0.0, 128
    %320 = vxpose.xlu0.b32.cont [13/16] 0.0, 128
    %321 = vxpose.xlu0.b32.cont [14/16] 0.0, 128
    %322 = vxpose.xlu0.b32.cont [15/16] 0.0, 128
    %323 = vxpose.xlu0.b32.end [16/16] 0.0, 128
    %v324 = vpop.trf.xlu0
    %v325 = vpop.trf.xlu0
    %v326 = vpop.trf.xlu0
    %v327 = vpop.trf.xlu0
    %v328 = vpop.trf.xlu0
    %v329 = vpop.trf.xlu0
    %v330 = vpop.trf.xlu0
    %v331 = vpop.trf.xlu0
    %v332 = vpop.trf.xlu0
    %v333 = vpop.trf.xlu0
    %v334 = vpop.trf.xlu0
    %v335 = vpop.trf.xlu0
    %v336 = vpop.trf.xlu0
    %v337 = vpop.trf.xlu0
    %v338 = vpop.trf.xlu0
    %v339 = vpop.trf.xlu0
    %340 = vxpose.xlu0.b32.start [1/16] %v169, 128
    %341 = vxpose.xlu0.b32.cont [2/16] 0.0, 128
    %342 = vxpose.xlu0.b32.cont [3/16] 0.0, 128
    %343 = vxpose.xlu0.b32.cont [4/16] 0.0, 128
    %344 = vxpose.xlu0.b32.cont [5/16] 0.0, 128
    %345 = vxpose.xlu0.b32.cont [6/16] 0.0, 128
    %346 = vxpose.xlu0.b32.cont [7/16] 0.0, 128
    %347 = vxpose.xlu0.b32.cont [8/16] 0.0, 128
    %348 = vxpose.xlu0.b32.cont [9/16] 0.0, 128
    %349 = vxpose.xlu0.b32.cont [10/16] 0.0, 128
    %350 = vxpose.xlu0.b32.cont [11/16] 0.0, 128
    %351 = vxpose.xlu0.b32.cont [12/16] 0.0, 128
    %352 = vxpose.xlu0.b32.cont [13/16] 0.0, 128
    %353 = vxpose.xlu0.b32.cont [14/16] 0.0, 128
    %354 = vxpose.xlu0.b32.cont [15/16] 0.0, 128
    %355 = vxpose.xlu0.b32.end [16/16] 0.0, 128
    %v356 = vpop.trf.xlu0
    %v357 = vpop.trf.xlu0
    %v358 = vpop.trf.xlu0
    %v359 = vpop.trf.xlu0
    %v360 = vpop.trf.xlu0
    %v361 = vpop.trf.xlu0
    %v362 = vpop.trf.xlu0
    %v363 = vpop.trf.xlu0
    %v364 = vpop.trf.xlu0
    %v365 = vpop.trf.xlu0
    %v366 = vpop.trf.xlu0
    %v367 = vpop.trf.xlu0
    %v368 = vpop.trf.xlu0
    %v369 = vpop.trf.xlu0
    %v370 = vpop.trf.xlu0
    %v371 = vpop.trf.xlu0
    %372 = vxpose.xlu0.b32.start [1/16] %v174, 128
    %373 = vxpose.xlu0.b32.cont [2/16] 0.0, 128
    %374 = vxpose.xlu0.b32.cont [3/16] 0.0, 128
    %375 = vxpose.xlu0.b32.cont [4/16] 0.0, 128
    %376 = vxpose.xlu0.b32.cont [5/16] 0.0, 128
    %377 = vxpose.xlu0.b32.cont [6/16] 0.0, 128
    %378 = vxpose.xlu0.b32.cont [7/16] 0.0, 128
    %379 = vxpose.xlu0.b32.cont [8/16] 0.0, 128
    %380 = vxpose.xlu0.b32.cont [9/16] 0.0, 128
    %381 = vxpose.xlu0.b32.cont [10/16] 0.0, 128
    %382 = vxpose.xlu0.b32.cont [11/16] 0.0, 128
    %383 = vxpose.xlu0.b32.cont [12/16] 0.0, 128
    %384 = vxpose.xlu0.b32.cont [13/16] 0.0, 128
    %385 = vxpose.xlu0.b32.cont [14/16] 0.0, 128
    %386 = vxpose.xlu0.b32.cont [15/16] 0.0, 128
    %387 = vxpose.xlu0.b32.end [16/16] 0.0, 128
    %v388 = vpop.trf.xlu0
    %v389 = vpop.trf.xlu0
    %v390 = vpop.trf.xlu0
    %v391 = vpop.trf.xlu0
    %v392 = vpop.trf.xlu0
    %v393 = vpop.trf.xlu0
    %v394 = vpop.trf.xlu0
    %v395 = vpop.trf.xlu0
    %v396 = vpop.trf.xlu0
    %v397 = vpop.trf.xlu0
    %v398 = vpop.trf.xlu0
    %v399 = vpop.trf.xlu0
    %v400 = vpop.trf.xlu0
    %v401 = vpop.trf.xlu0
    %v402 = vpop.trf.xlu0
    %v403 = vpop.trf.xlu0
    %404 = vxpose.xlu0.b32.start [1/16] %v177, 128
    %405 = vxpose.xlu0.b32.cont [2/16] 0.0, 128
    %406 = vxpose.xlu0.b32.cont [3/16] 0.0, 128
    %407 = vxpose.xlu0.b32.cont [4/16] 0.0, 128
    %408 = vxpose.xlu0.b32.cont [5/16] 0.0, 128
    %409 = vxpose.xlu0.b32.cont [6/16] 0.0, 128
    %410 = vxpose.xlu0.b32.cont [7/16] 0.0, 128
    %411 = vxpose.xlu0.b32.cont [8/16] 0.0, 128
    %412 = vxpose.xlu0.b32.cont [9/16] 0.0, 128
    %413 = vxpose.xlu0.b32.cont [10/16] 0.0, 128
    %414 = vxpose.xlu0.b32.cont [11/16] 0.0, 128
    %415 = vxpose.xlu0.b32.cont [12/16] 0.0, 128
    %416 = vxpose.xlu0.b32.cont [13/16] 0.0, 128
    %417 = vxpose.xlu0.b32.cont [14/16] 0.0, 128
    %418 = vxpose.xlu0.b32.cont [15/16] 0.0, 128
    %419 = vxpose.xlu0.b32.end [16/16] 0.0, 128
    %v420 = vpop.trf.xlu0
    %v421 = vpop.trf.xlu0
    %v422 = vpop.trf.xlu0
    %v423 = vpop.trf.xlu0
    %v424 = vpop.trf.xlu0
    %v425 = vpop.trf.xlu0
    %v426 = vpop.trf.xlu0
    %v427 = vpop.trf.xlu0
    %v428 = vpop.trf.xlu0
    %v429 = vpop.trf.xlu0
    %v430 = vpop.trf.xlu0
    %v431 = vpop.trf.xlu0
    %v432 = vpop.trf.xlu0
    %v433 = vpop.trf.xlu0
    %v434 = vpop.trf.xlu0
    %v435 = vpop.trf.xlu0
    %vm436 = vcmask 64512
    %v437 = vsel %vm436, %v196, -inf
    %438 = vmax.xlane.f32.xlu0 %v437
    %v439 = vpop.xlane.xlu0 %438
    %v440 = vsel %vm436, %v228, -inf
    %441 = vmax.xlane.f32.xlu0 %v440
    %v442 = vpop.xlane.xlu0 %441
    %v443 = vsel %vm436, %v260, -inf
    %444 = vmax.xlane.f32.xlu0 %v443
    %v445 = vpop.xlane.xlu0 %444
    %v446 = vsel %vm436, %v292, -inf
    %447 = vmax.xlane.f32.xlu0 %v446
    %v448 = vpop.xlane.xlu0 %447
    %v449 = vsel %vm436, %v324, -inf
    %450 = vmax.xlane.f32.xlu0 %v449
    %v451 = vpop.xlane.xlu0 %450
    %v452 = vsel %vm436, %v356, -inf
    %453 = vmax.xlane.f32.xlu0 %v452
    %v454 = vpop.xlane.xlu0 %453
    %v455 = vsel %vm436, %v388, -inf
    %456 = vmax.xlane.f32.xlu0 %v455
    %v457 = vpop.xlane.xlu0 %456
    %v458 = vsel %vm436, %v420, -inf
    %459 = vmax.xlane.f32.xlu0 %v458
    %v460 = vpop.xlane.xlu0 %459
    %v461 = vsub.f32 %v196, %v439
    %v462 = vsub.f32 %v228, %v442
    %v463 = vsub.f32 %v260, %v445
    %v464 = vsub.f32 %v292, %v448
    %v465 = vsub.f32 %v324, %v451
    %v466 = vsub.f32 %v356, %v454
    %v467 = vsub.f32 %v388, %v457
    %v468 = vsub.f32 %v420, %v460
    %v469 = vmul.f32 %v461, 1.442695
    %v470 = vpow.pop %v469
    %v471 = vmul.f32 %v462, 1.442695
    %v472 = vpow.pop %v471
    %v473 = vmul.f32 %v463, 1.442695
    %v474 = vpow.pop %v473
    %v475 = vmul.f32 %v464, 1.442695
    %v476 = vpow.pop %v475
    %v477 = vmul.f32 %v465, 1.442695
    %v478 = vpow.pop %v477
    %v479 = vmul.f32 %v466, 1.442695
    %v480 = vpow.pop %v479
    %v481 = vmul.f32 %v467, 1.442695
    %v482 = vpow.pop %v481
    %v483 = vmul.f32 %v468, 1.442695
    %v484 = vpow.pop %v483
    %v485 = vsel %vm436, %v470, 0.0
    %486 = vadd.xlane.f32.xlu0 %v485
    %v487 = vpop.xlane.xlu0 %486
    %v488 = vsel %vm436, %v472, 0.0
    %489 = vadd.xlane.f32.xlu0 %v488
    %v490 = vpop.xlane.xlu0 %489
    %v491 = vsel %vm436, %v474, 0.0
    %492 = vadd.xlane.f32.xlu0 %v491
    %v493 = vpop.xlane.xlu0 %492
    %v494 = vsel %vm436, %v476, 0.0
    %495 = vadd.xlane.f32.xlu0 %v494
    %v496 = vpop.xlane.xlu0 %495
    %v497 = vsel %vm436, %v478, 0.0
    %498 = vadd.xlane.f32.xlu0 %v497
    %v499 = vpop.xlane.xlu0 %498
    %v500 = vsel %vm436, %v480, 0.0
    %501 = vadd.xlane.f32.xlu0 %v500
    %v502 = vpop.xlane.xlu0 %501
    %v503 = vsel %vm436, %v482, 0.0
    %504 = vadd.xlane.f32.xlu0 %v503
    %v505 = vpop.xlane.xlu0 %504
    %v506 = vsel %vm436, %v484, 0.0
    %507 = vadd.xlane.f32.xlu0 %v506
    %v508 = vpop.xlane.xlu0 %507
    %v509 = vpack.c.bf16 %v470, %v470
    %v510 = vpack.c.bf16 %v472, %v472
    %v511 = vpack.c.bf16 %v474, %v474
    %v512 = vpack.c.bf16 %v476, %v476
    %v513 = vpack.c.bf16 %v478, %v478
    %v514 = vpack.c.bf16 %v480, %v480
    %v515 = vpack.c.bf16 %v482, %v482
    %v516 = vpack.c.bf16 %v484, %v484
    %v518 = vsel %vm436, %v509, 0
    %vm520 = vcmask 1043456
    %v522 = vsel %vm520, %v58, 0
    %524 = vmatprep.subr.bf16.mxu0 0
    %525 = vmatpush1.bf16.msra.mxu0 %v522
    %526 = vmatprep.subr.bf16.mxu0 0
    %527 = vmatpush1.bf16.msra.mxu0 0
    %528 = vmatprep.subr.bf16.mxu0 0
    %529 = vmatpush1.bf16.msra.mxu0 0
    %530 = vmatprep.subr.bf16.mxu0 0
    %531 = vmatpush1.bf16.msra.mxu0 0
    %532 = vmatprep.subr.bf16.mxu0 0
    %533 = vmatpush1.bf16.msra.mxu0 0
    %534 = vmatprep.subr.bf16.mxu0 0
    %535 = vmatpush1.bf16.msra.mxu0 0
    %536 = vmatprep.subr.bf16.mxu0 0
    %537 = vmatpush1.bf16.msra.mxu0 0
    %538 = vmatprep.subr.bf16.mxu0 0
    %539 = vmatpush1.bf16.msra.mxu0 0
    %540 = vmatprep.subr.bf16.mxu0 0
    %541 = vmatpush1.bf16.msra.mxu0 0
    %542 = vmatprep.subr.bf16.mxu0 0
    %543 = vmatpush1.bf16.msra.mxu0 0
    %544 = vmatprep.subr.bf16.mxu0 0
    %545 = vmatpush1.bf16.msra.mxu0 0
    %546 = vmatprep.subr.bf16.mxu0 0
    %547 = vmatpush1.bf16.msra.mxu0 0
    %548 = vmatprep.subr.bf16.mxu0 0
    %549 = vmatpush1.bf16.msra.mxu0 0
    %550 = vmatprep.subr.bf16.mxu0 0
    %551 = vmatpush1.bf16.msra.mxu0 0
    %552 = vmatprep.subr.bf16.mxu0 0
    %553 = vmatpush1.bf16.msra.mxu0 0
    %554 = vmatprep.subr.bf16.mxu0 0
    %555 = vmatpush1.bf16.msra.mxu0 0
    %556 = vmatprep.mubr.bf16.mxu0 0
    %557 = vmatmul.mubr.bf16.gmra.mrb[0].mxu0 %v518
    %v558 = vpop.f32.mrb[0].mxu0
    %v559 = vadd.f32 0.0, %v558
    %v560 = vpop.f32.mrb[0].mxu0
    %v561 = vpop.f32.mrb[0].mxu0
    %v562 = vpop.f32.mrb[0].mxu0
    %563 = vdwg.mxu0
    %v565 = vsel %vm436, %v510, 0
    %v568 = vsel %vm520, %v59, 0
    %570 = vmatprep.subr.bf16.mxu0 0
    %571 = vmatpush1.bf16.msra.mxu0 %v568
    %572 = vmatprep.subr.bf16.mxu0 0
    %573 = vmatpush1.bf16.msra.mxu0 0
    %574 = vmatprep.subr.bf16.mxu0 0
    %575 = vmatpush1.bf16.msra.mxu0 0
    %576 = vmatprep.subr.bf16.mxu0 0
    %577 = vmatpush1.bf16.msra.mxu0 0
    %578 = vmatprep.subr.bf16.mxu0 0
    %579 = vmatpush1.bf16.msra.mxu0 0
    %580 = vmatprep.subr.bf16.mxu0 0
    %581 = vmatpush1.bf16.msra.mxu0 0
    %582 = vmatprep.subr.bf16.mxu0 0
    %583 = vmatpush1.bf16.msra.mxu0 0
    %584 = vmatprep.subr.bf16.mxu0 0
    %585 = vmatpush1.bf16.msra.mxu0 0
    %586 = vmatprep.subr.bf16.mxu0 0
    %587 = vmatpush1.bf16.msra.mxu0 0
    %588 = vmatprep.subr.bf16.mxu0 0
    %589 = vmatpush1.bf16.msra.mxu0 0
    %590 = vmatprep.subr.bf16.mxu0 0
    %591 = vmatpush1.bf16.msra.mxu0 0
    %592 = vmatprep.subr.bf16.mxu0 0
    %593 = vmatpush1.bf16.msra.mxu0 0
    %594 = vmatprep.subr.bf16.mxu0 0
    %595 = vmatpush1.bf16.msra.mxu0 0
    %596 = vmatprep.subr.bf16.mxu0 0
    %597 = vmatpush1.bf16.msra.mxu0 0
    %598 = vmatprep.subr.bf16.mxu0 0
    %599 = vmatpush1.bf16.msra.mxu0 0
    %600 = vmatprep.subr.bf16.mxu0 0
    %601 = vmatpush1.bf16.msra.mxu0 0
    %602 = vmatprep.mubr.bf16.mxu0 0
    %603 = vmatmul.mubr.bf16.gmra.mrb[0].mxu0 %v565
    %v604 = vpop.f32.mrb[0].mxu0
    %v605 = vadd.f32 0.0, %v604
    %v606 = vpop.f32.mrb[0].mxu0
    %v607 = vpop.f32.mrb[0].mxu0
    %v608 = vpop.f32.mrb[0].mxu0
    %609 = vdwg.mxu0
    %v611 = vsel %vm436, %v511, 0
    %v614 = vsel %vm520, %v60, 0
    %616 = vmatprep.subr.bf16.mxu0 0
    %617 = vmatpush1.bf16.msra.mxu0 %v614
    %618 = vmatprep.subr.bf16.mxu0 0
    %619 = vmatpush1.bf16.msra.mxu0 0
    %620 = vmatprep.subr.bf16.mxu0 0
    %621 = vmatpush1.bf16.msra.mxu0 0
    %622 = vmatprep.subr.bf16.mxu0 0
    %623 = vmatpush1.bf16.msra.mxu0 0
    %624 = vmatprep.subr.bf16.mxu0 0
    %625 = vmatpush1.bf16.msra.mxu0 0
    %626 = vmatprep.subr.bf16.mxu0 0
    %627 = vmatpush1.bf16.msra.mxu0 0
    %628 = vmatprep.subr.bf16.mxu0 0
    %629 = vmatpush1.bf16.msra.mxu0 0
    %630 = vmatprep.subr.bf16.mxu0 0
    %631 = vmatpush1.bf16.msra.mxu0 0
    %632 = vmatprep.subr.bf16.mxu0 0
    %633 = vmatpush1.bf16.msra.mxu0 0
    %634 = vmatprep.subr.bf16.mxu0 0
    %635 = vmatpush1.bf16.msra.mxu0 0
    %636 = vmatprep.subr.bf16.mxu0 0
    %637 = vmatpush1.bf16.msra.mxu0 0
    %638 = vmatprep.subr.bf16.mxu0 0
    %639 = vmatpush1.bf16.msra.mxu0 0
    %640 = vmatprep.subr.bf16.mxu0 0
    %641 = vmatpush1.bf16.msra.mxu0 0
    %642 = vmatprep.subr.bf16.mxu0 0
    %643 = vmatpush1.bf16.msra.mxu0 0
    %644 = vmatprep.subr.bf16.mxu0 0
    %645 = vmatpush1.bf16.msra.mxu0 0
    %646 = vmatprep.subr.bf16.mxu0 0
    %647 = vmatpush1.bf16.msra.mxu0 0
    %648 = vmatprep.mubr.bf16.mxu0 0
    %649 = vmatmul.mubr.bf16.gmra.mrb[0].mxu0 %v611
    %v650 = vpop.f32.mrb[0].mxu0
    %v651 = vadd.f32 0.0, %v650
    %v652 = vpop.f32.mrb[0].mxu0
    %v653 = vpop.f32.mrb[0].mxu0
    %v654 = vpop.f32.mrb[0].mxu0
    %655 = vdwg.mxu0
    %v657 = vsel %vm436, %v512, 0
    %v660 = vsel %vm520, %v61, 0
    %662 = vmatprep.subr.bf16.mxu0 0
    %663 = vmatpush1.bf16.msra.mxu0 %v660
    %664 = vmatprep.subr.bf16.mxu0 0
    %665 = vmatpush1.bf16.msra.mxu0 0
    %666 = vmatprep.subr.bf16.mxu0 0
    %667 = vmatpush1.bf16.msra.mxu0 0
    %668 = vmatprep.subr.bf16.mxu0 0
    %669 = vmatpush1.bf16.msra.mxu0 0
    %670 = vmatprep.subr.bf16.mxu0 0
    %671 = vmatpush1.bf16.msra.mxu0 0
    %672 = vmatprep.subr.bf16.mxu0 0
    %673 = vmatpush1.bf16.msra.mxu0 0
    %674 = vmatprep.subr.bf16.mxu0 0
    %675 = vmatpush1.bf16.msra.mxu0 0
    %676 = vmatprep.subr.bf16.mxu0 0
    %677 = vmatpush1.bf16.msra.mxu0 0
    %678 = vmatprep.subr.bf16.mxu0 0
    %679 = vmatpush1.bf16.msra.mxu0 0
    %680 = vmatprep.subr.bf16.mxu0 0
    %681 = vmatpush1.bf16.msra.mxu0 0
    %682 = vmatprep.subr.bf16.mxu0 0
    %683 = vmatpush1.bf16.msra.mxu0 0
    %684 = vmatprep.subr.bf16.mxu0 0
    %685 = vmatpush1.bf16.msra.mxu0 0
    %686 = vmatprep.subr.bf16.mxu0 0
    %687 = vmatpush1.bf16.msra.mxu0 0
    %688 = vmatprep.subr.bf16.mxu0 0
    %689 = vmatpush1.bf16.msra.mxu0 0
    %690 = vmatprep.subr.bf16.mxu0 0
    %691 = vmatpush1.bf16.msra.mxu0 0
    %692 = vmatprep.subr.bf16.mxu0 0
    %693 = vmatpush1.bf16.msra.mxu0 0
    %694 = vmatprep.mubr.bf16.mxu0 0
    %695 = vmatmul.mubr.bf16.gmra.mrb[0].mxu0 %v657
    %v696 = vpop.f32.mrb[0].mxu0
    %v697 = vadd.f32 0.0, %v696
    %v698 = vpop.f32.mrb[0].mxu0
    %v699 = vpop.f32.mrb[0].mxu0
    %v700 = vpop.f32.mrb[0].mxu0
    %701 = vdwg.mxu0
    %v703 = vsel %vm436, %v513, 0
    %v706 = vsel %vm520, %v62, 0
    %708 = vmatprep.subr.bf16.mxu0 0
    %709 = vmatpush1.bf16.msra.mxu0 %v706
    %710 = vmatprep.subr.bf16.mxu0 0
    %711 = vmatpush1.bf16.msra.mxu0 0
    %712 = vmatprep.subr.bf16.mxu0 0
    %713 = vmatpush1.bf16.msra.mxu0 0
    %714 = vmatprep.subr.bf16.mxu0 0
    %715 = vmatpush1.bf16.msra.mxu0 0
    %716 = vmatprep.subr.bf16.mxu0 0
    %717 = vmatpush1.bf16.msra.mxu0 0
    %718 = vmatprep.subr.bf16.mxu0 0
    %719 = vmatpush1.bf16.msra.mxu0 0
    %720 = vmatprep.subr.bf16.mxu0 0
    %721 = vmatpush1.bf16.msra.mxu0 0
    %722 = vmatprep.subr.bf16.mxu0 0
    %723 = vmatpush1.bf16.msra.mxu0 0
    %724 = vmatprep.subr.bf16.mxu0 0
    %725 = vmatpush1.bf16.msra.mxu0 0
    %726 = vmatprep.subr.bf16.mxu0 0
    %727 = vmatpush1.bf16.msra.mxu0 0
    %728 = vmatprep.subr.bf16.mxu0 0
    %729 = vmatpush1.bf16.msra.mxu0 0
    %730 = vmatprep.subr.bf16.mxu0 0
    %731 = vmatpush1.bf16.msra.mxu0 0
    %732 = vmatprep.subr.bf16.mxu0 0
    %733 = vmatpush1.bf16.msra.mxu0 0
    %734 = vmatprep.subr.bf16.mxu0 0
    %735 = vmatpush1.bf16.msra.mxu0 0
    %736 = vmatprep.subr.bf16.mxu0 0
    %737 = vmatpush1.bf16.msra.mxu0 0
    %738 = vmatprep.subr.bf16.mxu0 0
    %739 = vmatpush1.bf16.msra.mxu0 0
    %740 = vmatprep.mubr.bf16.mxu0 0
    %741 = vmatmul.mubr.bf16.gmra.mrb[0].mxu0 %v703
    %v742 = vpop.f32.mrb[0].mxu0
    %v743 = vadd.f32 0.0, %v742
    %v744 = vpop.f32.mrb[0].mxu0
    %v745 = vpop.f32.mrb[0].mxu0
    %v746 = vpop.f32.mrb[0].mxu0
    %747 = vdwg.mxu0
    %v749 = vsel %vm436, %v514, 0
    %v752 = vsel %vm520, %v63, 0
    %754 = vmatprep.subr.bf16.mxu0 0
    %755 = vmatpush1.bf16.msra.mxu0 %v752
    %756 = vmatprep.subr.bf16.mxu0 0
    %757 = vmatpush1.bf16.msra.mxu0 0
    %758 = vmatprep.subr.bf16.mxu0 0
    %759 = vmatpush1.bf16.msra.mxu0 0
    %760 = vmatprep.subr.bf16.mxu0 0
    %761 = vmatpush1.bf16.msra.mxu0 0
    %762 = vmatprep.subr.bf16.mxu0 0
    %763 = vmatpush1.bf16.msra.mxu0 0
    %764 = vmatprep.subr.bf16.mxu0 0
    %765 = vmatpush1.bf16.msra.mxu0 0
    %766 = vmatprep.subr.bf16.mxu0 0
    %767 = vmatpush1.bf16.msra.mxu0 0
    %768 = vmatprep.subr.bf16.mxu0 0
    %769 = vmatpush1.bf16.msra.mxu0 0
    %770 = vmatprep.subr.bf16.mxu0 0
    %771 = vmatpush1.bf16.msra.mxu0 0
    %772 = vmatprep.subr.bf16.mxu0 0
    %773 = vmatpush1.bf16.msra.mxu0 0
    %774 = vmatprep.subr.bf16.mxu0 0
    %775 = vmatpush1.bf16.msra.mxu0 0
    %776 = vmatprep.subr.bf16.mxu0 0
    %777 = vmatpush1.bf16.msra.mxu0 0
    %778 = vmatprep.subr.bf16.mxu0 0
    %779 = vmatpush1.bf16.msra.mxu0 0
    %780 = vmatprep.subr.bf16.mxu0 0
    %781 = vmatpush1.bf16.msra.mxu0 0
    %782 = vmatprep.subr.bf16.mxu0 0
    %783 = vmatpush1.bf16.msra.mxu0 0
    %784 = vmatprep.subr.bf16.mxu0 0
    %785 = vmatpush1.bf16.msra.mxu0 0
    %786 = vmatprep.mubr.bf16.mxu0 0
    %787 = vmatmul.mubr.bf16.gmra.mrb[0].mxu0 %v749
    %v788 = vpop.f32.mrb[0].mxu0
    %v789 = vadd.f32 0.0, %v788
    %v790 = vpop.f32.mrb[0].mxu0
    %v791 = vpop.f32.mrb[0].mxu0
    %v792 = vpop.f32.mrb[0].mxu0
    %793 = vdwg.mxu0
    %v795 = vsel %vm436, %v515, 0
    %v798 = vsel %vm520, %v64, 0
    %800 = vmatprep.subr.bf16.mxu0 0
    %801 = vmatpush1.bf16.msra.mxu0 %v798
    %802 = vmatprep.subr.bf16.mxu0 0
    %803 = vmatpush1.bf16.msra.mxu0 0
    %804 = vmatprep.subr.bf16.mxu0 0
    %805 = vmatpush1.bf16.msra.mxu0 0
    %806 = vmatprep.subr.bf16.mxu0 0
    %807 = vmatpush1.bf16.msra.mxu0 0
    %808 = vmatprep.subr.bf16.mxu0 0
    %809 = vmatpush1.bf16.msra.mxu0 0
    %810 = vmatprep.subr.bf16.mxu0 0
    %811 = vmatpush1.bf16.msra.mxu0 0
    %812 = vmatprep.subr.bf16.mxu0 0
    %813 = vmatpush1.bf16.msra.mxu0 0
    %814 = vmatprep.subr.bf16.mxu0 0
    %815 = vmatpush1.bf16.msra.mxu0 0
    %816 = vmatprep.subr.bf16.mxu0 0
    %817 = vmatpush1.bf16.msra.mxu0 0
    %818 = vmatprep.subr.bf16.mxu0 0
    %819 = vmatpush1.bf16.msra.mxu0 0
    %820 = vmatprep.subr.bf16.mxu0 0
    %821 = vmatpush1.bf16.msra.mxu0 0
    %822 = vmatprep.subr.bf16.mxu0 0
    %823 = vmatpush1.bf16.msra.mxu0 0
    %824 = vmatprep.subr.bf16.mxu0 0
    %825 = vmatpush1.bf16.msra.mxu0 0
    %826 = vmatprep.subr.bf16.mxu0 0
    %827 = vmatpush1.bf16.msra.mxu0 0
    %828 = vmatprep.subr.bf16.mxu0 0
    %829 = vmatpush1.bf16.msra.mxu0 0
    %830 = vmatprep.subr.bf16.mxu0 0
    %831 = vmatpush1.bf16.msra.mxu0 0
    %832 = vmatprep.mubr.bf16.mxu0 0
    %833 = vmatmul.mubr.bf16.gmra.mrb[0].mxu0 %v795
    %v834 = vpop.f32.mrb[0].mxu0
    %v835 = vadd.f32 0.0, %v834
    %v836 = vpop.f32.mrb[0].mxu0
    %v837 = vpop.f32.mrb[0].mxu0
    %v838 = vpop.f32.mrb[0].mxu0
    %839 = vdwg.mxu0
    %v841 = vsel %vm436, %v516, 0
    %v844 = vsel %vm520, %v65, 0
    %846 = vmatprep.subr.bf16.mxu0 0
    %847 = vmatpush1.bf16.msra.mxu0 %v844
    %848 = vmatprep.subr.bf16.mxu0 0
    %849 = vmatpush1.bf16.msra.mxu0 0
    %850 = vmatprep.subr.bf16.mxu0 0
    %851 = vmatpush1.bf16.msra.mxu0 0
    %852 = vmatprep.subr.bf16.mxu0 0
    %853 = vmatpush1.bf16.msra.mxu0 0
    %854 = vmatprep.subr.bf16.mxu0 0
    %855 = vmatpush1.bf16.msra.mxu0 0
    %856 = vmatprep.subr.bf16.mxu0 0
    %857 = vmatpush1.bf16.msra.mxu0 0
    %858 = vmatprep.subr.bf16.mxu0 0
    %859 = vmatpush1.bf16.msra.mxu0 0
    %860 = vmatprep.subr.bf16.mxu0 0
    %861 = vmatpush1.bf16.msra.mxu0 0
    %862 = vmatprep.subr.bf16.mxu0 0
    %863 = vmatpush1.bf16.msra.mxu0 0
    %864 = vmatprep.subr.bf16.mxu0 0
    %865 = vmatpush1.bf16.msra.mxu0 0
    %866 = vmatprep.subr.bf16.mxu0 0
    %867 = vmatpush1.bf16.msra.mxu0 0
    %868 = vmatprep.subr.bf16.mxu0 0
    %869 = vmatpush1.bf16.msra.mxu0 0
    %870 = vmatprep.subr.bf16.mxu0 0
    %871 = vmatpush1.bf16.msra.mxu0 0
    %872 = vmatprep.subr.bf16.mxu0 0
    %873 = vmatpush1.bf16.msra.mxu0 0
    %874 = vmatprep.subr.bf16.mxu0 0
    %875 = vmatpush1.bf16.msra.mxu0 0
    %876 = vmatprep.subr.bf16.mxu0 0
    %877 = vmatpush1.bf16.msra.mxu0 0
    %878 = vmatprep.mubr.bf16.mxu0 0
    %879 = vmatmul.mubr.bf16.gmra.mrb[0].mxu0 %v841
    %v880 = vpop.f32.mrb[0].mxu0
    %v881 = vadd.f32 0.0, %v880
    %v882 = vpop.f32.mrb[0].mxu0
    %v883 = vpop.f32.mrb[0].mxu0
    %v884 = vpop.f32.mrb[0].mxu0
    %885 = vdwg.mxu0
    %v886 = vrcp.pop %v487
    %v887 = vrcp.pop %v490
    %v888 = vrcp.pop %v493
    %v889 = vrcp.pop %v496
    %v890 = vrcp.pop %v499
    %v891 = vrcp.pop %v502
    %v892 = vrcp.pop %v505
    %v893 = vrcp.pop %v508
    %v894 = vmul.f32 %v559, %v886
    %v895 = vmul.f32 %v605, %v887
    %v896 = vmul.f32 %v651, %v888
    %v897 = vmul.f32 %v697, %v889
    %v898 = vmul.f32 %v743, %v890
    %v899 = vmul.f32 %v789, %v891
    %v900 = vmul.f32 %v835, %v892
    %v901 = vmul.f32 %v881, %v893
    %v902 = vpack.c.bf16 %v894, %v894
    %v903 = vpack.c.bf16 %v895, %v895
    %v904 = vpack.c.bf16 %v896, %v896
    %v905 = vpack.c.bf16 %v897, %v897
    %v906 = vpack.c.bf16 %v898, %v898
    %v907 = vpack.c.bf16 %v899, %v899
    %v908 = vpack.c.bf16 %v900, %v900
    %v909 = vpack.c.bf16 %v901, %v901
    %v910 = vld [vmem:[%s2] sm:$0xf]
    %v911 = vld [vmem:[%s2 + $0x4] sm:$0xf]
    %v912 = vld [vmem:[%s2 + $0x8] sm:$0xf]
    %v913 = vld [vmem:[%s2 + $0xc] sm:$0xf]
    %v914 = vld [vmem:[#allocation5] sm:$0xf]
    %v915 = vld [vmem:[#allocation5 + $0x4] sm:$0xf]
    %v916 = vld [vmem:[#allocation5 + $0x8] sm:$0xf]
    %v917 = vld [vmem:[#allocation5 + $0xc] sm:$0xf]
    %v926 = vunpack.c.l.b16 %v902
    %v927 = vunpack.c.l.b16 %v903
    %v928 = vunpack.c.l.b16 %v904
    %v929 = vunpack.c.l.b16 %v905
    %v930 = vunpack.c.l.b16 %v906
    %v931 = vunpack.c.l.b16 %v907
    %v932 = vunpack.c.l.b16 %v908
    %v933 = vunpack.c.l.b16 %v909
    %v934 = vrot.slane %v927, 7
    %vm935 = vcmask 1041409
    %v936 = vsel %vm935, %v934, %v926
    %v937 = vrot.slane %v928, 6
    %vm938 = vcmask 1042434
    %v939 = vsel %vm938, %v937, %v936
    %v940 = vrot.slane %v929, 5
    %vm941 = vcmask 1043459
    %v942 = vsel %vm941, %v940, %v939
    %v943 = vrot.slane %v930, 4
    %vm944 = vcmask 1044484
    %v945 = vsel %vm944, %v943, %v942
    %v946 = vrot.slane %v931, 3
    %vm947 = vcmask 1045509
    %v948 = vsel %vm947, %v946, %v945
    %v949 = vrot.slane %v932, 2
    %vm950 = vcmask 1046534
    %v951 = vsel %vm950, %v949, %v948
    %v952 = vrot.slane %v933, 1
    %vm953 = vcmask 1047559
    %v954 = vsel %vm953, %v952, %v951
    %v955 = vpack.c.b16 %v954, %v954
    %v960 = vunpack.c.l.b16 %v910
    %v961 = vunpack.c.l.b16 %v911
    %v962 = vunpack.c.l.b16 %v912
    %v963 = vunpack.c.l.b16 %v913
    %v964 = vpack.c.b16 %v961, %v960
    %v965 = vpack.c.b16 %v963, %v962
    %v969 = vsel %vm102, %v955, 0
    %971 = vmatprep.subr.bf16.mxu0 0
    %972 = vmatpush1.bf16.msra.mxu0 %v964
    %973 = vmatprep.subr.bf16.mxu0 0
    %974 = vmatpush1.bf16.msra.mxu0 %v965
    %975 = vmatprep.subr.bf16.mxu0 0
    %976 = vmatpush1.bf16.msra.mxu0 0
    %977 = vmatprep.subr.bf16.mxu0 0
    %978 = vmatpush1.bf16.msra.mxu0 0
    %979 = vmatprep.subr.bf16.mxu0 0
    %980 = vmatpush1.bf16.msra.mxu0 0
    %981 = vmatprep.subr.bf16.mxu0 0
    %982 = vmatpush1.bf16.msra.mxu0 0
    %983 = vmatprep.subr.bf16.mxu0 0
    %984 = vmatpush1.bf16.msra.mxu0 0
    %985 = vmatprep.subr.bf16.mxu0 0
    %986 = vmatpush1.bf16.msra.mxu0 0
    %987 = vmatprep.subr.bf16.mxu0 0
    %988 = vmatpush1.bf16.msra.mxu0 0
    %989 = vmatprep.subr.bf16.mxu0 0
    %990 = vmatpush1.bf16.msra.mxu0 0
    %991 = vmatprep.subr.bf16.mxu0 0
    %992 = vmatpush1.bf16.msra.mxu0 0
    %993 = vmatprep.subr.bf16.mxu0 0
    %994 = vmatpush1.bf16.msra.mxu0 0
    %995 = vmatprep.subr.bf16.mxu0 0
    %996 = vmatpush1.bf16.msra.mxu0 0
    %997 = vmatprep.subr.bf16.mxu0 0
    %998 = vmatpush1.bf16.msra.mxu0 0
    %999 = vmatprep.subr.bf16.mxu0 0
    %1000 = vmatpush1.bf16.msra.mxu0 0
    %1001 = vmatprep.subr.bf16.mxu0 0
    %1002 = vmatpush1.bf16.msra.mxu0 0
    %1003 = vmatprep.mubr.bf16.mxu0 0
    %1004 = vmatmul.mubr.bf16.gmra.mrb[0].mxu0 %v969
    %v1005 = vpop.f32.mrb[0].mxu0
    %v1006 = vadd.f32 0.0, %v1005
    %v1007 = vpop.f32.mrb[0].mxu0
    %v1008 = vpop.f32.mrb[0].mxu0
    %v1009 = vpop.f32.mrb[0].mxu0
    %1010 = vdwg.mxu0
    %v1011 = vpack.c.bf16 %v1006, %v1006
    %v1012 = vrot.slane %v926, 1
    %v1013 = vsel %vm935, %v927, %v1012
    %v1014 = vrot.slane %v928, 7
    %v1015 = vsel %vm938, %v1014, %v1013
    %v1016 = vrot.slane %v929, 6
    %v1017 = vsel %vm941, %v1016, %v1015
    %v1018 = vrot.slane %v930, 5
    %v1019 = vsel %vm944, %v1018, %v1017
    %v1020 = vrot.slane %v931, 4
    %v1021 = vsel %vm947, %v1020, %v1019
    %v1022 = vrot.slane %v932, 3
    %v1023 = vsel %vm950, %v1022, %v1021
    %v1024 = vrot.slane %v933, 2
    %v1025 = vsel %vm953, %v1024, %v1023
    %v1026 = vpack.c.b16 %v1025, %v1025
    %1027 = vrot.lane.b32.xlu0 %v964, 124
    %v1028 = vpop.permute.xlu0 %1027
    %1029 = vrot.lane.b32.xlu0 %v965, 124
    %v1030 = vpop.permute.xlu0 %1029
    %v1034 = vsel %vm102, %v1026, 0
    %1036 = vmatprep.subr.bf16.mxu0 0
    %1037 = vmatpush1.bf16.msra.mxu0 %v1028
    %1038 = vmatprep.subr.bf16.mxu0 0
    %1039 = vmatpush1.bf16.msra.mxu0 %v1030
    %1040 = vmatprep.subr.bf16.mxu0 0
    %1041 = vmatpush1.bf16.msra.mxu0 0
    %1042 = vmatprep.subr.bf16.mxu0 0
    %1043 = vmatpush1.bf16.msra.mxu0 0
    %1044 = vmatprep.subr.bf16.mxu0 0
    %1045 = vmatpush1.bf16.msra.mxu0 0
    %1046 = vmatprep.subr.bf16.mxu0 0
    %1047 = vmatpush1.bf16.msra.mxu0 0
    %1048 = vmatprep.subr.bf16.mxu0 0
    %1049 = vmatpush1.bf16.msra.mxu0 0
    %1050 = vmatprep.subr.bf16.mxu0 0
    %1051 = vmatpush1.bf16.msra.mxu0 0
    %1052 = vmatprep.subr.bf16.mxu0 0
    %1053 = vmatpush1.bf16.msra.mxu0 0
    %1054 = vmatprep.subr.bf16.mxu0 0
    %1055 = vmatpush1.bf16.msra.mxu0 0
    %1056 = vmatprep.subr.bf16.mxu0 0
    %1057 = vmatpush1.bf16.msra.mxu0 0
    %1058 = vmatprep.subr.bf16.mxu0 0
    %1059 = vmatpush1.bf16.msra.mxu0 0
    %1060 = vmatprep.subr.bf16.mxu0 0
    %1061 = vmatpush1.bf16.msra.mxu0 0
    %1062 = vmatprep.subr.bf16.mxu0 0
    %1063 = vmatpush1.bf16.msra.mxu0 0
    %1064 = vmatprep.subr.bf16.mxu0 0
    %1065 = vmatpush1.bf16.msra.mxu0 0
    %1066 = vmatprep.subr.bf16.mxu0 0
    %1067 = vmatpush1.bf16.msra.mxu0 0
    %1068 = vmatprep.mubr.bf16.mxu0 0
    %1069 = vmatmul.mubr.bf16.gmra.mrb[0].mxu0 %v1034
    %v1070 = vpop.f32.mrb[0].mxu0
    %v1071 = vadd.f32 0.0, %v1070
    %v1072 = vpop.f32.mrb[0].mxu0
    %v1073 = vpop.f32.mrb[0].mxu0
    %v1074 = vpop.f32.mrb[0].mxu0
    %1075 = vdwg.mxu0
    %v1076 = vpack.c.bf16 %v1071, %v1071
    %v1078 = vunpack.c.l.b16 %v914
    %v1079 = vpack.c.b16 %v1078, %v1078
    %v1080 = vrot.slane %v1079, 2
    %vm1081 = vcmask 31744
    %v1083 = vsel %vm1081, %v1076, 0
    %vm1085 = vcmask 1041408
    %v1087 = vsel %vm1085, %v1080, 0
    %1089 = vmatprep.subr.bf16.mxu0 0
    %1090 = vmatpush1.bf16.msra.mxu0 %v1087
    %1091 = vmatprep.subr.bf16.mxu0 0
    %1092 = vmatpush1.bf16.msra.mxu0 0
    %1093 = vmatprep.subr.bf16.mxu0 0
    %1094 = vmatpush1.bf16.msra.mxu0 0
    %1095 = vmatprep.subr.bf16.mxu0 0
    %1096 = vmatpush1.bf16.msra.mxu0 0
    %1097 = vmatprep.subr.bf16.mxu0 0
    %1098 = vmatpush1.bf16.msra.mxu0 0
    %1099 = vmatprep.subr.bf16.mxu0 0
    %1100 = vmatpush1.bf16.msra.mxu0 0
    %1101 = vmatprep.subr.bf16.mxu0 0
    %1102 = vmatpush1.bf16.msra.mxu0 0
    %1103 = vmatprep.subr.bf16.mxu0 0
    %1104 = vmatpush1.bf16.msra.mxu0 0
    %1105 = vmatprep.subr.bf16.mxu0 0
    %1106 = vmatpush1.bf16.msra.mxu0 0
    %1107 = vmatprep.subr.bf16.mxu0 0
    %1108 = vmatpush1.bf16.msra.mxu0 0
    %1109 = vmatprep.subr.bf16.mxu0 0
    %1110 = vmatpush1.bf16.msra.mxu0 0
    %1111 = vmatprep.subr.bf16.mxu0 0
    %1112 = vmatpush1.bf16.msra.mxu0 0
    %1113 = vmatprep.subr.bf16.mxu0 0
    %1114 = vmatpush1.bf16.msra.mxu0 0
    %1115 = vmatprep.subr.bf16.mxu0 0
    %1116 = vmatpush1.bf16.msra.mxu0 0
    %1117 = vmatprep.subr.bf16.mxu0 0
    %1118 = vmatpush1.bf16.msra.mxu0 0
    %1119 = vmatprep.subr.bf16.mxu0 0
    %1120 = vmatpush1.bf16.msra.mxu0 0
    %1121 = vmatprep.mubr.bf16.mxu0 0
    %1122 = vmatmul.mubr.bf16.gmra.mrb[0].mxu0 %v1083
    %v1123 = vpop.f32.mrb[0].mxu0
    %v1124 = vadd.f32 0.0, %v1123
    %v1125 = vpop.f32.mrb[0].mxu0
    %v1126 = vpop.f32.mrb[0].mxu0
    %v1127 = vpop.f32.mrb[0].mxu0
    %1128 = vdwg.mxu0
    %v1130 = vsel %vm1081, %v1011, 0
    %v1133 = vsel %vm1085, %v914, 0
    %1135 = vmatprep.subr.bf16.mxu0 0
    %1136 = vmatpush1.bf16.msra.mxu0 %v1133
    %1137 = vmatprep.subr.bf16.mxu0 0
    %1138 = vmatpush1.bf16.msra.mxu0 0
    %1139 = vmatprep.subr.bf16.mxu0 0
    %1140 = vmatpush1.bf16.msra.mxu0 0
    %1141 = vmatprep.subr.bf16.mxu0 0
    %1142 = vmatpush1.bf16.msra.mxu0 0
    %1143 = vmatprep.subr.bf16.mxu0 0
    %1144 = vmatpush1.bf16.msra.mxu0 0
    %1145 = vmatprep.subr.bf16.mxu0 0
    %1146 = vmatpush1.bf16.msra.mxu0 0
    %1147 = vmatprep.subr.bf16.mxu0 0
    %1148 = vmatpush1.bf16.msra.mxu0 0
    %1149 = vmatprep.subr.bf16.mxu0 0
    %1150 = vmatpush1.bf16.msra.mxu0 0
    %1151 = vmatprep.subr.bf16.mxu0 0
    %1152 = vmatpush1.bf16.msra.mxu0 0
    %1153 = vmatprep.subr.bf16.mxu0 0
    %1154 = vmatpush1.bf16.msra.mxu0 0
    %1155 = vmatprep.subr.bf16.mxu0 0
    %1156 = vmatpush1.bf16.msra.mxu0 0
    %1157 = vmatprep.subr.bf16.mxu0 0
    %1158 = vmatpush1.bf16.msra.mxu0 0
    %1159 = vmatprep.subr.bf16.mxu0 0
    %1160 = vmatpush1.bf16.msra.mxu0 0
    %1161 = vmatprep.subr.bf16.mxu0 0
    %1162 = vmatpush1.bf16.msra.mxu0 0
    %1163 = vmatprep.subr.bf16.mxu0 0
    %1164 = vmatpush1.bf16.msra.mxu0 0
    %1165 = vmatprep.subr.bf16.mxu0 0
    %1166 = vmatpush1.bf16.msra.mxu0 0
    %1167 = vmatprep.mubr.bf16.mxu0 0
    %1168 = vmatmul.mubr.bf16.gmra.mrb[0].mxu0 %v1130
    %v1169 = vpop.f32.mrb[0].mxu0
    %v1170 = vadd.f32 %v1124, %v1169
    %v1171 = vpop.f32.mrb[0].mxu0
    %v1172 = vpop.f32.mrb[0].mxu0
    %v1173 = vpop.f32.mrb[0].mxu0
    %1174 = vdwg.mxu0
    %v1175 = vrot.slane %v926, 2
    %v1176 = vrot.slane %v927, 1
    %v1177 = vsel %vm935, %v1176, %v1175
    %v1178 = vsel %vm938, %v928, %v1177
    %v1179 = vrot.slane %v929, 7
    %v1180 = vsel %vm941, %v1179, %v1178
    %v1181 = vrot.slane %v930, 6
    %v1182 = vsel %vm944, %v1181, %v1180
    %v1183 = vrot.slane %v931, 5
    %v1184 = vsel %vm947, %v1183, %v1182
    %v1185 = vrot.slane %v932, 4
    %v1186 = vsel %vm950, %v1185, %v1184
    %v1187 = vrot.slane %v933, 3
    %v1188 = vsel %vm953, %v1187, %v1186
    %v1189 = vpack.c.b16 %v1188, %v1188
    %1190 = vrot.lane.b32.xlu0 %v964, 120
    %v1191 = vpop.permute.xlu0 %1190
    %1192 = vrot.lane.b32.xlu0 %v965, 120
    %v1193 = vpop.permute.xlu0 %1192
    %v1197 = vsel %vm102, %v1189, 0
    %1199 = vmatprep.subr.bf16.mxu0 0
    %1200 = vmatpush1.bf16.msra.mxu0 %v1191
    %1201 = vmatprep.subr.bf16.mxu0 0
    %1202 = vmatpush1.bf16.msra.mxu0 %v1193
    %1203 = vmatprep.subr.bf16.mxu0 0
    %1204 = vmatpush1.bf16.msra.mxu0 0
    %1205 = vmatprep.subr.bf16.mxu0 0
    %1206 = vmatpush1.bf16.msra.mxu0 0
    %1207 = vmatprep.subr.bf16.mxu0 0
    %1208 = vmatpush1.bf16.msra.mxu0 0
    %1209 = vmatprep.subr.bf16.mxu0 0
    %1210 = vmatpush1.bf16.msra.mxu0 0
    %1211 = vmatprep.subr.bf16.mxu0 0
    %1212 = vmatpush1.bf16.msra.mxu0 0
    %1213 = vmatprep.subr.bf16.mxu0 0
    %1214 = vmatpush1.bf16.msra.mxu0 0
    %1215 = vmatprep.subr.bf16.mxu0 0
    %1216 = vmatpush1.bf16.msra.mxu0 0
    %1217 = vmatprep.subr.bf16.mxu0 0
    %1218 = vmatpush1.bf16.msra.mxu0 0
    %1219 = vmatprep.subr.bf16.mxu0 0
    %1220 = vmatpush1.bf16.msra.mxu0 0
    %1221 = vmatprep.subr.bf16.mxu0 0
    %1222 = vmatpush1.bf16.msra.mxu0 0
    %1223 = vmatprep.subr.bf16.mxu0 0
    %1224 = vmatpush1.bf16.msra.mxu0 0
    %1225 = vmatprep.subr.bf16.mxu0 0
    %1226 = vmatpush1.bf16.msra.mxu0 0
    %1227 = vmatprep.subr.bf16.mxu0 0
    %1228 = vmatpush1.bf16.msra.mxu0 0
    %1229 = vmatprep.subr.bf16.mxu0 0
    %1230 = vmatpush1.bf16.msra.mxu0 0
    %1231 = vmatprep.mubr.bf16.mxu0 0
    %1232 = vmatmul.mubr.bf16.gmra.mrb[0].mxu0 %v1197
    %v1233 = vpop.f32.mrb[0].mxu0
    %v1234 = vadd.f32 0.0, %v1233
    %v1235 = vpop.f32.mrb[0].mxu0
    %v1236 = vpop.f32.mrb[0].mxu0
    %v1237 = vpop.f32.mrb[0].mxu0
    %1238 = vdwg.mxu0
    %v1239 = vpack.c.bf16 %v1234, %v1234
    %v1241 = vsel %vm1081, %v1239, 0
    %v1244 = vsel %vm1085, %v915, 0
    %1246 = vmatprep.subr.bf16.mxu0 0
    %1247 = vmatpush1.bf16.msra.mxu0 %v1244
    %1248 = vmatprep.subr.bf16.mxu0 0
    %1249 = vmatpush1.bf16.msra.mxu0 0
    %1250 = vmatprep.subr.bf16.mxu0 0
    %1251 = vmatpush1.bf16.msra.mxu0 0
    %1252 = vmatprep.subr.bf16.mxu0 0
    %1253 = vmatpush1.bf16.msra.mxu0 0
    %1254 = vmatprep.subr.bf16.mxu0 0
    %1255 = vmatpush1.bf16.msra.mxu0 0
    %1256 = vmatprep.subr.bf16.mxu0 0
    %1257 = vmatpush1.bf16.msra.mxu0 0
    %1258 = vmatprep.subr.bf16.mxu0 0
    %1259 = vmatpush1.bf16.msra.mxu0 0
    %1260 = vmatprep.subr.bf16.mxu0 0
    %1261 = vmatpush1.bf16.msra.mxu0 0
    %1262 = vmatprep.subr.bf16.mxu0 0
    %1263 = vmatpush1.bf16.msra.mxu0 0
    %1264 = vmatprep.subr.bf16.mxu0 0
    %1265 = vmatpush1.bf16.msra.mxu0 0
    %1266 = vmatprep.subr.bf16.mxu0 0
    %1267 = vmatpush1.bf16.msra.mxu0 0
    %1268 = vmatprep.subr.bf16.mxu0 0
    %1269 = vmatpush1.bf16.msra.mxu0 0
    %1270 = vmatprep.subr.bf16.mxu0 0
    %1271 = vmatpush1.bf16.msra.mxu0 0
    %1272 = vmatprep.subr.bf16.mxu0 0
    %1273 = vmatpush1.bf16.msra.mxu0 0
    %1274 = vmatprep.subr.bf16.mxu0 0
    %1275 = vmatpush1.bf16.msra.mxu0 0
    %1276 = vmatprep.subr.bf16.mxu0 0
    %1277 = vmatpush1.bf16.msra.mxu0 0
    %1278 = vmatprep.mubr.bf16.mxu0 0
    %1279 = vmatmul.mubr.bf16.gmra.mrb[0].mxu0 %v1241
    %v1280 = vpop.f32.mrb[0].mxu0
    %v1281 = vadd.f32 0.0, %v1280
    %v1282 = vpop.f32.mrb[0].mxu0
    %v1283 = vpop.f32.mrb[0].mxu0
    %v1284 = vpop.f32.mrb[0].mxu0
    %1285 = vdwg.mxu0
    %v1286 = vadd.f32 %v1170, %v1281
    %v1287 = vrot.slane %v926, 3
    %v1288 = vrot.slane %v927, 2
    %v1289 = vsel %vm935, %v1288, %v1287
    %v1290 = vrot.slane %v928, 1
    %v1291 = vsel %vm938, %v1290, %v1289
    %v1292 = vsel %vm941, %v929, %v1291
    %v1293 = vrot.slane %v930, 7
    %v1294 = vsel %vm944, %v1293, %v1292
    %v1295 = vrot.slane %v931, 6
    %v1296 = vsel %vm947, %v1295, %v1294
    %v1297 = vrot.slane %v932, 5
    %v1298 = vsel %vm950, %v1297, %v1296
    %v1299 = vrot.slane %v933, 4
    %v1300 = vsel %vm953, %v1299, %v1298
    %v1301 = vpack.c.b16 %v1300, %v1300
    %1302 = vrot.lane.b32.xlu0 %v964, 116
    %v1303 = vpop.permute.xlu0 %1302
    %1304 = vrot.lane.b32.xlu0 %v965, 116
    %v1305 = vpop.permute.xlu0 %1304
    %v1309 = vsel %vm102, %v1301, 0
    %1311 = vmatprep.subr.bf16.mxu0 0
    %1312 = vmatpush1.bf16.msra.mxu0 %v1303
    %1313 = vmatprep.subr.bf16.mxu0 0
    %1314 = vmatpush1.bf16.msra.mxu0 %v1305
    %1315 = vmatprep.subr.bf16.mxu0 0
    %1316 = vmatpush1.bf16.msra.mxu0 0
    %1317 = vmatprep.subr.bf16.mxu0 0
    %1318 = vmatpush1.bf16.msra.mxu0 0
    %1319 = vmatprep.subr.bf16.mxu0 0
    %1320 = vmatpush1.bf16.msra.mxu0 0
    %1321 = vmatprep.subr.bf16.mxu0 0
    %1322 = vmatpush1.bf16.msra.mxu0 0
    %1323 = vmatprep.subr.bf16.mxu0 0
    %1324 = vmatpush1.bf16.msra.mxu0 0
    %1325 = vmatprep.subr.bf16.mxu0 0
    %1326 = vmatpush1.bf16.msra.mxu0 0
    %1327 = vmatprep.subr.bf16.mxu0 0
    %1328 = vmatpush1.bf16.msra.mxu0 0
    %1329 = vmatprep.subr.bf16.mxu0 0
    %1330 = vmatpush1.bf16.msra.mxu0 0
    %1331 = vmatprep.subr.bf16.mxu0 0
    %1332 = vmatpush1.bf16.msra.mxu0 0
    %1333 = vmatprep.subr.bf16.mxu0 0
    %1334 = vmatpush1.bf16.msra.mxu0 0
    %1335 = vmatprep.subr.bf16.mxu0 0
    %1336 = vmatpush1.bf16.msra.mxu0 0
    %1337 = vmatprep.subr.bf16.mxu0 0
    %1338 = vmatpush1.bf16.msra.mxu0 0
    %1339 = vmatprep.subr.bf16.mxu0 0
    %1340 = vmatpush1.bf16.msra.mxu0 0
    %1341 = vmatprep.subr.bf16.mxu0 0
    %1342 = vmatpush1.bf16.msra.mxu0 0
    %1343 = vmatprep.mubr.bf16.mxu0 0
    %1344 = vmatmul.mubr.bf16.gmra.mrb[0].mxu0 %v1309
    %v1345 = vpop.f32.mrb[0].mxu0
    %v1346 = vadd.f32 0.0, %v1345
    %v1347 = vpop.f32.mrb[0].mxu0
    %v1348 = vpop.f32.mrb[0].mxu0
    %v1349 = vpop.f32.mrb[0].mxu0
    %1350 = vdwg.mxu0
    %v1351 = vpack.c.bf16 %v1346, %v1346
    %v1353 = vunpack.c.l.b16 %v915
    %v1354 = vpack.c.b16 %v1353, %v1353
    %v1355 = vrot.slane %v1354, 2
    %v1357 = vsel %vm1081, %v1351, 0
    %v1360 = vsel %vm1085, %v1355, 0
    %1362 = vmatprep.subr.bf16.mxu0 0
    %1363 = vmatpush1.bf16.msra.mxu0 %v1360
    %1364 = vmatprep.subr.bf16.mxu0 0
    %1365 = vmatpush1.bf16.msra.mxu0 0
    %1366 = vmatprep.subr.bf16.mxu0 0
    %1367 = vmatpush1.bf16.msra.mxu0 0
    %1368 = vmatprep.subr.bf16.mxu0 0
    %1369 = vmatpush1.bf16.msra.mxu0 0
    %1370 = vmatprep.subr.bf16.mxu0 0
    %1371 = vmatpush1.bf16.msra.mxu0 0
    %1372 = vmatprep.subr.bf16.mxu0 0
    %1373 = vmatpush1.bf16.msra.mxu0 0
    %1374 = vmatprep.subr.bf16.mxu0 0
    %1375 = vmatpush1.bf16.msra.mxu0 0
    %1376 = vmatprep.subr.bf16.mxu0 0
    %1377 = vmatpush1.bf16.msra.mxu0 0
    %1378 = vmatprep.subr.bf16.mxu0 0
    %1379 = vmatpush1.bf16.msra.mxu0 0
    %1380 = vmatprep.subr.bf16.mxu0 0
    %1381 = vmatpush1.bf16.msra.mxu0 0
    %1382 = vmatprep.subr.bf16.mxu0 0
    %1383 = vmatpush1.bf16.msra.mxu0 0
    %1384 = vmatprep.subr.bf16.mxu0 0
    %1385 = vmatpush1.bf16.msra.mxu0 0
    %1386 = vmatprep.subr.bf16.mxu0 0
    %1387 = vmatpush1.bf16.msra.mxu0 0
    %1388 = vmatprep.subr.bf16.mxu0 0
    %1389 = vmatpush1.bf16.msra.mxu0 0
    %1390 = vmatprep.subr.bf16.mxu0 0
    %1391 = vmatpush1.bf16.msra.mxu0 0
    %1392 = vmatprep.subr.bf16.mxu0 0
    %1393 = vmatpush1.bf16.msra.mxu0 0
    %1394 = vmatprep.mubr.bf16.mxu0 0
    %1395 = vmatmul.mubr.bf16.gmra.mrb[0].mxu0 %v1357
    %v1396 = vpop.f32.mrb[0].mxu0
    %v1397 = vadd.f32 0.0, %v1396
    %v1398 = vpop.f32.mrb[0].mxu0
    %v1399 = vpop.f32.mrb[0].mxu0
    %v1400 = vpop.f32.mrb[0].mxu0
    %1401 = vdwg.mxu0
    %v1402 = vadd.f32 %v1286, %v1397
    %v1403 = vrot.slane %v926, 4
    %v1404 = vrot.slane %v927, 3
    %v1405 = vsel %vm935, %v1404, %v1403
    %v1406 = vrot.slane %v928, 2
    %v1407 = vsel %vm938, %v1406, %v1405
    %v1408 = vrot.slane %v929, 1
    %v1409 = vsel %vm941, %v1408, %v1407
    %v1410 = vsel %vm944, %v930, %v1409
    %v1411 = vrot.slane %v931, 7
    %v1412 = vsel %vm947, %v1411, %v1410
    %v1413 = vrot.slane %v932, 6
    %v1414 = vsel %vm950, %v1413, %v1412
    %v1415 = vrot.slane %v933, 5
    %v1416 = vsel %vm953, %v1415, %v1414
    %v1417 = vpack.c.b16 %v1416, %v1416
    %1418 = vrot.lane.b32.xlu0 %v964, 112
    %v1419 = vpop.permute.xlu0 %1418
    %1420 = vrot.lane.b32.xlu0 %v965, 112
    %v1421 = vpop.permute.xlu0 %1420
    %v1425 = vsel %vm102, %v1417, 0
    %1427 = vmatprep.subr.bf16.mxu0 0
    %1428 = vmatpush1.bf16.msra.mxu0 %v1419
    %1429 = vmatprep.subr.bf16.mxu0 0
    %1430 = vmatpush1.bf16.msra.mxu0 %v1421
    %1431 = vmatprep.subr.bf16.mxu0 0
    %1432 = vmatpush1.bf16.msra.mxu0 0
    %1433 = vmatprep.subr.bf16.mxu0 0
    %1434 = vmatpush1.bf16.msra.mxu0 0
    %1435 = vmatprep.subr.bf16.mxu0 0
    %1436 = vmatpush1.bf16.msra.mxu0 0
    %1437 = vmatprep.subr.bf16.mxu0 0
    %1438 = vmatpush1.bf16.msra.mxu0 0
    %1439 = vmatprep.subr.bf16.mxu0 0
    %1440 = vmatpush1.bf16.msra.mxu0 0
    %1441 = vmatprep.subr.bf16.mxu0 0
    %1442 = vmatpush1.bf16.msra.mxu0 0
    %1443 = vmatprep.subr.bf16.mxu0 0
    %1444 = vmatpush1.bf16.msra.mxu0 0
    %1445 = vmatprep.subr.bf16.mxu0 0
    %1446 = vmatpush1.bf16.msra.mxu0 0
    %1447 = vmatprep.subr.bf16.mxu0 0
    %1448 = vmatpush1.bf16.msra.mxu0 0
    %1449 = vmatprep.subr.bf16.mxu0 0
    %1450 = vmatpush1.bf16.msra.mxu0 0
    %1451 = vmatprep.subr.bf16.mxu0 0
    %1452 = vmatpush1.bf16.msra.mxu0 0
    %1453 = vmatprep.subr.bf16.mxu0 0
    %1454 = vmatpush1.bf16.msra.mxu0 0
    %1455 = vmatprep.subr.bf16.mxu0 0
    %1456 = vmatpush1.bf16.msra.mxu0 0
    %1457 = vmatprep.subr.bf16.mxu0 0
    %1458 = vmatpush1.bf16.msra.mxu0 0
    %1459 = vmatprep.mubr.bf16.mxu0 0
    %1460 = vmatmul.mubr.bf16.gmra.mrb[0].mxu0 %v1425
    %v1461 = vpop.f32.mrb[0].mxu0
    %v1462 = vadd.f32 0.0, %v1461
    %v1463 = vpop.f32.mrb[0].mxu0
    %v1464 = vpop.f32.mrb[0].mxu0
    %v1465 = vpop.f32.mrb[0].mxu0
    %1466 = vdwg.mxu0
    %v1467 = vpack.c.bf16 %v1462, %v1462
    %v1469 = vsel %vm1081, %v1467, 0
    %v1472 = vsel %vm1085, %v916, 0
    %1474 = vmatprep.subr.bf16.mxu0 0
    %1475 = vmatpush1.bf16.msra.mxu0 %v1472
    %1476 = vmatprep.subr.bf16.mxu0 0
    %1477 = vmatpush1.bf16.msra.mxu0 0
    %1478 = vmatprep.subr.bf16.mxu0 0
    %1479 = vmatpush1.bf16.msra.mxu0 0
    %1480 = vmatprep.subr.bf16.mxu0 0
    %1481 = vmatpush1.bf16.msra.mxu0 0
    %1482 = vmatprep.subr.bf16.mxu0 0
    %1483 = vmatpush1.bf16.msra.mxu0 0
    %1484 = vmatprep.subr.bf16.mxu0 0
    %1485 = vmatpush1.bf16.msra.mxu0 0
    %1486 = vmatprep.subr.bf16.mxu0 0
    %1487 = vmatpush1.bf16.msra.mxu0 0
    %1488 = vmatprep.subr.bf16.mxu0 0
    %1489 = vmatpush1.bf16.msra.mxu0 0
    %1490 = vmatprep.subr.bf16.mxu0 0
    %1491 = vmatpush1.bf16.msra.mxu0 0
    %1492 = vmatprep.subr.bf16.mxu0 0
    %1493 = vmatpush1.bf16.msra.mxu0 0
    %1494 = vmatprep.subr.bf16.mxu0 0
    %1495 = vmatpush1.bf16.msra.mxu0 0
    %1496 = vmatprep.subr.bf16.mxu0 0
    %1497 = vmatpush1.bf16.msra.mxu0 0
    %1498 = vmatprep.subr.bf16.mxu0 0
    %1499 = vmatpush1.bf16.msra.mxu0 0
    %1500 = vmatprep.subr.bf16.mxu0 0
    %1501 = vmatpush1.bf16.msra.mxu0 0
    %1502 = vmatprep.subr.bf16.mxu0 0
    %1503 = vmatpush1.bf16.msra.mxu0 0
    %1504 = vmatprep.subr.bf16.mxu0 0
    %1505 = vmatpush1.bf16.msra.mxu0 0
    %1506 = vmatprep.mubr.bf16.mxu0 0
    %1507 = vmatmul.mubr.bf16.gmra.mrb[0].mxu0 %v1469
    %v1508 = vpop.f32.mrb[0].mxu0
    %v1509 = vadd.f32 0.0, %v1508
    %v1510 = vpop.f32.mrb[0].mxu0
    %v1511 = vpop.f32.mrb[0].mxu0
    %v1512 = vpop.f32.mrb[0].mxu0
    %1513 = vdwg.mxu0
    %v1514 = vadd.f32 %v1402, %v1509
    %v1515 = vrot.slane %v926, 5
    %v1516 = vrot.slane %v927, 4
    %v1517 = vsel %vm935, %v1516, %v1515
    %v1518 = vrot.slane %v928, 3
    %v1519 = vsel %vm938, %v1518, %v1517
    %v1520 = vrot.slane %v929, 2
    %v1521 = vsel %vm941, %v1520, %v1519
    %v1522 = vrot.slane %v930, 1
    %v1523 = vsel %vm944, %v1522, %v1521
    %v1524 = vsel %vm947, %v931, %v1523
    %v1525 = vrot.slane %v932, 7
    %v1526 = vsel %vm950, %v1525, %v1524
    %v1527 = vrot.slane %v933, 6
    %v1528 = vsel %vm953, %v1527, %v1526
    %v1529 = vpack.c.b16 %v1528, %v1528
    %1530 = vrot.lane.b32.xlu0 %v964, 108
    %v1531 = vpop.permute.xlu0 %1530
    %1532 = vrot.lane.b32.xlu0 %v965, 108
    %v1533 = vpop.permute.xlu0 %1532
    %v1537 = vsel %vm102, %v1529, 0
    %1539 = vmatprep.subr.bf16.mxu0 0
    %1540 = vmatpush1.bf16.msra.mxu0 %v1531
    %1541 = vmatprep.subr.bf16.mxu0 0
    %1542 = vmatpush1.bf16.msra.mxu0 %v1533
    %1543 = vmatprep.subr.bf16.mxu0 0
    %1544 = vmatpush1.bf16.msra.mxu0 0
    %1545 = vmatprep.subr.bf16.mxu0 0
    %1546 = vmatpush1.bf16.msra.mxu0 0
    %1547 = vmatprep.subr.bf16.mxu0 0
    %1548 = vmatpush1.bf16.msra.mxu0 0
    %1549 = vmatprep.subr.bf16.mxu0 0
    %1550 = vmatpush1.bf16.msra.mxu0 0
    %1551 = vmatprep.subr.bf16.mxu0 0
    %1552 = vmatpush1.bf16.msra.mxu0 0
    %1553 = vmatprep.subr.bf16.mxu0 0
    %1554 = vmatpush1.bf16.msra.mxu0 0
    %1555 = vmatprep.subr.bf16.mxu0 0
    %1556 = vmatpush1.bf16.msra.mxu0 0
    %1557 = vmatprep.subr.bf16.mxu0 0
    %1558 = vmatpush1.bf16.msra.mxu0 0
    %1559 = vmatprep.subr.bf16.mxu0 0
    %1560 = vmatpush1.bf16.msra.mxu0 0
    %1561 = vmatprep.subr.bf16.mxu0 0
    %1562 = vmatpush1.bf16.msra.mxu0 0
    %1563 = vmatprep.subr.bf16.mxu0 0
    %1564 = vmatpush1.bf16.msra.mxu0 0
    %1565 = vmatprep.subr.bf16.mxu0 0
    %1566 = vmatpush1.bf16.msra.mxu0 0
    %1567 = vmatprep.subr.bf16.mxu0 0
    %1568 = vmatpush1.bf16.msra.mxu0 0
    %1569 = vmatprep.subr.bf16.mxu0 0
    %1570 = vmatpush1.bf16.msra.mxu0 0
    %1571 = vmatprep.mubr.bf16.mxu0 0
    %1572 = vmatmul.mubr.bf16.gmra.mrb[0].mxu0 %v1537
    %v1573 = vpop.f32.mrb[0].mxu0
    %v1574 = vadd.f32 0.0, %v1573
    %v1575 = vpop.f32.mrb[0].mxu0
    %v1576 = vpop.f32.mrb[0].mxu0
    %v1577 = vpop.f32.mrb[0].mxu0
    %1578 = vdwg.mxu0
    %v1579 = vpack.c.bf16 %v1574, %v1574
    %v1581 = vunpack.c.l.b16 %v916
    %v1582 = vpack.c.b16 %v1581, %v1581
    %v1583 = vrot.slane %v1582, 2
    %v1585 = vsel %vm1081, %v1579, 0
    %v1588 = vsel %vm1085, %v1583, 0
    %1590 = vmatprep.subr.bf16.mxu0 0
    %1591 = vmatpush1.bf16.msra.mxu0 %v1588
    %1592 = vmatprep.subr.bf16.mxu0 0
    %1593 = vmatpush1.bf16.msra.mxu0 0
    %1594 = vmatprep.subr.bf16.mxu0 0
    %1595 = vmatpush1.bf16.msra.mxu0 0
    %1596 = vmatprep.subr.bf16.mxu0 0
    %1597 = vmatpush1.bf16.msra.mxu0 0
    %1598 = vmatprep.subr.bf16.mxu0 0
    %1599 = vmatpush1.bf16.msra.mxu0 0
    %1600 = vmatprep.subr.bf16.mxu0 0
    %1601 = vmatpush1.bf16.msra.mxu0 0
    %1602 = vmatprep.subr.bf16.mxu0 0
    %1603 = vmatpush1.bf16.msra.mxu0 0
    %1604 = vmatprep.subr.bf16.mxu0 0
    %1605 = vmatpush1.bf16.msra.mxu0 0
    %1606 = vmatprep.subr.bf16.mxu0 0
    %1607 = vmatpush1.bf16.msra.mxu0 0
    %1608 = vmatprep.subr.bf16.mxu0 0
    %1609 = vmatpush1.bf16.msra.mxu0 0
    %1610 = vmatprep.subr.bf16.mxu0 0
    %1611 = vmatpush1.bf16.msra.mxu0 0
    %1612 = vmatprep.subr.bf16.mxu0 0
    %1613 = vmatpush1.bf16.msra.mxu0 0
    %1614 = vmatprep.subr.bf16.mxu0 0
    %1615 = vmatpush1.bf16.msra.mxu0 0
    %1616 = vmatprep.subr.bf16.mxu0 0
    %1617 = vmatpush1.bf16.msra.mxu0 0
    %1618 = vmatprep.subr.bf16.mxu0 0
    %1619 = vmatpush1.bf16.msra.mxu0 0
    %1620 = vmatprep.subr.bf16.mxu0 0
    %1621 = vmatpush1.bf16.msra.mxu0 0
    %1622 = vmatprep.mubr.bf16.mxu0 0
    %1623 = vmatmul.mubr.bf16.gmra.mrb[0].mxu0 %v1585
    %v1624 = vpop.f32.mrb[0].mxu0
    %v1625 = vadd.f32 0.0, %v1624
    %v1626 = vpop.f32.mrb[0].mxu0
    %v1627 = vpop.f32.mrb[0].mxu0
    %v1628 = vpop.f32.mrb[0].mxu0
    %1629 = vdwg.mxu0
    %v1630 = vadd.f32 %v1514, %v1625
    %v1631 = vrot.slane %v926, 6
    %v1632 = vrot.slane %v927, 5
    %v1633 = vsel %vm935, %v1632, %v1631
    %v1634 = vrot.slane %v928, 4
    %v1635 = vsel %vm938, %v1634, %v1633
    %v1636 = vrot.slane %v929, 3
    %v1637 = vsel %vm941, %v1636, %v1635
    %v1638 = vrot.slane %v930, 2
    %v1639 = vsel %vm944, %v1638, %v1637
    %v1640 = vrot.slane %v931, 1
    %v1641 = vsel %vm947, %v1640, %v1639
    %v1642 = vsel %vm950, %v932, %v1641
    %v1643 = vrot.slane %v933, 7
    %v1644 = vsel %vm953, %v1643, %v1642
    %v1645 = vpack.c.b16 %v1644, %v1644
    %1646 = vrot.lane.b32.xlu0 %v964, 104
    %v1647 = vpop.permute.xlu0 %1646
    %1648 = vrot.lane.b32.xlu0 %v965, 104
    %v1649 = vpop.permute.xlu0 %1648
    %v1653 = vsel %vm102, %v1645, 0
    %1655 = vmatprep.subr.bf16.mxu0 0
    %1656 = vmatpush1.bf16.msra.mxu0 %v1647
    %1657 = vmatprep.subr.bf16.mxu0 0
    %1658 = vmatpush1.bf16.msra.mxu0 %v1649
    %1659 = vmatprep.subr.bf16.mxu0 0
    %1660 = vmatpush1.bf16.msra.mxu0 0
    %1661 = vmatprep.subr.bf16.mxu0 0
    %1662 = vmatpush1.bf16.msra.mxu0 0
    %1663 = vmatprep.subr.bf16.mxu0 0
    %1664 = vmatpush1.bf16.msra.mxu0 0
    %1665 = vmatprep.subr.bf16.mxu0 0
    %1666 = vmatpush1.bf16.msra.mxu0 0
    %1667 = vmatprep.subr.bf16.mxu0 0
    %1668 = vmatpush1.bf16.msra.mxu0 0
    %1669 = vmatprep.subr.bf16.mxu0 0
    %1670 = vmatpush1.bf16.msra.mxu0 0
    %1671 = vmatprep.subr.bf16.mxu0 0
    %1672 = vmatpush1.bf16.msra.mxu0 0
    %1673 = vmatprep.subr.bf16.mxu0 0
    %1674 = vmatpush1.bf16.msra.mxu0 0
    %1675 = vmatprep.subr.bf16.mxu0 0
    %1676 = vmatpush1.bf16.msra.mxu0 0
    %1677 = vmatprep.subr.bf16.mxu0 0
    %1678 = vmatpush1.bf16.msra.mxu0 0
    %1679 = vmatprep.subr.bf16.mxu0 0
    %1680 = vmatpush1.bf16.msra.mxu0 0
    %1681 = vmatprep.subr.bf16.mxu0 0
    %1682 = vmatpush1.bf16.msra.mxu0 0
    %1683 = vmatprep.subr.bf16.mxu0 0
    %1684 = vmatpush1.bf16.msra.mxu0 0
    %1685 = vmatprep.subr.bf16.mxu0 0
    %1686 = vmatpush1.bf16.msra.mxu0 0
    %1687 = vmatprep.mubr.bf16.mxu0 0
    %1688 = vmatmul.mubr.bf16.gmra.mrb[0].mxu0 %v1653
    %v1689 = vpop.f32.mrb[0].mxu0
    %v1690 = vadd.f32 0.0, %v1689
    %v1691 = vpop.f32.mrb[0].mxu0
    %v1692 = vpop.f32.mrb[0].mxu0
    %v1693 = vpop.f32.mrb[0].mxu0
    %1694 = vdwg.mxu0
    %v1695 = vpack.c.bf16 %v1690, %v1690
    %v1697 = vsel %vm1081, %v1695, 0
    %v1700 = vsel %vm1085, %v917, 0
    %1702 = vmatprep.subr.bf16.mxu0 0
    %1703 = vmatpush1.bf16.msra.mxu0 %v1700
    %1704 = vmatprep.subr.bf16.mxu0 0
    %1705 = vmatpush1.bf16.msra.mxu0 0
    %1706 = vmatprep.subr.bf16.mxu0 0
    %1707 = vmatpush1.bf16.msra.mxu0 0
    %1708 = vmatprep.subr.bf16.mxu0 0
    %1709 = vmatpush1.bf16.msra.mxu0 0
    %1710 = vmatprep.subr.bf16.mxu0 0
    %1711 = vmatpush1.bf16.msra.mxu0 0
    %1712 = vmatprep.subr.bf16.mxu0 0
    %1713 = vmatpush1.bf16.msra.mxu0 0
    %1714 = vmatprep.subr.bf16.mxu0 0
    %1715 = vmatpush1.bf16.msra.mxu0 0
    %1716 = vmatprep.subr.bf16.mxu0 0
    %1717 = vmatpush1.bf16.msra.mxu0 0
    %1718 = vmatprep.subr.bf16.mxu0 0
    %1719 = vmatpush1.bf16.msra.mxu0 0
    %1720 = vmatprep.subr.bf16.mxu0 0
    %1721 = vmatpush1.bf16.msra.mxu0 0
    %1722 = vmatprep.subr.bf16.mxu0 0
    %1723 = vmatpush1.bf16.msra.mxu0 0
    %1724 = vmatprep.subr.bf16.mxu0 0
    %1725 = vmatpush1.bf16.msra.mxu0 0
    %1726 = vmatprep.subr.bf16.mxu0 0
    %1727 = vmatpush1.bf16.msra.mxu0 0
    %1728 = vmatprep.subr.bf16.mxu0 0
    %1729 = vmatpush1.bf16.msra.mxu0 0
    %1730 = vmatprep.subr.bf16.mxu0 0
    %1731 = vmatpush1.bf16.msra.mxu0 0
    %1732 = vmatprep.subr.bf16.mxu0 0
    %1733 = vmatpush1.bf16.msra.mxu0 0
    %1734 = vmatprep.mubr.bf16.mxu0 0
    %1735 = vmatmul.mubr.bf16.gmra.mrb[0].mxu0 %v1697
    %v1736 = vpop.f32.mrb[0].mxu0
    %v1737 = vadd.f32 0.0, %v1736
    %v1738 = vpop.f32.mrb[0].mxu0
    %v1739 = vpop.f32.mrb[0].mxu0
    %v1740 = vpop.f32.mrb[0].mxu0
    %1741 = vdwg.mxu0
    %v1742 = vadd.f32 %v1630, %v1737
    %v1743 = vrot.slane %v926, 7
    %v1744 = vrot.slane %v927, 6
    %v1745 = vsel %vm935, %v1744, %v1743
    %v1746 = vrot.slane %v928, 5
    %v1747 = vsel %vm938, %v1746, %v1745
    %v1748 = vrot.slane %v929, 4
    %v1749 = vsel %vm941, %v1748, %v1747
    %v1750 = vrot.slane %v930, 3
    %v1751 = vsel %vm944, %v1750, %v1749
    %v1752 = vrot.slane %v931, 2
    %v1753 = vsel %vm947, %v1752, %v1751
    %v1754 = vrot.slane %v932, 1
    %v1755 = vsel %vm950, %v1754, %v1753
    %v1756 = vsel %vm953, %v933, %v1755
    %v1757 = vpack.c.b16 %v1756, %v1756
    %1758 = vrot.lane.b32.xlu0 %v964, 100
    %v1759 = vpop.permute.xlu0 %1758
    %1760 = vrot.lane.b32.xlu0 %v965, 100
    %v1761 = vpop.permute.xlu0 %1760
    %v1765 = vsel %vm102, %v1757, 0
    %1767 = vmatprep.subr.bf16.mxu0 0
    %1768 = vmatpush1.bf16.msra.mxu0 %v1759
    %1769 = vmatprep.subr.bf16.mxu0 0
    %1770 = vmatpush1.bf16.msra.mxu0 %v1761
    %1771 = vmatprep.subr.bf16.mxu0 0
    %1772 = vmatpush1.bf16.msra.mxu0 0
    %1773 = vmatprep.subr.bf16.mxu0 0
    %1774 = vmatpush1.bf16.msra.mxu0 0
    %1775 = vmatprep.subr.bf16.mxu0 0
    %1776 = vmatpush1.bf16.msra.mxu0 0
    %1777 = vmatprep.subr.bf16.mxu0 0
    %1778 = vmatpush1.bf16.msra.mxu0 0
    %1779 = vmatprep.subr.bf16.mxu0 0
    %1780 = vmatpush1.bf16.msra.mxu0 0
    %1781 = vmatprep.subr.bf16.mxu0 0
    %1782 = vmatpush1.bf16.msra.mxu0 0
    %1783 = vmatprep.subr.bf16.mxu0 0
    %1784 = vmatpush1.bf16.msra.mxu0 0
    %1785 = vmatprep.subr.bf16.mxu0 0
    %1786 = vmatpush1.bf16.msra.mxu0 0
    %1787 = vmatprep.subr.bf16.mxu0 0
    %1788 = vmatpush1.bf16.msra.mxu0 0
    %1789 = vmatprep.subr.bf16.mxu0 0
    %1790 = vmatpush1.bf16.msra.mxu0 0
    %1791 = vmatprep.subr.bf16.mxu0 0
    %1792 = vmatpush1.bf16.msra.mxu0 0
    %1793 = vmatprep.subr.bf16.mxu0 0
    %1794 = vmatpush1.bf16.msra.mxu0 0
    %1795 = vmatprep.subr.bf16.mxu0 0
    %1796 = vmatpush1.bf16.msra.mxu0 0
    %1797 = vmatprep.subr.bf16.mxu0 0
    %1798 = vmatpush1.bf16.msra.mxu0 0
    %1799 = vmatprep.mubr.bf16.mxu0 0
    %1800 = vmatmul.mubr.bf16.gmra.mrb[0].mxu0 %v1765
    %v1801 = vpop.f32.mrb[0].mxu0
    %v1802 = vadd.f32 0.0, %v1801
    %v1803 = vpop.f32.mrb[0].mxu0
    %v1804 = vpop.f32.mrb[0].mxu0
    %v1805 = vpop.f32.mrb[0].mxu0
    %1806 = vdwg.mxu0
    %v1807 = vpack.c.bf16 %v1802, %v1802
    %v1809 = vunpack.c.l.b16 %v917
    %v1810 = vpack.c.b16 %v1809, %v1809
    %v1811 = vrot.slane %v1810, 2
    %v1813 = vsel %vm1081, %v1807, 0
    %v1816 = vsel %vm1085, %v1811, 0
    %1818 = vmatprep.subr.bf16.mxu0 0
    %1819 = vmatpush1.bf16.msra.mxu0 %v1816
    %1820 = vmatprep.subr.bf16.mxu0 0
    %1821 = vmatpush1.bf16.msra.mxu0 0
    %1822 = vmatprep.subr.bf16.mxu0 0
    %1823 = vmatpush1.bf16.msra.mxu0 0
    %1824 = vmatprep.subr.bf16.mxu0 0
    %1825 = vmatpush1.bf16.msra.mxu0 0
    %1826 = vmatprep.subr.bf16.mxu0 0
    %1827 = vmatpush1.bf16.msra.mxu0 0
    %1828 = vmatprep.subr.bf16.mxu0 0
    %1829 = vmatpush1.bf16.msra.mxu0 0
    %1830 = vmatprep.subr.bf16.mxu0 0
    %1831 = vmatpush1.bf16.msra.mxu0 0
    %1832 = vmatprep.subr.bf16.mxu0 0
    %1833 = vmatpush1.bf16.msra.mxu0 0
    %1834 = vmatprep.subr.bf16.mxu0 0
    %1835 = vmatpush1.bf16.msra.mxu0 0
    %1836 = vmatprep.subr.bf16.mxu0 0
    %1837 = vmatpush1.bf16.msra.mxu0 0
    %1838 = vmatprep.subr.bf16.mxu0 0
    %1839 = vmatpush1.bf16.msra.mxu0 0
    %1840 = vmatprep.subr.bf16.mxu0 0
    %1841 = vmatpush1.bf16.msra.mxu0 0
    %1842 = vmatprep.subr.bf16.mxu0 0
    %1843 = vmatpush1.bf16.msra.mxu0 0
    %1844 = vmatprep.subr.bf16.mxu0 0
    %1845 = vmatpush1.bf16.msra.mxu0 0
    %1846 = vmatprep.subr.bf16.mxu0 0
    %1847 = vmatpush1.bf16.msra.mxu0 0
    %1848 = vmatprep.subr.bf16.mxu0 0
    %1849 = vmatpush1.bf16.msra.mxu0 0
    %1850 = vmatprep.mubr.bf16.mxu0 0
    %1851 = vmatmul.mubr.bf16.gmra.mrb[0].mxu0 %v1813
    %v1852 = vpop.f32.mrb[0].mxu0
    %v1853 = vadd.f32 0.0, %v1852
    %v1854 = vpop.f32.mrb[0].mxu0
    %v1855 = vpop.f32.mrb[0].mxu0
    %v1856 = vpop.f32.mrb[0].mxu0
    %1857 = vdwg.mxu0
    %v1858 = vadd.f32 %v1742, %v1853
    %v1859 = vld [vmem:[%s4] sm:$0x1]
    %v1861 = vlaneseq
    %v1862 = vshrl.u32 %v1861, 7
    %v1863 = vsub.s32 0, %v1862
    %v1864 = vrot.slane %v1859, %v1863
    %v1866 = vadd.f32 %v1858, %v1864
    %1867 = vst.msk [vmem:[#allocation7] sm:$0xff] %vm102, %v1866
    // Predicated region
    $region30: #{tpu_custom_call.1} parent=1 // pred_check
      _
    $region31: #{tpu_custom_call.1} parent=1 // pred_check_branch
      %1869 = sbr.rel (0) target = $region33
    $region32: #{tpu_custom_call.1} parent=1 // pred_region
      %s1871 = ssub.s32 128, 128
      %1872 = vsyncadd [#allocation4], %s1871
      %s1874 = sshll.u32 [#allocation7], 4
      %s1875 = int_to_ptr.vmem [resolvable:$true] %s1874
      %1877 = dma.vmem_to_hbm [thread:$0]  %s1875, 128, %s5, [#allocation4]
    $region33: #{tpu_custom_call.1} parent=1 // pred_fallthru
      _
    // Predicated region
    $region34: #{tpu_custom_call.1} parent=1 // pred_check
      _
    $region35: #{tpu_custom_call.1} parent=1 // pred_check_branch
      %1879 = sbr.rel (0) target = $region37
    $region36: #{tpu_custom_call.1} parent=1 // pred_region
      %1880 = dma.done [#allocation4], 128
    $region37: #{tpu_custom_call.1} parent=1 // pred_fallthru
      _
    %1881 = vsyncpa [#allocation3], 1
    %1882 = vsyncpa [#allocation6], 1
    %1883 = vsyncpa [#allocation4], 1

</llo_original>
